<compile_context>
chip_gen: v6e
topology: v6e:2x2x1
jax: 0.10.0
libtpu: 0.0.40
codegen_flags: <defaults>
</compile_context>

<pallas_src>
import math
from functools import partial

import jax
import jax.numpy as jnp
from jax import lax
from jax.experimental import pallas as pl
from jax.experimental.pallas import tpu as pltpu


_INV_SQRT2 = 0.7071067811865476


def _erf_poly(z):
    # Abramowitz & Stegun 7.1.26, |err| < 1.5e-7 -- exp + polynomial only, so it
    # lowers on Mosaic without relying on an erf primitive (error is far below
    # the bf16 matmul noise floor).
    t = 1.0 / (1.0 + 0.3275911 * jnp.abs(z))
    poly = t * (0.254829592 + t * (-0.284496736 + t * (1.421413741
               + t * (-1.453152027 + t * 1.061405429))))
    y = 1.0 - poly * jnp.exp(-z * z)
    return jnp.where(z >= 0, y, -y)


def _gelu_exact(x):
    return 0.5 * x * (1.0 + _erf_poly(x * _INV_SQRT2))


# ----------------------------- fused Pallas kernel -----------------------------

def _look_kernel(q_ref, qpe_ref, feat_ref, fpe_ref,
                 wq_c_ref, bq_c_ref, wkT_c_ref, bk_c_ref, wvT_c_ref, bv_c_ref,
                 wo_c_ref, bo_c_ref, g1_ref, be1_ref,
                 wqk_s_ref, bqk_s_ref, wv_s_ref, bv_s_ref, wo_s_ref, bo_s_ref,
                 g2_ref, be2_ref,
                 w1_ref, b1f_ref, w2_ref, b2f_ref, g3_ref, be3_ref,
                 o_ref, *, num_heads, eps):
    f32 = jnp.float32
    bf16 = jnp.bfloat16
    b_blk, nq, C = q_ref.shape
    d = C // num_heads
    M = b_blk * nq
    bf = lambda x: x.astype(bf16)

    q = q_ref[...].reshape(M, C)        # batch-stacked tokens, f32
    qpe = qpe_ref[...].reshape(M, C)

    def add_ln(x, r, g, b):             # residual add + LayerNorm (all f32)
        y = x + r
        mu = jnp.mean(y, axis=-1, keepdims=True)
        yc = y - mu
        var = jnp.mean(yc * yc, axis=-1, keepdims=True)
        return yc * lax.rsqrt(var + eps) * g + b

    def softmax_rows(s):                # f32, exact normalization
        m = jnp.max(s, axis=-1, keepdims=True)
        p = jnp.exp(s - m)
        return p / jnp.sum(p, axis=-1, keepdims=True)

    # ------------------ cross attention + residual + LN1 ------------------
    wq_c = wq_c_ref[...]          # (C, C)  bf16, 1/sqrt(d) pre-folded
    wkT_c = wkT_c_ref[...]        # (C, C)  bf16, pre-transposed (out, in)
    wvT_c = wvT_c_ref[...]        # (C, C)  bf16, pre-transposed (out, in)
    bq_c = bq_c_ref[...]          # (1, C)  f32, pre-scaled
    bk_c = bk_c_ref[...]          # (C, 1)  f32
    bv_c = bv_c_ref[...]          # (C, 1)  f32

    x_in = q + qpe
    qp_c = jnp.dot(bf(x_in), wq_c, preferred_element_type=f32) + bq_c       # (M, C)

    rows = []
    for b in range(b_blk):                       # small static loop over batch block
        feat_b = feat_ref[b]                     # (C, HW) f32
        kin_b = bf(feat_b + fpe_ref[b])
        # K/V already transposed (C_out, HW): standard MXU orientation, the
        # NCHW->token transpose is absorbed into the contraction.
        kpT = bf(jnp.dot(wkT_c, kin_b, preferred_element_type=f32) + bk_c)       # (C, HW)
        vpT = bf(jnp.dot(wvT_c, bf(feat_b), preferred_element_type=f32) + bv_c)  # (C, HW)
        qp_b = bf(qp_c[b * nq:(b + 1) * nq, :])
        heads = []
        for h in range(num_heads):
            lo, hi = h * d, (h + 1) * d
            # native (M,K)x(K,N): HW stays on lanes for the softmax reductions
            s = jnp.dot(qp_b[:, lo:hi], kpT[lo:hi, :], preferred_element_type=f32)
            attn = bf(softmax_rows(s))
            heads.append(lax.dot_general(attn, vpT[lo:hi, :],
                                         (((1,), (1,)), ((), ())),
                                         preferred_element_type=f32))        # (nq, d)
        rows.append(jnp.concatenate(heads, axis=-1))                         # (nq, C)
    # single fused output projection over all heads and all batch elements
    a1 = jnp.dot(bf(jnp.concatenate(rows, axis=0)), wo_c_ref[...],
                 preferred_element_type=f32) + bo_c_ref[...]                 # (M, C)
    q1 = add_ln(q, a1, g1_ref[...], be1_ref[...])

    # ------------------ self attention + residual + LN2 ------------------
    x2 = q1 + qpe
    # q & k share the same input -> one (M, 2C)-wide stacked matmul
    qk = jnp.dot(bf(x2), wqk_s_ref[...], preferred_element_type=f32) + bqk_s_ref[...]
    vp2 = jnp.dot(bf(q1), wv_s_ref[...], preferred_element_type=f32) + bv_s_ref[...]
    rows = []
    for b in range(b_blk):
        sl = slice(b * nq, (b + 1) * nq)
        qp_b = bf(qk[sl, :C])
        kp_b = bf(qk[sl, C:])
        vp_b = bf(vp2[sl, :])
        heads = []
        for h in range(num_heads):
            lo, hi = h * d, (h + 1) * d
            s = lax.dot_general(qp_b[:, lo:hi], kp_b[:, lo:hi],
                                (((1,), (1,)), ((), ())),
                                preferred_element_type=f32)                  # (nq, nq)
            attn = bf(softmax_rows(s))
            heads.append(jnp.dot(attn, vp_b[:, lo:hi], preferred_element_type=f32))
        rows.append(jnp.concatenate(heads, axis=-1))
    a2 = jnp.dot(bf(jnp.concatenate(rows, axis=0)), wo_s_ref[...],
                 preferred_element_type=f32) + bo_s_ref[...]
    q2 = add_ln(q1, a2, g2_ref[...], be2_ref[...])

    # ------------------------- FFN + residual + LN3 -------------------------
    h1 = jnp.dot(bf(q2), w1_ref[...], preferred_element_type=f32) + b1f_ref[...]
    h1 = _gelu_exact(h1)
    ff = jnp.dot(bf(h1), w2_ref[...], preferred_element_type=f32) + b2f_ref[...]
    q3 = add_ln(q2, ff, g3_ref[...], be3_ref[...])

    o_ref[...] = q3.reshape(b_blk, nq, C).astype(o_ref.dtype)


# ----------------------------- parameter packing -----------------------------

def pack_params(params, num_heads):
    """Host-side packing: bf16 MXU weights, 1/sqrt(d) folded into Q projections,
    cross-attn W_k / W_v stored pre-transposed so the kernel only issues
    standard-orientation matmuls."""
    C = params["cross"]["wq"].shape[0]
    scale = 1.0 / math.sqrt(C // num_heads)
    bf16, f32 = jnp.bfloat16, jnp.float32
    row = lambda v: v.reshape(1, -1).astype(f32)
    col = lambda v: v.reshape(-1, 1).astype(f32)
    c, s = params["cross"], params["self"]
    return (
        # cross attention: separate refs (no packed-weight lane slicing in kernel)
        (c["wq"] * scale).astype(bf16), row(c["bq"] * scale),
        c["wk"].T.astype(bf16), col(c["bk"]),          # pre-transposed K
        c["wv"].T.astype(bf16), col(c["bv"]),          # pre-transposed V
        c["wo"].astype(bf16), row(c["bo"]),
        row(params["ln1_g"]), row(params["ln1_b"]),
        # self attention: q&k packed (one stacked matmul consumes the full width)
        jnp.concatenate([s["wq"] * scale, s["wk"]], axis=1).astype(bf16),
        jnp.concatenate([s["bq"] * scale, s["bk"]]).reshape(1, -1).astype(f32),
        s["wv"].astype(bf16), row(s["bv"]),
        s["wo"].astype(bf16), row(s["bo"]),
        row(params["ln2_g"]), row(params["ln2_b"]),
        # FFN
        params["w1"].astype(bf16), row(params["b1"]),
        params["w2"].astype(bf16), row(params["b2"]),
        row(params["ln3_g"]), row(params["ln3_b"]),
    )


# ----------------------------- module wrapper -----------------------------

def look_by_multi_q(q, qpe, feat, feat_pe, mask_feature, packed, num_heads,
                    eps=1e-5, num_cores=1):
    """q, qpe: (B, nq, C); feat, feat_pe, mask_feature: (B, C, H, W).

    num_cores=1 collapses the batch grid entirely (best on 1-TC v5e/v6e);
    pass num_cores=2 on v7x so each TensorCore runs one grid step of
    ceil(B/2) batch elements ("parallel" semantics)."""
    del mask_feature  # unused by the reference forward
    B, nq, C = q.shape
    HW = feat.shape[2] * feat.shape[3]
    feat2 = feat.reshape(B, C, HW)      # reshape only -- no XLA transpose
    fpe2 = feat_pe.reshape(B, C, HW)

    b_blk = pl.cdiv(B, num_cores)
    assert B % b_blk == 0, "pad the batch so it divides evenly across cores"
    nb = B // b_blk

    act_spec = lambda shape: pl.BlockSpec(shape, lambda i: (i, 0, 0))
    act_specs = [
        act_spec((b_blk, nq, C)), act_spec((b_blk, nq, C)),
        act_spec((b_blk, C, HW)), act_spec((b_blk, C, HW)),
    ]
    # Constant weights: whole-array VMEM blocks, identical for every grid step.
    # (At production scale on v7x, single-buffer these with pl.Buffered(1) /
    #  set vmem_limit_bytes; irrelevant at these sizes and with grid=(1,).)
    w_specs = [pl.BlockSpec(w.shape, lambda i: (0, 0)) for w in packed]

    return pl.pallas_call(
        partial(_look_kernel, num_heads=num_heads, eps=eps),
        out_shape=jax.ShapeDtypeStruct((B, nq, C), q.dtype),
        grid=(nb,),
        in_specs=act_specs + w_specs,
        out_specs=pl.BlockSpec((b_blk, nq, C), lambda i: (i, 0, 0)),
        compiler_params=pltpu.CompilerParams(
            dimension_semantics=("parallel",)),
    )(q, qpe, feat2, fpe2, *packed)


# ----------------------------- pure-JAX reference -----------------------------

def _ref_attn(q_in, k_in, v_in, p, num_heads):
    B, Nq, C = q_in.shape
    Nk = k_in.shape[1]
    d = C // num_heads
    qp = q_in @ p["wq"] + p["bq"]
    kp = k_in @ p["wk"] + p["bk"]
    vp = v_in @ p["wv"] + p["bv"]
    qh = qp.reshape(B, Nq, num_heads, d).transpose(0, 2, 1, 3)
    kh = kp.reshape(B, Nk, num_heads, d).transpose(0, 2, 1, 3)
    vh = vp.reshape(B, Nk, num_heads, d).transpose(0, 2, 1, 3)
    s = jnp.einsum('bhqd,bhkd->bhqk', qh, kh) / math.sqrt(d)
    a = jax.nn.softmax(s, axis=-1)
    o = jnp.einsum('bhqk,bhkd->bhqd', a, vh).transpose(0, 2, 1, 3).reshape(B, Nq, C)
    return o @ p["wo"] + p["bo"]


def _ref_ln(x, g, b, eps=1e-5):
    mu = jnp.mean(x, axis=-1, keepdims=True)
    var = jnp.mean((x - mu) ** 2, axis=-1, keepdims=True)
    return (x - mu) / jnp.sqrt(var + eps) * g + b


def ref_forward(q, qpe, feat, feat_pe, mask_feature, params, num_heads):
    B, nq, C = q.shape
    feat_t = feat.reshape(B, C, -1).transpose(0, 2, 1)
    feat_pe_t = feat_pe.reshape(B, C, -1).transpose(0, 2, 1)
    a1 = _ref_attn(q + qpe, feat_t + feat_pe_t, feat_t, params["cross"], num_heads)
    q1 = _ref_ln(q + a1, params["ln1_g"], params["ln1_b"])
    a2 = _ref_attn(q1 + qpe, q1 + qpe, q1, params["self"], num_heads)
    q2 = _ref_ln(q1 + a2, params["ln2_g"], params["ln2_b"])
    h = q2 @ params["w1"] + params["b1"]
    h = 0.5 * h * (1.0 + lax.erf(h / math.sqrt(2.0)))
    f = h @ params["w2"] + params["b2"]
    return _ref_ln(q2 + f, params["ln3_g"], params["ln3_b"])


# ----------------------------- main -----------------------------

def make_params(key, C, hidden):
    ks = jax.random.split(key, 4)
    def w(k, shape):  # deterministic small init (stand-in for init_weights_)
        return 0.05 * jax.random.normal(k, shape, dtype=jnp.float32)
    def attn_params(k4):
        a, b, c, d = jax.random.split(k4, 4)
        return {"wq": w(a, (C, C)), "bq": jnp.zeros((C,), jnp.float32),
                "wk": w(b, (C, C)), "bk": jnp.zeros((C,), jnp.float32),
                "wv": w(c, (C, C)), "bv": jnp.zeros((C,), jnp.float32),
                "wo": w(d, (C, C)), "bo": jnp.zeros((C,), jnp.float32)}
    return {
        "cross": attn_params(ks[0]),
        "self": attn_params(ks[1]),
        "ln1_g": jnp.ones((C,), jnp.float32), "ln1_b": jnp.zeros((C,), jnp.float32),
        "ln2_g": jnp.ones((C,), jnp.float32), "ln2_b": jnp.zeros((C,), jnp.float32),
        "ln3_g": jnp.ones((C,), jnp.float32), "ln3_b": jnp.zeros((C,), jnp.float32),
        "w1": w(ks[2], (C, hidden)), "b1": jnp.zeros((hidden,), jnp.float32),
        "w2": w(ks[3], (hidden, C)), "b2": jnp.zeros((C,), jnp.float32),
    }


if __name__ == "__main__":
    B, nq, C = 2, 8, 32
    num_heads, hidden = 4, 64
    H = W = 8

    key = jax.random.PRNGKey(0)
    kq, kpe, kf, kfp, km, kp = jax.random.split(key, 6)
    q = jax.random.normal(kq, (B, nq, C), dtype=jnp.float32)
    qpe = jax.random.normal(kpe, (B, nq, C), dtype=jnp.float32)
    feat = jax.random.normal(kf, (B, C, H, W), dtype=jnp.float32)
    feat_pe = jax.random.normal(kfp, (B, C, H, W), dtype=jnp.float32)
    mask_feature = jax.random.normal(km, (B, C, H, W), dtype=jnp.float32)  # unused

    params = make_params(kp, C, hidden)
    packed = pack_params(params, num_heads)   # bf16 / pre-transposed / pre-scaled

    out = look_by_multi_q(q, qpe, feat, feat_pe, mask_feature, packed, num_heads)
    out = jax.block_until_ready(out)

    ref = ref_forward(q, qpe, feat, feat_pe, mask_feature, params, num_heads)
    assert out.shape == (B, nq, C)
    # tolerance covers the bf16 MXU-input rounding (LN/softmax/accumulation are
    # f32); real bugs (layout / transpose / head mixing) produce O(1) errors.
    err = float(jnp.max(jnp.abs(out - ref)))
    assert err < 3e-2, f"max err {err}"
    print("KERNEL_OK")
</pallas_src>

<mosaic_0001>
module attributes {stable_mosaic.version = 11 : i64} {
  func.func @_look_kernel(%arg0: i32, %arg1: memref<2x8x32xf32, #tpu.memory_space<vmem>>, %arg2: memref<2x8x32xf32, #tpu.memory_space<vmem>>, %arg3: memref<2x32x64xf32, #tpu.memory_space<vmem>>, %arg4: memref<2x32x64xf32, #tpu.memory_space<vmem>>, %arg5: memref<32x32xbf16, #tpu.memory_space<vmem>>, %arg6: memref<1x32xf32, #tpu.memory_space<vmem>>, %arg7: memref<32x32xbf16, #tpu.memory_space<vmem>>, %arg8: memref<32x1xf32, #tpu.memory_space<vmem>>, %arg9: memref<32x32xbf16, #tpu.memory_space<vmem>>, %arg10: memref<32x1xf32, #tpu.memory_space<vmem>>, %arg11: memref<32x32xbf16, #tpu.memory_space<vmem>>, %arg12: memref<1x32xf32, #tpu.memory_space<vmem>>, %arg13: memref<1x32xf32, #tpu.memory_space<vmem>>, %arg14: memref<1x32xf32, #tpu.memory_space<vmem>>, %arg15: memref<32x64xbf16, #tpu.memory_space<vmem>>, %arg16: memref<1x64xf32, #tpu.memory_space<vmem>>, %arg17: memref<32x32xbf16, #tpu.memory_space<vmem>>, %arg18: memref<1x32xf32, #tpu.memory_space<vmem>>, %arg19: memref<32x32xbf16, #tpu.memory_space<vmem>>, %arg20: memref<1x32xf32, #tpu.memory_space<vmem>>, %arg21: memref<1x32xf32, #tpu.memory_space<vmem>>, %arg22: memref<1x32xf32, #tpu.memory_space<vmem>>, %arg23: memref<32x64xbf16, #tpu.memory_space<vmem>>, %arg24: memref<1x64xf32, #tpu.memory_space<vmem>>, %arg25: memref<64x32xbf16, #tpu.memory_space<vmem>>, %arg26: memref<1x32xf32, #tpu.memory_space<vmem>>, %arg27: memref<1x32xf32, #tpu.memory_space<vmem>>, %arg28: memref<1x32xf32, #tpu.memory_space<vmem>>, %arg29: memref<2x8x32xf32, #tpu.memory_space<vmem>>) attributes {dimension_semantics = [#tpu.dimension_semantics<parallel>], iteration_bounds = array<i64: 1>, scalar_prefetch = 0 : i64, scratch_operands = 0 : i64, tpu.core_type = #tpu.core_type<tc>, window_params = [{transform_indices = @transform_0, window_bounds = array<i64: 2, 8, 32>}, {transform_indices = @transform_1, window_bounds = array<i64: 2, 8, 32>}, {transform_indices = @transform_2, window_bounds = array<i64: 2, 32, 64>}, {transform_indices = @transform_3, window_bounds = array<i64: 2, 32, 64>}, {pipeline_mode = #tpu.pipeline_mode<synchronous>, transform_indices = @transform_4, window_bounds = array<i64: 32, 32>}, {pipeline_mode = #tpu.pipeline_mode<synchronous>, transform_indices = @transform_5, window_bounds = array<i64: 1, 32>}, {pipeline_mode = #tpu.pipeline_mode<synchronous>, transform_indices = @transform_6, window_bounds = array<i64: 32, 32>}, {pipeline_mode = #tpu.pipeline_mode<synchronous>, transform_indices = @transform_7, window_bounds = array<i64: 32, 1>}, {pipeline_mode = #tpu.pipeline_mode<synchronous>, transform_indices = @transform_8, window_bounds = array<i64: 32, 32>}, {pipeline_mode = #tpu.pipeline_mode<synchronous>, transform_indices = @transform_9, window_bounds = array<i64: 32, 1>}, {pipeline_mode = #tpu.pipeline_mode<synchronous>, transform_indices = @transform_10, window_bounds = array<i64: 32, 32>}, {pipeline_mode = #tpu.pipeline_mode<synchronous>, transform_indices = @transform_11, window_bounds = array<i64: 1, 32>}, {pipeline_mode = #tpu.pipeline_mode<synchronous>, transform_indices = @transform_12, window_bounds = array<i64: 1, 32>}, {pipeline_mode = #tpu.pipeline_mode<synchronous>, transform_indices = @transform_13, window_bounds = array<i64: 1, 32>}, {pipeline_mode = #tpu.pipeline_mode<synchronous>, transform_indices = @transform_14, window_bounds = array<i64: 32, 64>}, {pipeline_mode = #tpu.pipeline_mode<synchronous>, transform_indices = @transform_15, window_bounds = array<i64: 1, 64>}, {pipeline_mode = #tpu.pipeline_mode<synchronous>, transform_indices = @transform_16, window_bounds = array<i64: 32, 32>}, {pipeline_mode = #tpu.pipeline_mode<synchronous>, transform_indices = @transform_17, window_bounds = array<i64: 1, 32>}, {pipeline_mode = #tpu.pipeline_mode<synchronous>, transform_indices = @transform_18, window_bounds = array<i64: 32, 32>}, {pipeline_mode = #tpu.pipeline_mode<synchronous>, transform_indices = @transform_19, window_bounds = array<i64: 1, 32>}, {pipeline_mode = #tpu.pipeline_mode<synchronous>, transform_indices = @transform_20, window_bounds = array<i64: 1, 32>}, {pipeline_mode = #tpu.pipeline_mode<synchronous>, transform_indices = @transform_21, window_bounds = array<i64: 1, 32>}, {pipeline_mode = #tpu.pipeline_mode<synchronous>, transform_indices = @transform_22, window_bounds = array<i64: 32, 64>}, {pipeline_mode = #tpu.pipeline_mode<synchronous>, transform_indices = @transform_23, window_bounds = array<i64: 1, 64>}, {pipeline_mode = #tpu.pipeline_mode<synchronous>, transform_indices = @transform_24, window_bounds = array<i64: 64, 32>}, {pipeline_mode = #tpu.pipeline_mode<synchronous>, transform_indices = @transform_25, window_bounds = array<i64: 1, 32>}, {pipeline_mode = #tpu.pipeline_mode<synchronous>, transform_indices = @transform_26, window_bounds = array<i64: 1, 32>}, {pipeline_mode = #tpu.pipeline_mode<synchronous>, transform_indices = @transform_27, window_bounds = array<i64: 1, 32>}, {transform_indices = @transform_28, window_bounds = array<i64: 2, 8, 32>}]} {
    %c0 = arith.constant 0 : index
    %c0_0 = arith.constant 0 : index
    %c0_1 = arith.constant 0 : index
    %0 = vector.load %arg1[%c0, %c0_0, %c0_1] : memref<2x8x32xf32, #tpu.memory_space<vmem>>, vector<2x8x32xf32>
    %1 = vector.shape_cast %0 : vector<2x8x32xf32> to vector<16x32xf32>
    %c0_2 = arith.constant 0 : index
    %c0_3 = arith.constant 0 : index
    %c0_4 = arith.constant 0 : index
    %2 = vector.load %arg2[%c0_2, %c0_3, %c0_4] : memref<2x8x32xf32, #tpu.memory_space<vmem>>, vector<2x8x32xf32>
    %3 = vector.shape_cast %2 : vector<2x8x32xf32> to vector<16x32xf32>
    %c0_5 = arith.constant 0 : index
    %c0_6 = arith.constant 0 : index
    %4 = vector.load %arg5[%c0_5, %c0_6] : memref<32x32xbf16, #tpu.memory_space<vmem>>, vector<32x32xbf16>
    %c0_7 = arith.constant 0 : index
    %c0_8 = arith.constant 0 : index
    %5 = vector.load %arg7[%c0_7, %c0_8] : memref<32x32xbf16, #tpu.memory_space<vmem>>, vector<32x32xbf16>
    %c0_9 = arith.constant 0 : index
    %c0_10 = arith.constant 0 : index
    %6 = vector.load %arg9[%c0_9, %c0_10] : memref<32x32xbf16, #tpu.memory_space<vmem>>, vector<32x32xbf16>
    %c0_11 = arith.constant 0 : index
    %c0_12 = arith.constant 0 : index
    %7 = vector.load %arg6[%c0_11, %c0_12] : memref<1x32xf32, #tpu.memory_space<vmem>>, vector<1x32xf32>
    %c0_13 = arith.constant 0 : index
    %c0_14 = arith.constant 0 : index
    %8 = vector.load %arg8[%c0_13, %c0_14] : memref<32x1xf32, #tpu.memory_space<vmem>>, vector<32x1xf32>
    %c0_15 = arith.constant 0 : index
    %c0_16 = arith.constant 0 : index
    %9 = vector.load %arg10[%c0_15, %c0_16] : memref<32x1xf32, #tpu.memory_space<vmem>>, vector<32x1xf32>
    %10 = arith.addf %1, %3 : vector<16x32xf32>
    %11 = arith.truncf %10 : vector<16x32xf32> to vector<16x32xbf16>
    %cst = arith.constant dense<0.000000e+00> : vector<16x32xf32>
    %12 = tpu.matmul %11, %4, %cst {dimension_numbers = #tpu.dot_dimension_numbers<[1], [0], [0], [1], [0, 0, 1, 1], [], []>} : vector<16x32xbf16>, vector<32x32xbf16>, vector<16x32xf32> -> vector<16x32xf32>
    %13 = vector.broadcast %7 : vector<1x32xf32> to vector<16x32xf32>
    %14 = arith.addf %12, %13 : vector<16x32xf32>
    %c0_17 = arith.constant 0 : index
    %c0_18 = arith.constant 0 : index
    %c0_19 = arith.constant 0 : index
    %15 = vector.load %arg3[%c0_17, %c0_18, %c0_19] : memref<2x32x64xf32, #tpu.memory_space<vmem>>, vector<1x32x64xf32>
    %16 = vector.shape_cast %15 : vector<1x32x64xf32> to vector<32x64xf32>
    %c0_20 = arith.constant 0 : index
    %c0_21 = arith.constant 0 : index
    %c0_22 = arith.constant 0 : index
    %17 = vector.load %arg4[%c0_20, %c0_21, %c0_22] : memref<2x32x64xf32, #tpu.memory_space<vmem>>, vector<1x32x64xf32>
    %18 = vector.shape_cast %17 : vector<1x32x64xf32> to vector<32x64xf32>
    %19 = arith.addf %16, %18 : vector<32x64xf32>
    %20 = arith.truncf %19 : vector<32x64xf32> to vector<32x64xbf16>
    %cst_23 = arith.constant dense<0.000000e+00> : vector<32x64xf32>
    %21 = tpu.matmul %5, %20, %cst_23 {dimension_numbers = #tpu.dot_dimension_numbers<[1], [0], [0], [1], [0, 0, 1, 1], [], []>} : vector<32x32xbf16>, vector<32x64xbf16>, vector<32x64xf32> -> vector<32x64xf32>
    %22 = vector.broadcast %8 : vector<32x1xf32> to vector<32x64xf32>
    %23 = arith.addf %21, %22 : vector<32x64xf32>
    %24 = arith.truncf %23 : vector<32x64xf32> to vector<32x64xbf16>
    %25 = arith.truncf %16 : vector<32x64xf32> to vector<32x64xbf16>
    %cst_24 = arith.constant dense<0.000000e+00> : vector<32x64xf32>
    %26 = tpu.matmul %6, %25, %cst_24 {dimension_numbers = #tpu.dot_dimension_numbers<[1], [0], [0], [1], [0, 0, 1, 1], [], []>} : vector<32x32xbf16>, vector<32x64xbf16>, vector<32x64xf32> -> vector<32x64xf32>
    %27 = vector.broadcast %9 : vector<32x1xf32> to vector<32x64xf32>
    %28 = arith.addf %26, %27 : vector<32x64xf32>
    %29 = arith.truncf %28 : vector<32x64xf32> to vector<32x64xbf16>
    %30 = vector.extract_strided_slice %14 {offsets = [0, 0], sizes = [8, 32], strides = [1, 1]} : vector<16x32xf32> to vector<8x32xf32>
    %31 = arith.truncf %30 : vector<8x32xf32> to vector<8x32xbf16>
    %32 = vector.extract_strided_slice %31 {offsets = [0, 0], sizes = [8, 8], strides = [1, 1]} : vector<8x32xbf16> to vector<8x8xbf16>
    %33 = vector.extract_strided_slice %24 {offsets = [0, 0], sizes = [8, 64], strides = [1, 1]} : vector<32x64xbf16> to vector<8x64xbf16>
    %cst_25 = arith.constant dense<0.000000e+00> : vector<8x64xf32>
    %34 = tpu.matmul %32, %33, %cst_25 {dimension_numbers = #tpu.dot_dimension_numbers<[1], [0], [0], [1], [0, 0, 1, 1], [], []>} : vector<8x8xbf16>, vector<8x64xbf16>, vector<8x64xf32> -> vector<8x64xf32>
    %cst_26 = arith.constant dense<0xFF800000> : vector<8xf32>
    %35 = vector.multi_reduction <maximumf>, %34, %cst_26 [1] : vector<8x64xf32> to vector<8xf32>
    %36 = vector.shape_cast %35 : vector<8xf32> to vector<8x1xf32>
    %37 = vector.broadcast %36 : vector<8x1xf32> to vector<8x64xf32>
    %38 = arith.subf %34, %37 : vector<8x64xf32>
    %39 = math.exp %38 : vector<8x64xf32>
    %cst_27 = arith.constant dense<0.000000e+00> : vector<8xf32>
    %40 = vector.multi_reduction <add>, %39, %cst_27 [1] : vector<8x64xf32> to vector<8xf32>
    %41 = vector.shape_cast %40 : vector<8xf32> to vector<8x1xf32>
    %42 = vector.broadcast %41 : vector<8x1xf32> to vector<8x64xf32>
    %43 = arith.divf %39, %42 : vector<8x64xf32>
    %44 = arith.truncf %43 : vector<8x64xf32> to vector<8x64xbf16>
    %45 = vector.extract_strided_slice %29 {offsets = [0, 0], sizes = [8, 64], strides = [1, 1]} : vector<32x64xbf16> to vector<8x64xbf16>
    %cst_28 = arith.constant dense<0.000000e+00> : vector<8x8xf32>
    %46 = tpu.matmul %44, %45, %cst_28 {dimension_numbers = #tpu.dot_dimension_numbers<[1], [1], [0], [0], [0, 0, 1, 0], [], []>} : vector<8x64xbf16>, vector<8x64xbf16>, vector<8x8xf32> -> vector<8x8xf32>
    %47 = vector.extract_strided_slice %31 {offsets = [0, 8], sizes = [8, 8], strides = [1, 1]} : vector<8x32xbf16> to vector<8x8xbf16>
    %48 = vector.extract_strided_slice %24 {offsets = [8, 0], sizes = [8, 64], strides = [1, 1]} : vector<32x64xbf16> to vector<8x64xbf16>
    %cst_29 = arith.constant dense<0.000000e+00> : vector<8x64xf32>
    %49 = tpu.matmul %47, %48, %cst_29 {dimension_numbers = #tpu.dot_dimension_numbers<[1], [0], [0], [1], [0, 0, 1, 1], [], []>} : vector<8x8xbf16>, vector<8x64xbf16>, vector<8x64xf32> -> vector<8x64xf32>
    %cst_30 = arith.constant dense<0xFF800000> : vector<8xf32>
    %50 = vector.multi_reduction <maximumf>, %49, %cst_30 [1] : vector<8x64xf32> to vector<8xf32>
    %51 = vector.shape_cast %50 : vector<8xf32> to vector<8x1xf32>
    %52 = vector.broadcast %51 : vector<8x1xf32> to vector<8x64xf32>
    %53 = arith.subf %49, %52 : vector<8x64xf32>
    %54 = math.exp %53 : vector<8x64xf32>
    %cst_31 = arith.constant dense<0.000000e+00> : vector<8xf32>
    %55 = vector.multi_reduction <add>, %54, %cst_31 [1] : vector<8x64xf32> to vector<8xf32>
    %56 = vector.shape_cast %55 : vector<8xf32> to vector<8x1xf32>
    %57 = vector.broadcast %56 : vector<8x1xf32> to vector<8x64xf32>
    %58 = arith.divf %54, %57 : vector<8x64xf32>
    %59 = arith.truncf %58 : vector<8x64xf32> to vector<8x64xbf16>
    %60 = vector.extract_strided_slice %29 {offsets = [8, 0], sizes = [8, 64], strides = [1, 1]} : vector<32x64xbf16> to vector<8x64xbf16>
    %cst_32 = arith.constant dense<0.000000e+00> : vector<8x8xf32>
    %61 = tpu.matmul %59, %60, %cst_32 {dimension_numbers = #tpu.dot_dimension_numbers<[1], [1], [0], [0], [0, 0, 1, 0], [], []>} : vector<8x64xbf16>, vector<8x64xbf16>, vector<8x8xf32> -> vector<8x8xf32>
    %62 = vector.extract_strided_slice %31 {offsets = [0, 16], sizes = [8, 8], strides = [1, 1]} : vector<8x32xbf16> to vector<8x8xbf16>
    %63 = vector.extract_strided_slice %24 {offsets = [16, 0], sizes = [8, 64], strides = [1, 1]} : vector<32x64xbf16> to vector<8x64xbf16>
    %cst_33 = arith.constant dense<0.000000e+00> : vector<8x64xf32>
    %64 = tpu.matmul %62, %63, %cst_33 {dimension_numbers = #tpu.dot_dimension_numbers<[1], [0], [0], [1], [0, 0, 1, 1], [], []>} : vector<8x8xbf16>, vector<8x64xbf16>, vector<8x64xf32> -> vector<8x64xf32>
    %cst_34 = arith.constant dense<0xFF800000> : vector<8xf32>
    %65 = vector.multi_reduction <maximumf>, %64, %cst_34 [1] : vector<8x64xf32> to vector<8xf32>
    %66 = vector.shape_cast %65 : vector<8xf32> to vector<8x1xf32>
    %67 = vector.broadcast %66 : vector<8x1xf32> to vector<8x64xf32>
    %68 = arith.subf %64, %67 : vector<8x64xf32>
    %69 = math.exp %68 : vector<8x64xf32>
    %cst_35 = arith.constant dense<0.000000e+00> : vector<8xf32>
    %70 = vector.multi_reduction <add>, %69, %cst_35 [1] : vector<8x64xf32> to vector<8xf32>
    %71 = vector.shape_cast %70 : vector<8xf32> to vector<8x1xf32>
    %72 = vector.broadcast %71 : vector<8x1xf32> to vector<8x64xf32>
    %73 = arith.divf %69, %72 : vector<8x64xf32>
    %74 = arith.truncf %73 : vector<8x64xf32> to vector<8x64xbf16>
    %75 = vector.extract_strided_slice %29 {offsets = [16, 0], sizes = [8, 64], strides = [1, 1]} : vector<32x64xbf16> to vector<8x64xbf16>
    %cst_36 = arith.constant dense<0.000000e+00> : vector<8x8xf32>
    %76 = tpu.matmul %74, %75, %cst_36 {dimension_numbers = #tpu.dot_dimension_numbers<[1], [1], [0], [0], [0, 0, 1, 0], [], []>} : vector<8x64xbf16>, vector<8x64xbf16>, vector<8x8xf32> -> vector<8x8xf32>
    %77 = vector.extract_strided_slice %31 {offsets = [0, 24], sizes = [8, 8], strides = [1, 1]} : vector<8x32xbf16> to vector<8x8xbf16>
    %78 = vector.extract_strided_slice %24 {offsets = [24, 0], sizes = [8, 64], strides = [1, 1]} : vector<32x64xbf16> to vector<8x64xbf16>
    %cst_37 = arith.constant dense<0.000000e+00> : vector<8x64xf32>
    %79 = tpu.matmul %77, %78, %cst_37 {dimension_numbers = #tpu.dot_dimension_numbers<[1], [0], [0], [1], [0, 0, 1, 1], [], []>} : vector<8x8xbf16>, vector<8x64xbf16>, vector<8x64xf32> -> vector<8x64xf32>
    %cst_38 = arith.constant dense<0xFF800000> : vector<8xf32>
    %80 = vector.multi_reduction <maximumf>, %79, %cst_38 [1] : vector<8x64xf32> to vector<8xf32>
    %81 = vector.shape_cast %80 : vector<8xf32> to vector<8x1xf32>
    %82 = vector.broadcast %81 : vector<8x1xf32> to vector<8x64xf32>
    %83 = arith.subf %79, %82 : vector<8x64xf32>
    %84 = math.exp %83 : vector<8x64xf32>
    %cst_39 = arith.constant dense<0.000000e+00> : vector<8xf32>
    %85 = vector.multi_reduction <add>, %84, %cst_39 [1] : vector<8x64xf32> to vector<8xf32>
    %86 = vector.shape_cast %85 : vector<8xf32> to vector<8x1xf32>
    %87 = vector.broadcast %86 : vector<8x1xf32> to vector<8x64xf32>
    %88 = arith.divf %84, %87 : vector<8x64xf32>
    %89 = arith.truncf %88 : vector<8x64xf32> to vector<8x64xbf16>
    %90 = vector.extract_strided_slice %29 {offsets = [24, 0], sizes = [8, 64], strides = [1, 1]} : vector<32x64xbf16> to vector<8x64xbf16>
    %cst_40 = arith.constant dense<0.000000e+00> : vector<8x8xf32>
    %91 = tpu.matmul %89, %90, %cst_40 {dimension_numbers = #tpu.dot_dimension_numbers<[1], [1], [0], [0], [0, 0, 1, 0], [], []>} : vector<8x64xbf16>, vector<8x64xbf16>, vector<8x8xf32> -> vector<8x8xf32>
    %92 = tpu.concatenate %46, %61, %76, %91 in 1 : vector<8x8xf32>, vector<8x8xf32>, vector<8x8xf32>, vector<8x8xf32> -> vector<8x32xf32>
    %c1 = arith.constant 1 : index
    %c0_41 = arith.constant 0 : index
    %c0_42 = arith.constant 0 : index
    %93 = vector.load %arg3[%c1, %c0_41, %c0_42] : memref<2x32x64xf32, #tpu.memory_space<vmem>>, vector<1x32x64xf32>
    %94 = vector.shape_cast %93 : vector<1x32x64xf32> to vector<32x64xf32>
    %c1_43 = arith.constant 1 : index
    %c0_44 = arith.constant 0 : index
    %c0_45 = arith.constant 0 : index
    %95 = vector.load %arg4[%c1_43, %c0_44, %c0_45] : memref<2x32x64xf32, #tpu.memory_space<vmem>>, vector<1x32x64xf32>
    %96 = vector.shape_cast %95 : vector<1x32x64xf32> to vector<32x64xf32>
    %97 = arith.addf %94, %96 : vector<32x64xf32>
    %98 = arith.truncf %97 : vector<32x64xf32> to vector<32x64xbf16>
    %cst_46 = arith.constant dense<0.000000e+00> : vector<32x64xf32>
    %99 = tpu.matmul %5, %98, %cst_46 {dimension_numbers = #tpu.dot_dimension_numbers<[1], [0], [0], [1], [0, 0, 1, 1], [], []>} : vector<32x32xbf16>, vector<32x64xbf16>, vector<32x64xf32> -> vector<32x64xf32>
    %100 = vector.broadcast %8 : vector<32x1xf32> to vector<32x64xf32>
    %101 = arith.addf %99, %100 : vector<32x64xf32>
    %102 = arith.truncf %101 : vector<32x64xf32> to vector<32x64xbf16>
    %103 = arith.truncf %94 : vector<32x64xf32> to vector<32x64xbf16>
    %cst_47 = arith.constant dense<0.000000e+00> : vector<32x64xf32>
    %104 = tpu.matmul %6, %103, %cst_47 {dimension_numbers = #tpu.dot_dimension_numbers<[1], [0], [0], [1], [0, 0, 1, 1], [], []>} : vector<32x32xbf16>, vector<32x64xbf16>, vector<32x64xf32> -> vector<32x64xf32>
    %105 = vector.broadcast %9 : vector<32x1xf32> to vector<32x64xf32>
    %106 = arith.addf %104, %105 : vector<32x64xf32>
    %107 = arith.truncf %106 : vector<32x64xf32> to vector<32x64xbf16>
    %108 = vector.extract_strided_slice %14 {offsets = [8, 0], sizes = [8, 32], strides = [1, 1]} : vector<16x32xf32> to vector<8x32xf32>
    %109 = arith.truncf %108 : vector<8x32xf32> to vector<8x32xbf16>
    %110 = vector.extract_strided_slice %109 {offsets = [0, 0], sizes = [8, 8], strides = [1, 1]} : vector<8x32xbf16> to vector<8x8xbf16>
    %111 = vector.extract_strided_slice %102 {offsets = [0, 0], sizes = [8, 64], strides = [1, 1]} : vector<32x64xbf16> to vector<8x64xbf16>
    %cst_48 = arith.constant dense<0.000000e+00> : vector<8x64xf32>
    %112 = tpu.matmul %110, %111, %cst_48 {dimension_numbers = #tpu.dot_dimension_numbers<[1], [0], [0], [1], [0, 0, 1, 1], [], []>} : vector<8x8xbf16>, vector<8x64xbf16>, vector<8x64xf32> -> vector<8x64xf32>
    %cst_49 = arith.constant dense<0xFF800000> : vector<8xf32>
    %113 = vector.multi_reduction <maximumf>, %112, %cst_49 [1] : vector<8x64xf32> to vector<8xf32>
    %114 = vector.shape_cast %113 : vector<8xf32> to vector<8x1xf32>
    %115 = vector.broadcast %114 : vector<8x1xf32> to vector<8x64xf32>
    %116 = arith.subf %112, %115 : vector<8x64xf32>
    %117 = math.exp %116 : vector<8x64xf32>
    %cst_50 = arith.constant dense<0.000000e+00> : vector<8xf32>
    %118 = vector.multi_reduction <add>, %117, %cst_50 [1] : vector<8x64xf32> to vector<8xf32>
    %119 = vector.shape_cast %118 : vector<8xf32> to vector<8x1xf32>
    %120 = vector.broadcast %119 : vector<8x1xf32> to vector<8x64xf32>
    %121 = arith.divf %117, %120 : vector<8x64xf32>
    %122 = arith.truncf %121 : vector<8x64xf32> to vector<8x64xbf16>
    %123 = vector.extract_strided_slice %107 {offsets = [0, 0], sizes = [8, 64], strides = [1, 1]} : vector<32x64xbf16> to vector<8x64xbf16>
    %cst_51 = arith.constant dense<0.000000e+00> : vector<8x8xf32>
    %124 = tpu.matmul %122, %123, %cst_51 {dimension_numbers = #tpu.dot_dimension_numbers<[1], [1], [0], [0], [0, 0, 1, 0], [], []>} : vector<8x64xbf16>, vector<8x64xbf16>, vector<8x8xf32> -> vector<8x8xf32>
    %125 = vector.extract_strided_slice %109 {offsets = [0, 8], sizes = [8, 8], strides = [1, 1]} : vector<8x32xbf16> to vector<8x8xbf16>
    %126 = vector.extract_strided_slice %102 {offsets = [8, 0], sizes = [8, 64], strides = [1, 1]} : vector<32x64xbf16> to vector<8x64xbf16>
    %cst_52 = arith.constant dense<0.000000e+00> : vector<8x64xf32>
    %127 = tpu.matmul %125, %126, %cst_52 {dimension_numbers = #tpu.dot_dimension_numbers<[1], [0], [0], [1], [0, 0, 1, 1], [], []>} : vector<8x8xbf16>, vector<8x64xbf16>, vector<8x64xf32> -> vector<8x64xf32>
    %cst_53 = arith.constant dense<0xFF800000> : vector<8xf32>
    %128 = vector.multi_reduction <maximumf>, %127, %cst_53 [1] : vector<8x64xf32> to vector<8xf32>
    %129 = vector.shape_cast %128 : vector<8xf32> to vector<8x1xf32>
    %130 = vector.broadcast %129 : vector<8x1xf32> to vector<8x64xf32>
    %131 = arith.subf %127, %130 : vector<8x64xf32>
    %132 = math.exp %131 : vector<8x64xf32>
    %cst_54 = arith.constant dense<0.000000e+00> : vector<8xf32>
    %133 = vector.multi_reduction <add>, %132, %cst_54 [1] : vector<8x64xf32> to vector<8xf32>
    %134 = vector.shape_cast %133 : vector<8xf32> to vector<8x1xf32>
    %135 = vector.broadcast %134 : vector<8x1xf32> to vector<8x64xf32>
    %136 = arith.divf %132, %135 : vector<8x64xf32>
    %137 = arith.truncf %136 : vector<8x64xf32> to vector<8x64xbf16>
    %138 = vector.extract_strided_slice %107 {offsets = [8, 0], sizes = [8, 64], strides = [1, 1]} : vector<32x64xbf16> to vector<8x64xbf16>
    %cst_55 = arith.constant dense<0.000000e+00> : vector<8x8xf32>
    %139 = tpu.matmul %137, %138, %cst_55 {dimension_numbers = #tpu.dot_dimension_numbers<[1], [1], [0], [0], [0, 0, 1, 0], [], []>} : vector<8x64xbf16>, vector<8x64xbf16>, vector<8x8xf32> -> vector<8x8xf32>
    %140 = vector.extract_strided_slice %109 {offsets = [0, 16], sizes = [8, 8], strides = [1, 1]} : vector<8x32xbf16> to vector<8x8xbf16>
    %141 = vector.extract_strided_slice %102 {offsets = [16, 0], sizes = [8, 64], strides = [1, 1]} : vector<32x64xbf16> to vector<8x64xbf16>
    %cst_56 = arith.constant dense<0.000000e+00> : vector<8x64xf32>
    %142 = tpu.matmul %140, %141, %cst_56 {dimension_numbers = #tpu.dot_dimension_numbers<[1], [0], [0], [1], [0, 0, 1, 1], [], []>} : vector<8x8xbf16>, vector<8x64xbf16>, vector<8x64xf32> -> vector<8x64xf32>
    %cst_57 = arith.constant dense<0xFF800000> : vector<8xf32>
    %143 = vector.multi_reduction <maximumf>, %142, %cst_57 [1] : vector<8x64xf32> to vector<8xf32>
    %144 = vector.shape_cast %143 : vector<8xf32> to vector<8x1xf32>
    %145 = vector.broadcast %144 : vector<8x1xf32> to vector<8x64xf32>
    %146 = arith.subf %142, %145 : vector<8x64xf32>
    %147 = math.exp %146 : vector<8x64xf32>
    %cst_58 = arith.constant dense<0.000000e+00> : vector<8xf32>
    %148 = vector.multi_reduction <add>, %147, %cst_58 [1] : vector<8x64xf32> to vector<8xf32>
    %149 = vector.shape_cast %148 : vector<8xf32> to vector<8x1xf32>
    %150 = vector.broadcast %149 : vector<8x1xf32> to vector<8x64xf32>
    %151 = arith.divf %147, %150 : vector<8x64xf32>
    %152 = arith.truncf %151 : vector<8x64xf32> to vector<8x64xbf16>
    %153 = vector.extract_strided_slice %107 {offsets = [16, 0], sizes = [8, 64], strides = [1, 1]} : vector<32x64xbf16> to vector<8x64xbf16>
    %cst_59 = arith.constant dense<0.000000e+00> : vector<8x8xf32>
    %154 = tpu.matmul %152, %153, %cst_59 {dimension_numbers = #tpu.dot_dimension_numbers<[1], [1], [0], [0], [0, 0, 1, 0], [], []>} : vector<8x64xbf16>, vector<8x64xbf16>, vector<8x8xf32> -> vector<8x8xf32>
    %155 = vector.extract_strided_slice %109 {offsets = [0, 24], sizes = [8, 8], strides = [1, 1]} : vector<8x32xbf16> to vector<8x8xbf16>
    %156 = vector.extract_strided_slice %102 {offsets = [24, 0], sizes = [8, 64], strides = [1, 1]} : vector<32x64xbf16> to vector<8x64xbf16>
    %cst_60 = arith.constant dense<0.000000e+00> : vector<8x64xf32>
    %157 = tpu.matmul %155, %156, %cst_60 {dimension_numbers = #tpu.dot_dimension_numbers<[1], [0], [0], [1], [0, 0, 1, 1], [], []>} : vector<8x8xbf16>, vector<8x64xbf16>, vector<8x64xf32> -> vector<8x64xf32>
    %cst_61 = arith.constant dense<0xFF800000> : vector<8xf32>
    %158 = vector.multi_reduction <maximumf>, %157, %cst_61 [1] : vector<8x64xf32> to vector<8xf32>
    %159 = vector.shape_cast %158 : vector<8xf32> to vector<8x1xf32>
    %160 = vector.broadcast %159 : vector<8x1xf32> to vector<8x64xf32>
    %161 = arith.subf %157, %160 : vector<8x64xf32>
    %162 = math.exp %161 : vector<8x64xf32>
    %cst_62 = arith.constant dense<0.000000e+00> : vector<8xf32>
    %163 = vector.multi_reduction <add>, %162, %cst_62 [1] : vector<8x64xf32> to vector<8xf32>
    %164 = vector.shape_cast %163 : vector<8xf32> to vector<8x1xf32>
    %165 = vector.broadcast %164 : vector<8x1xf32> to vector<8x64xf32>
    %166 = arith.divf %162, %165 : vector<8x64xf32>
    %167 = arith.truncf %166 : vector<8x64xf32> to vector<8x64xbf16>
    %168 = vector.extract_strided_slice %107 {offsets = [24, 0], sizes = [8, 64], strides = [1, 1]} : vector<32x64xbf16> to vector<8x64xbf16>
    %cst_63 = arith.constant dense<0.000000e+00> : vector<8x8xf32>
    %169 = tpu.matmul %167, %168, %cst_63 {dimension_numbers = #tpu.dot_dimension_numbers<[1], [1], [0], [0], [0, 0, 1, 0], [], []>} : vector<8x64xbf16>, vector<8x64xbf16>, vector<8x8xf32> -> vector<8x8xf32>
    %170 = tpu.concatenate %124, %139, %154, %169 in 1 : vector<8x8xf32>, vector<8x8xf32>, vector<8x8xf32>, vector<8x8xf32> -> vector<8x32xf32>
    %171 = tpu.concatenate %92, %170 in 0 : vector<8x32xf32>, vector<8x32xf32> -> vector<16x32xf32>
    %172 = arith.truncf %171 : vector<16x32xf32> to vector<16x32xbf16>
    %c0_64 = arith.constant 0 : index
    %c0_65 = arith.constant 0 : index
    %173 = vector.load %arg11[%c0_64, %c0_65] : memref<32x32xbf16, #tpu.memory_space<vmem>>, vector<32x32xbf16>
    %cst_66 = arith.constant dense<0.000000e+00> : vector<16x32xf32>
    %174 = tpu.matmul %172, %173, %cst_66 {dimension_numbers = #tpu.dot_dimension_numbers<[1], [0], [0], [1], [0, 0, 1, 1], [], []>} : vector<16x32xbf16>, vector<32x32xbf16>, vector<16x32xf32> -> vector<16x32xf32>
    %c0_67 = arith.constant 0 : index
    %c0_68 = arith.constant 0 : index
    %175 = vector.load %arg12[%c0_67, %c0_68] : memref<1x32xf32, #tpu.memory_space<vmem>>, vector<1x32xf32>
    %176 = vector.broadcast %175 : vector<1x32xf32> to vector<16x32xf32>
    %177 = arith.addf %174, %176 : vector<16x32xf32>
    %c0_69 = arith.constant 0 : index
    %c0_70 = arith.constant 0 : index
    %178 = vector.load %arg13[%c0_69, %c0_70] : memref<1x32xf32, #tpu.memory_space<vmem>>, vector<1x32xf32>
    %c0_71 = arith.constant 0 : index
    %c0_72 = arith.constant 0 : index
    %179 = vector.load %arg14[%c0_71, %c0_72] : memref<1x32xf32, #tpu.memory_space<vmem>>, vector<1x32xf32>
    %180 = arith.addf %1, %177 : vector<16x32xf32>
    %cst_73 = arith.constant dense<0.000000e+00> : vector<16xf32>
    %181 = vector.multi_reduction <add>, %180, %cst_73 [1] : vector<16x32xf32> to vector<16xf32>
    %182 = vector.shape_cast %181 : vector<16xf32> to vector<16x1xf32>
    %cst_74 = arith.constant 3.200000e+01 : f32
    %183 = vector.broadcast %cst_74 : f32 to vector<16x1xf32>
    %184 = arith.divf %182, %183 : vector<16x1xf32>
    %185 = vector.broadcast %184 : vector<16x1xf32> to vector<16x32xf32>
    %186 = arith.subf %180, %185 : vector<16x32xf32>
    %187 = arith.mulf %186, %186 : vector<16x32xf32>
    %cst_75 = arith.constant dense<0.000000e+00> : vector<16xf32>
    %188 = vector.multi_reduction <add>, %187, %cst_75 [1] : vector<16x32xf32> to vector<16xf32>
    %189 = vector.shape_cast %188 : vector<16xf32> to vector<16x1xf32>
    %cst_76 = arith.constant 3.200000e+01 : f32
    %190 = vector.broadcast %cst_76 : f32 to vector<16x1xf32>
    %191 = arith.divf %189, %190 : vector<16x1xf32>
    %cst_77 = arith.constant 9.99999974E-6 : f32
    %192 = vector.broadcast %cst_77 : f32 to vector<16x1xf32>
    %193 = arith.addf %191, %192 : vector<16x1xf32>
    %194 = math.rsqrt %193 : vector<16x1xf32>
    %195 = vector.broadcast %194 : vector<16x1xf32> to vector<16x32xf32>
    %196 = arith.mulf %186, %195 : vector<16x32xf32>
    %197 = vector.broadcast %178 : vector<1x32xf32> to vector<16x32xf32>
    %198 = arith.mulf %196, %197 : vector<16x32xf32>
    %199 = vector.broadcast %179 : vector<1x32xf32> to vector<16x32xf32>
    %200 = arith.addf %198, %199 : vector<16x32xf32>
    %201 = arith.addf %200, %3 : vector<16x32xf32>
    %202 = arith.truncf %201 : vector<16x32xf32> to vector<16x32xbf16>
    %c0_78 = arith.constant 0 : index
    %c0_79 = arith.constant 0 : index
    %203 = vector.load %arg15[%c0_78, %c0_79] : memref<32x64xbf16, #tpu.memory_space<vmem>>, vector<32x64xbf16>
    %cst_80 = arith.constant dense<0.000000e+00> : vector<16x64xf32>
    %204 = tpu.matmul %202, %203, %cst_80 {dimension_numbers = #tpu.dot_dimension_numbers<[1], [0], [0], [1], [0, 0, 1, 1], [], []>} : vector<16x32xbf16>, vector<32x64xbf16>, vector<16x64xf32> -> vector<16x64xf32>
    %c0_81 = arith.constant 0 : index
    %c0_82 = arith.constant 0 : index
    %205 = vector.load %arg16[%c0_81, %c0_82] : memref<1x64xf32, #tpu.memory_space<vmem>>, vector<1x64xf32>
    %206 = vector.broadcast %205 : vector<1x64xf32> to vector<16x64xf32>
    %207 = arith.addf %204, %206 : vector<16x64xf32>
    %208 = arith.truncf %200 : vector<16x32xf32> to vector<16x32xbf16>
    %c0_83 = arith.constant 0 : index
    %c0_84 = arith.constant 0 : index
    %209 = vector.load %arg17[%c0_83, %c0_84] : memref<32x32xbf16, #tpu.memory_space<vmem>>, vector<32x32xbf16>
    %cst_85 = arith.constant dense<0.000000e+00> : vector<16x32xf32>
    %210 = tpu.matmul %208, %209, %cst_85 {dimension_numbers = #tpu.dot_dimension_numbers<[1], [0], [0], [1], [0, 0, 1, 1], [], []>} : vector<16x32xbf16>, vector<32x32xbf16>, vector<16x32xf32> -> vector<16x32xf32>
    %c0_86 = arith.constant 0 : index
    %c0_87 = arith.constant 0 : index
    %211 = vector.load %arg18[%c0_86, %c0_87] : memref<1x32xf32, #tpu.memory_space<vmem>>, vector<1x32xf32>
    %212 = vector.broadcast %211 : vector<1x32xf32> to vector<16x32xf32>
    %213 = arith.addf %210, %212 : vector<16x32xf32>
    %214 = vector.extract_strided_slice %207 {offsets = [0, 0], sizes = [8, 32], strides = [1, 1]} : vector<16x64xf32> to vector<8x32xf32>
    %215 = arith.truncf %214 : vector<8x32xf32> to vector<8x32xbf16>
    %216 = vector.extract_strided_slice %207 {offsets = [0, 32], sizes = [8, 32], strides = [1, 1]} : vector<16x64xf32> to vector<8x32xf32>
    %217 = arith.truncf %216 : vector<8x32xf32> to vector<8x32xbf16>
    %218 = vector.extract_strided_slice %213 {offsets = [0, 0], sizes = [8, 32], strides = [1, 1]} : vector<16x32xf32> to vector<8x32xf32>
    %219 = arith.truncf %218 : vector<8x32xf32> to vector<8x32xbf16>
    %220 = vector.extract_strided_slice %215 {offsets = [0, 0], sizes = [8, 8], strides = [1, 1]} : vector<8x32xbf16> to vector<8x8xbf16>
    %221 = vector.extract_strided_slice %217 {offsets = [0, 0], sizes = [8, 8], strides = [1, 1]} : vector<8x32xbf16> to vector<8x8xbf16>
    %cst_88 = arith.constant dense<0.000000e+00> : vector<8x8xf32>
    %222 = tpu.matmul %220, %221, %cst_88 {dimension_numbers = #tpu.dot_dimension_numbers<[1], [1], [0], [0], [0, 0, 1, 0], [], []>} : vector<8x8xbf16>, vector<8x8xbf16>, vector<8x8xf32> -> vector<8x8xf32>
    %cst_89 = arith.constant dense<0xFF800000> : vector<8xf32>
    %223 = vector.multi_reduction <maximumf>, %222, %cst_89 [1] : vector<8x8xf32> to vector<8xf32>
    %224 = vector.shape_cast %223 : vector<8xf32> to vector<8x1xf32>
    %225 = vector.broadcast %224 : vector<8x1xf32> to vector<8x8xf32>
    %226 = arith.subf %222, %225 : vector<8x8xf32>
    %227 = math.exp %226 : vector<8x8xf32>
    %cst_90 = arith.constant dense<0.000000e+00> : vector<8xf32>
    %228 = vector.multi_reduction <add>, %227, %cst_90 [1] : vector<8x8xf32> to vector<8xf32>
    %229 = vector.shape_cast %228 : vector<8xf32> to vector<8x1xf32>
    %230 = vector.broadcast %229 : vector<8x1xf32> to vector<8x8xf32>
    %231 = arith.divf %227, %230 : vector<8x8xf32>
    %232 = arith.truncf %231 : vector<8x8xf32> to vector<8x8xbf16>
    %233 = vector.extract_strided_slice %219 {offsets = [0, 0], sizes = [8, 8], strides = [1, 1]} : vector<8x32xbf16> to vector<8x8xbf16>
    %cst_91 = arith.constant dense<0.000000e+00> : vector<8x8xf32>
    %234 = tpu.matmul %232, %233, %cst_91 {dimension_numbers = #tpu.dot_dimension_numbers<[1], [0], [0], [1], [0, 0, 1, 1], [], []>} : vector<8x8xbf16>, vector<8x8xbf16>, vector<8x8xf32> -> vector<8x8xf32>
    %235 = vector.extract_strided_slice %215 {offsets = [0, 8], sizes = [8, 8], strides = [1, 1]} : vector<8x32xbf16> to vector<8x8xbf16>
    %236 = vector.extract_strided_slice %217 {offsets = [0, 8], sizes = [8, 8], strides = [1, 1]} : vector<8x32xbf16> to vector<8x8xbf16>
    %cst_92 = arith.constant dense<0.000000e+00> : vector<8x8xf32>
    %237 = tpu.matmul %235, %236, %cst_92 {dimension_numbers = #tpu.dot_dimension_numbers<[1], [1], [0], [0], [0, 0, 1, 0], [], []>} : vector<8x8xbf16>, vector<8x8xbf16>, vector<8x8xf32> -> vector<8x8xf32>
    %cst_93 = arith.constant dense<0xFF800000> : vector<8xf32>
    %238 = vector.multi_reduction <maximumf>, %237, %cst_93 [1] : vector<8x8xf32> to vector<8xf32>
    %239 = vector.shape_cast %238 : vector<8xf32> to vector<8x1xf32>
    %240 = vector.broadcast %239 : vector<8x1xf32> to vector<8x8xf32>
    %241 = arith.subf %237, %240 : vector<8x8xf32>
    %242 = math.exp %241 : vector<8x8xf32>
    %cst_94 = arith.constant dense<0.000000e+00> : vector<8xf32>
    %243 = vector.multi_reduction <add>, %242, %cst_94 [1] : vector<8x8xf32> to vector<8xf32>
    %244 = vector.shape_cast %243 : vector<8xf32> to vector<8x1xf32>
    %245 = vector.broadcast %244 : vector<8x1xf32> to vector<8x8xf32>
    %246 = arith.divf %242, %245 : vector<8x8xf32>
    %247 = arith.truncf %246 : vector<8x8xf32> to vector<8x8xbf16>
    %248 = vector.extract_strided_slice %219 {offsets = [0, 8], sizes = [8, 8], strides = [1, 1]} : vector<8x32xbf16> to vector<8x8xbf16>
    %cst_95 = arith.constant dense<0.000000e+00> : vector<8x8xf32>
    %249 = tpu.matmul %247, %248, %cst_95 {dimension_numbers = #tpu.dot_dimension_numbers<[1], [0], [0], [1], [0, 0, 1, 1], [], []>} : vector<8x8xbf16>, vector<8x8xbf16>, vector<8x8xf32> -> vector<8x8xf32>
    %250 = vector.extract_strided_slice %215 {offsets = [0, 16], sizes = [8, 8], strides = [1, 1]} : vector<8x32xbf16> to vector<8x8xbf16>
    %251 = vector.extract_strided_slice %217 {offsets = [0, 16], sizes = [8, 8], strides = [1, 1]} : vector<8x32xbf16> to vector<8x8xbf16>
    %cst_96 = arith.constant dense<0.000000e+00> : vector<8x8xf32>
    %252 = tpu.matmul %250, %251, %cst_96 {dimension_numbers = #tpu.dot_dimension_numbers<[1], [1], [0], [0], [0, 0, 1, 0], [], []>} : vector<8x8xbf16>, vector<8x8xbf16>, vector<8x8xf32> -> vector<8x8xf32>
    %cst_97 = arith.constant dense<0xFF800000> : vector<8xf32>
    %253 = vector.multi_reduction <maximumf>, %252, %cst_97 [1] : vector<8x8xf32> to vector<8xf32>
    %254 = vector.shape_cast %253 : vector<8xf32> to vector<8x1xf32>
    %255 = vector.broadcast %254 : vector<8x1xf32> to vector<8x8xf32>
    %256 = arith.subf %252, %255 : vector<8x8xf32>
    %257 = math.exp %256 : vector<8x8xf32>
    %cst_98 = arith.constant dense<0.000000e+00> : vector<8xf32>
    %258 = vector.multi_reduction <add>, %257, %cst_98 [1] : vector<8x8xf32> to vector<8xf32>
    %259 = vector.shape_cast %258 : vector<8xf32> to vector<8x1xf32>
    %260 = vector.broadcast %259 : vector<8x1xf32> to vector<8x8xf32>
    %261 = arith.divf %257, %260 : vector<8x8xf32>
    %262 = arith.truncf %261 : vector<8x8xf32> to vector<8x8xbf16>
    %263 = vector.extract_strided_slice %219 {offsets = [0, 16], sizes = [8, 8], strides = [1, 1]} : vector<8x32xbf16> to vector<8x8xbf16>
    %cst_99 = arith.constant dense<0.000000e+00> : vector<8x8xf32>
    %264 = tpu.matmul %262, %263, %cst_99 {dimension_numbers = #tpu.dot_dimension_numbers<[1], [0], [0], [1], [0, 0, 1, 1], [], []>} : vector<8x8xbf16>, vector<8x8xbf16>, vector<8x8xf32> -> vector<8x8xf32>
    %265 = vector.extract_strided_slice %215 {offsets = [0, 24], sizes = [8, 8], strides = [1, 1]} : vector<8x32xbf16> to vector<8x8xbf16>
    %266 = vector.extract_strided_slice %217 {offsets = [0, 24], sizes = [8, 8], strides = [1, 1]} : vector<8x32xbf16> to vector<8x8xbf16>
    %cst_100 = arith.constant dense<0.000000e+00> : vector<8x8xf32>
    %267 = tpu.matmul %265, %266, %cst_100 {dimension_numbers = #tpu.dot_dimension_numbers<[1], [1], [0], [0], [0, 0, 1, 0], [], []>} : vector<8x8xbf16>, vector<8x8xbf16>, vector<8x8xf32> -> vector<8x8xf32>
    %cst_101 = arith.constant dense<0xFF800000> : vector<8xf32>
    %268 = vector.multi_reduction <maximumf>, %267, %cst_101 [1] : vector<8x8xf32> to vector<8xf32>
    %269 = vector.shape_cast %268 : vector<8xf32> to vector<8x1xf32>
    %270 = vector.broadcast %269 : vector<8x1xf32> to vector<8x8xf32>
    %271 = arith.subf %267, %270 : vector<8x8xf32>
    %272 = math.exp %271 : vector<8x8xf32>
    %cst_102 = arith.constant dense<0.000000e+00> : vector<8xf32>
    %273 = vector.multi_reduction <add>, %272, %cst_102 [1] : vector<8x8xf32> to vector<8xf32>
    %274 = vector.shape_cast %273 : vector<8xf32> to vector<8x1xf32>
    %275 = vector.broadcast %274 : vector<8x1xf32> to vector<8x8xf32>
    %276 = arith.divf %272, %275 : vector<8x8xf32>
    %277 = arith.truncf %276 : vector<8x8xf32> to vector<8x8xbf16>
    %278 = vector.extract_strided_slice %219 {offsets = [0, 24], sizes = [8, 8], strides = [1, 1]} : vector<8x32xbf16> to vector<8x8xbf16>
    %cst_103 = arith.constant dense<0.000000e+00> : vector<8x8xf32>
    %279 = tpu.matmul %277, %278, %cst_103 {dimension_numbers = #tpu.dot_dimension_numbers<[1], [0], [0], [1], [0, 0, 1, 1], [], []>} : vector<8x8xbf16>, vector<8x8xbf16>, vector<8x8xf32> -> vector<8x8xf32>
    %280 = tpu.concatenate %234, %249, %264, %279 in 1 : vector<8x8xf32>, vector<8x8xf32>, vector<8x8xf32>, vector<8x8xf32> -> vector<8x32xf32>
    %281 = vector.extract_strided_slice %207 {offsets = [8, 0], sizes = [8, 32], strides = [1, 1]} : vector<16x64xf32> to vector<8x32xf32>
    %282 = arith.truncf %281 : vector<8x32xf32> to vector<8x32xbf16>
    %283 = vector.extract_strided_slice %207 {offsets = [8, 32], sizes = [8, 32], strides = [1, 1]} : vector<16x64xf32> to vector<8x32xf32>
    %284 = arith.truncf %283 : vector<8x32xf32> to vector<8x32xbf16>
    %285 = vector.extract_strided_slice %213 {offsets = [8, 0], sizes = [8, 32], strides = [1, 1]} : vector<16x32xf32> to vector<8x32xf32>
    %286 = arith.truncf %285 : vector<8x32xf32> to vector<8x32xbf16>
    %287 = vector.extract_strided_slice %282 {offsets = [0, 0], sizes = [8, 8], strides = [1, 1]} : vector<8x32xbf16> to vector<8x8xbf16>
    %288 = vector.extract_strided_slice %284 {offsets = [0, 0], sizes = [8, 8], strides = [1, 1]} : vector<8x32xbf16> to vector<8x8xbf16>
    %cst_104 = arith.constant dense<0.000000e+00> : vector<8x8xf32>
    %289 = tpu.matmul %287, %288, %cst_104 {dimension_numbers = #tpu.dot_dimension_numbers<[1], [1], [0], [0], [0, 0, 1, 0], [], []>} : vector<8x8xbf16>, vector<8x8xbf16>, vector<8x8xf32> -> vector<8x8xf32>
    %cst_105 = arith.constant dense<0xFF800000> : vector<8xf32>
    %290 = vector.multi_reduction <maximumf>, %289, %cst_105 [1] : vector<8x8xf32> to vector<8xf32>
    %291 = vector.shape_cast %290 : vector<8xf32> to vector<8x1xf32>
    %292 = vector.broadcast %291 : vector<8x1xf32> to vector<8x8xf32>
    %293 = arith.subf %289, %292 : vector<8x8xf32>
    %294 = math.exp %293 : vector<8x8xf32>
    %cst_106 = arith.constant dense<0.000000e+00> : vector<8xf32>
    %295 = vector.multi_reduction <add>, %294, %cst_106 [1] : vector<8x8xf32> to vector<8xf32>
    %296 = vector.shape_cast %295 : vector<8xf32> to vector<8x1xf32>
    %297 = vector.broadcast %296 : vector<8x1xf32> to vector<8x8xf32>
    %298 = arith.divf %294, %297 : vector<8x8xf32>
    %299 = arith.truncf %298 : vector<8x8xf32> to vector<8x8xbf16>
    %300 = vector.extract_strided_slice %286 {offsets = [0, 0], sizes = [8, 8], strides = [1, 1]} : vector<8x32xbf16> to vector<8x8xbf16>
    %cst_107 = arith.constant dense<0.000000e+00> : vector<8x8xf32>
    %301 = tpu.matmul %299, %300, %cst_107 {dimension_numbers = #tpu.dot_dimension_numbers<[1], [0], [0], [1], [0, 0, 1, 1], [], []>} : vector<8x8xbf16>, vector<8x8xbf16>, vector<8x8xf32> -> vector<8x8xf32>
    %302 = vector.extract_strided_slice %282 {offsets = [0, 8], sizes = [8, 8], strides = [1, 1]} : vector<8x32xbf16> to vector<8x8xbf16>
    %303 = vector.extract_strided_slice %284 {offsets = [0, 8], sizes = [8, 8], strides = [1, 1]} : vector<8x32xbf16> to vector<8x8xbf16>
    %cst_108 = arith.constant dense<0.000000e+00> : vector<8x8xf32>
    %304 = tpu.matmul %302, %303, %cst_108 {dimension_numbers = #tpu.dot_dimension_numbers<[1], [1], [0], [0], [0, 0, 1, 0], [], []>} : vector<8x8xbf16>, vector<8x8xbf16>, vector<8x8xf32> -> vector<8x8xf32>
    %cst_109 = arith.constant dense<0xFF800000> : vector<8xf32>
    %305 = vector.multi_reduction <maximumf>, %304, %cst_109 [1] : vector<8x8xf32> to vector<8xf32>
    %306 = vector.shape_cast %305 : vector<8xf32> to vector<8x1xf32>
    %307 = vector.broadcast %306 : vector<8x1xf32> to vector<8x8xf32>
    %308 = arith.subf %304, %307 : vector<8x8xf32>
    %309 = math.exp %308 : vector<8x8xf32>
    %cst_110 = arith.constant dense<0.000000e+00> : vector<8xf32>
    %310 = vector.multi_reduction <add>, %309, %cst_110 [1] : vector<8x8xf32> to vector<8xf32>
    %311 = vector.shape_cast %310 : vector<8xf32> to vector<8x1xf32>
    %312 = vector.broadcast %311 : vector<8x1xf32> to vector<8x8xf32>
    %313 = arith.divf %309, %312 : vector<8x8xf32>
    %314 = arith.truncf %313 : vector<8x8xf32> to vector<8x8xbf16>
    %315 = vector.extract_strided_slice %286 {offsets = [0, 8], sizes = [8, 8], strides = [1, 1]} : vector<8x32xbf16> to vector<8x8xbf16>
    %cst_111 = arith.constant dense<0.000000e+00> : vector<8x8xf32>
    %316 = tpu.matmul %314, %315, %cst_111 {dimension_numbers = #tpu.dot_dimension_numbers<[1], [0], [0], [1], [0, 0, 1, 1], [], []>} : vector<8x8xbf16>, vector<8x8xbf16>, vector<8x8xf32> -> vector<8x8xf32>
    %317 = vector.extract_strided_slice %282 {offsets = [0, 16], sizes = [8, 8], strides = [1, 1]} : vector<8x32xbf16> to vector<8x8xbf16>
    %318 = vector.extract_strided_slice %284 {offsets = [0, 16], sizes = [8, 8], strides = [1, 1]} : vector<8x32xbf16> to vector<8x8xbf16>
    %cst_112 = arith.constant dense<0.000000e+00> : vector<8x8xf32>
    %319 = tpu.matmul %317, %318, %cst_112 {dimension_numbers = #tpu.dot_dimension_numbers<[1], [1], [0], [0], [0, 0, 1, 0], [], []>} : vector<8x8xbf16>, vector<8x8xbf16>, vector<8x8xf32> -> vector<8x8xf32>
    %cst_113 = arith.constant dense<0xFF800000> : vector<8xf32>
    %320 = vector.multi_reduction <maximumf>, %319, %cst_113 [1] : vector<8x8xf32> to vector<8xf32>
    %321 = vector.shape_cast %320 : vector<8xf32> to vector<8x1xf32>
    %322 = vector.broadcast %321 : vector<8x1xf32> to vector<8x8xf32>
    %323 = arith.subf %319, %322 : vector<8x8xf32>
    %324 = math.exp %323 : vector<8x8xf32>
    %cst_114 = arith.constant dense<0.000000e+00> : vector<8xf32>
    %325 = vector.multi_reduction <add>, %324, %cst_114 [1] : vector<8x8xf32> to vector<8xf32>
    %326 = vector.shape_cast %325 : vector<8xf32> to vector<8x1xf32>
    %327 = vector.broadcast %326 : vector<8x1xf32> to vector<8x8xf32>
    %328 = arith.divf %324, %327 : vector<8x8xf32>
    %329 = arith.truncf %328 : vector<8x8xf32> to vector<8x8xbf16>
    %330 = vector.extract_strided_slice %286 {offsets = [0, 16], sizes = [8, 8], strides = [1, 1]} : vector<8x32xbf16> to vector<8x8xbf16>
    %cst_115 = arith.constant dense<0.000000e+00> : vector<8x8xf32>
    %331 = tpu.matmul %329, %330, %cst_115 {dimension_numbers = #tpu.dot_dimension_numbers<[1], [0], [0], [1], [0, 0, 1, 1], [], []>} : vector<8x8xbf16>, vector<8x8xbf16>, vector<8x8xf32> -> vector<8x8xf32>
    %332 = vector.extract_strided_slice %282 {offsets = [0, 24], sizes = [8, 8], strides = [1, 1]} : vector<8x32xbf16> to vector<8x8xbf16>
    %333 = vector.extract_strided_slice %284 {offsets = [0, 24], sizes = [8, 8], strides = [1, 1]} : vector<8x32xbf16> to vector<8x8xbf16>
    %cst_116 = arith.constant dense<0.000000e+00> : vector<8x8xf32>
    %334 = tpu.matmul %332, %333, %cst_116 {dimension_numbers = #tpu.dot_dimension_numbers<[1], [1], [0], [0], [0, 0, 1, 0], [], []>} : vector<8x8xbf16>, vector<8x8xbf16>, vector<8x8xf32> -> vector<8x8xf32>
    %cst_117 = arith.constant dense<0xFF800000> : vector<8xf32>
    %335 = vector.multi_reduction <maximumf>, %334, %cst_117 [1] : vector<8x8xf32> to vector<8xf32>
    %336 = vector.shape_cast %335 : vector<8xf32> to vector<8x1xf32>
    %337 = vector.broadcast %336 : vector<8x1xf32> to vector<8x8xf32>
    %338 = arith.subf %334, %337 : vector<8x8xf32>
    %339 = math.exp %338 : vector<8x8xf32>
    %cst_118 = arith.constant dense<0.000000e+00> : vector<8xf32>
    %340 = vector.multi_reduction <add>, %339, %cst_118 [1] : vector<8x8xf32> to vector<8xf32>
    %341 = vector.shape_cast %340 : vector<8xf32> to vector<8x1xf32>
    %342 = vector.broadcast %341 : vector<8x1xf32> to vector<8x8xf32>
    %343 = arith.divf %339, %342 : vector<8x8xf32>
    %344 = arith.truncf %343 : vector<8x8xf32> to vector<8x8xbf16>
    %345 = vector.extract_strided_slice %286 {offsets = [0, 24], sizes = [8, 8], strides = [1, 1]} : vector<8x32xbf16> to vector<8x8xbf16>
    %cst_119 = arith.constant dense<0.000000e+00> : vector<8x8xf32>
    %346 = tpu.matmul %344, %345, %cst_119 {dimension_numbers = #tpu.dot_dimension_numbers<[1], [0], [0], [1], [0, 0, 1, 1], [], []>} : vector<8x8xbf16>, vector<8x8xbf16>, vector<8x8xf32> -> vector<8x8xf32>
    %347 = tpu.concatenate %301, %316, %331, %346 in 1 : vector<8x8xf32>, vector<8x8xf32>, vector<8x8xf32>, vector<8x8xf32> -> vector<8x32xf32>
    %348 = tpu.concatenate %280, %347 in 0 : vector<8x32xf32>, vector<8x32xf32> -> vector<16x32xf32>
    %349 = arith.truncf %348 : vector<16x32xf32> to vector<16x32xbf16>
    %c0_120 = arith.constant 0 : index
    %c0_121 = arith.constant 0 : index
    %350 = vector.load %arg19[%c0_120, %c0_121] : memref<32x32xbf16, #tpu.memory_space<vmem>>, vector<32x32xbf16>
    %cst_122 = arith.constant dense<0.000000e+00> : vector<16x32xf32>
    %351 = tpu.matmul %349, %350, %cst_122 {dimension_numbers = #tpu.dot_dimension_numbers<[1], [0], [0], [1], [0, 0, 1, 1], [], []>} : vector<16x32xbf16>, vector<32x32xbf16>, vector<16x32xf32> -> vector<16x32xf32>
    %c0_123 = arith.constant 0 : index
    %c0_124 = arith.constant 0 : index
    %352 = vector.load %arg20[%c0_123, %c0_124] : memref<1x32xf32, #tpu.memory_space<vmem>>, vector<1x32xf32>
    %353 = vector.broadcast %352 : vector<1x32xf32> to vector<16x32xf32>
    %354 = arith.addf %351, %353 : vector<16x32xf32>
    %c0_125 = arith.constant 0 : index
    %c0_126 = arith.constant 0 : index
    %355 = vector.load %arg21[%c0_125, %c0_126] : memref<1x32xf32, #tpu.memory_space<vmem>>, vector<1x32xf32>
    %c0_127 = arith.constant 0 : index
    %c0_128 = arith.constant 0 : index
    %356 = vector.load %arg22[%c0_127, %c0_128] : memref<1x32xf32, #tpu.memory_space<vmem>>, vector<1x32xf32>
    %357 = arith.addf %200, %354 : vector<16x32xf32>
    %cst_129 = arith.constant dense<0.000000e+00> : vector<16xf32>
    %358 = vector.multi_reduction <add>, %357, %cst_129 [1] : vector<16x32xf32> to vector<16xf32>
    %359 = vector.shape_cast %358 : vector<16xf32> to vector<16x1xf32>
    %cst_130 = arith.constant 3.200000e+01 : f32
    %360 = vector.broadcast %cst_130 : f32 to vector<16x1xf32>
    %361 = arith.divf %359, %360 : vector<16x1xf32>
    %362 = vector.broadcast %361 : vector<16x1xf32> to vector<16x32xf32>
    %363 = arith.subf %357, %362 : vector<16x32xf32>
    %364 = arith.mulf %363, %363 : vector<16x32xf32>
    %cst_131 = arith.constant dense<0.000000e+00> : vector<16xf32>
    %365 = vector.multi_reduction <add>, %364, %cst_131 [1] : vector<16x32xf32> to vector<16xf32>
    %366 = vector.shape_cast %365 : vector<16xf32> to vector<16x1xf32>
    %cst_132 = arith.constant 3.200000e+01 : f32
    %367 = vector.broadcast %cst_132 : f32 to vector<16x1xf32>
    %368 = arith.divf %366, %367 : vector<16x1xf32>
    %cst_133 = arith.constant 9.99999974E-6 : f32
    %369 = vector.broadcast %cst_133 : f32 to vector<16x1xf32>
    %370 = arith.addf %368, %369 : vector<16x1xf32>
    %371 = math.rsqrt %370 : vector<16x1xf32>
    %372 = vector.broadcast %371 : vector<16x1xf32> to vector<16x32xf32>
    %373 = arith.mulf %363, %372 : vector<16x32xf32>
    %374 = vector.broadcast %355 : vector<1x32xf32> to vector<16x32xf32>
    %375 = arith.mulf %373, %374 : vector<16x32xf32>
    %376 = vector.broadcast %356 : vector<1x32xf32> to vector<16x32xf32>
    %377 = arith.addf %375, %376 : vector<16x32xf32>
    %378 = arith.truncf %377 : vector<16x32xf32> to vector<16x32xbf16>
    %c0_134 = arith.constant 0 : index
    %c0_135 = arith.constant 0 : index
    %379 = vector.load %arg23[%c0_134, %c0_135] : memref<32x64xbf16, #tpu.memory_space<vmem>>, vector<32x64xbf16>
    %cst_136 = arith.constant dense<0.000000e+00> : vector<16x64xf32>
    %380 = tpu.matmul %378, %379, %cst_136 {dimension_numbers = #tpu.dot_dimension_numbers<[1], [0], [0], [1], [0, 0, 1, 1], [], []>} : vector<16x32xbf16>, vector<32x64xbf16>, vector<16x64xf32> -> vector<16x64xf32>
    %c0_137 = arith.constant 0 : index
    %c0_138 = arith.constant 0 : index
    %381 = vector.load %arg24[%c0_137, %c0_138] : memref<1x64xf32, #tpu.memory_space<vmem>>, vector<1x64xf32>
    %382 = vector.broadcast %381 : vector<1x64xf32> to vector<16x64xf32>
    %383 = arith.addf %380, %382 : vector<16x64xf32>
    %cst_139 = arith.constant 5.000000e-01 : f32
    %384 = vector.broadcast %cst_139 : f32 to vector<16x64xf32>
    %385 = arith.mulf %384, %383 : vector<16x64xf32>
    %cst_140 = arith.constant 0.707106769 : f32
    %386 = vector.broadcast %cst_140 : f32 to vector<16x64xf32>
    %387 = arith.mulf %383, %386 : vector<16x64xf32>
    %388 = math.absf %387 : vector<16x64xf32>
    %cst_141 = arith.constant 0.327591091 : f32
    %389 = vector.broadcast %cst_141 : f32 to vector<16x64xf32>
    %390 = arith.mulf %389, %388 : vector<16x64xf32>
    %cst_142 = arith.constant 1.000000e+00 : f32
    %391 = vector.broadcast %cst_142 : f32 to vector<16x64xf32>
    %392 = arith.addf %391, %390 : vector<16x64xf32>
    %cst_143 = arith.constant 1.000000e+00 : f32
    %393 = vector.broadcast %cst_143 : f32 to vector<16x64xf32>
    %394 = arith.divf %393, %392 : vector<16x64xf32>
    %cst_144 = arith.constant 1.06140542 : f32
    %395 = vector.broadcast %cst_144 : f32 to vector<16x64xf32>
    %396 = arith.mulf %394, %395 : vector<16x64xf32>
    %cst_145 = arith.constant -1.45315206 : f32
    %397 = vector.broadcast %cst_145 : f32 to vector<16x64xf32>
    %398 = arith.addf %397, %396 : vector<16x64xf32>
    %399 = arith.mulf %394, %398 : vector<16x64xf32>
    %cst_146 = arith.constant 1.42141378 : f32
    %400 = vector.broadcast %cst_146 : f32 to vector<16x64xf32>
    %401 = arith.addf %400, %399 : vector<16x64xf32>
    %402 = arith.mulf %394, %401 : vector<16x64xf32>
    %cst_147 = arith.constant -0.284496725 : f32
    %403 = vector.broadcast %cst_147 : f32 to vector<16x64xf32>
    %404 = arith.addf %403, %402 : vector<16x64xf32>
    %405 = arith.mulf %394, %404 : vector<16x64xf32>
    %cst_148 = arith.constant 0.254829586 : f32
    %406 = vector.broadcast %cst_148 : f32 to vector<16x64xf32>
    %407 = arith.addf %406, %405 : vector<16x64xf32>
    %408 = arith.mulf %394, %407 : vector<16x64xf32>
    %cst_149 = arith.constant 0.000000e+00 : f32
    %409 = vector.broadcast %cst_149 : f32 to vector<16x64xf32>
    %410 = arith.subf %409, %387 : vector<16x64xf32>
    %411 = arith.mulf %410, %387 : vector<16x64xf32>
    %412 = math.exp %411 : vector<16x64xf32>
    %413 = arith.mulf %408, %412 : vector<16x64xf32>
    %cst_150 = arith.constant 1.000000e+00 : f32
    %414 = vector.broadcast %cst_150 : f32 to vector<16x64xf32>
    %415 = arith.subf %414, %413 : vector<16x64xf32>
    %cst_151 = arith.constant 0.000000e+00 : f32
    %416 = vector.broadcast %cst_151 : f32 to vector<16x64xf32>
    %417 = arith.cmpf oge, %387, %416 : vector<16x64xf32>
    %cst_152 = arith.constant 0.000000e+00 : f32
    %418 = vector.broadcast %cst_152 : f32 to vector<16x64xf32>
    %419 = arith.subf %418, %415 : vector<16x64xf32>
    %420 = arith.select %417, %415, %419 : vector<16x64xi1>, vector<16x64xf32>
    %cst_153 = arith.constant 1.000000e+00 : f32
    %421 = vector.broadcast %cst_153 : f32 to vector<16x64xf32>
    %422 = arith.addf %421, %420 : vector<16x64xf32>
    %423 = arith.mulf %385, %422 : vector<16x64xf32>
    %424 = arith.truncf %423 : vector<16x64xf32> to vector<16x64xbf16>
    %c0_154 = arith.constant 0 : index
    %c0_155 = arith.constant 0 : index
    %425 = vector.load %arg25[%c0_154, %c0_155] : memref<64x32xbf16, #tpu.memory_space<vmem>>, vector<64x32xbf16>
    %cst_156 = arith.constant dense<0.000000e+00> : vector<16x32xf32>
    %426 = tpu.matmul %424, %425, %cst_156 {dimension_numbers = #tpu.dot_dimension_numbers<[1], [0], [0], [1], [0, 0, 1, 1], [], []>} : vector<16x64xbf16>, vector<64x32xbf16>, vector<16x32xf32> -> vector<16x32xf32>
    %c0_157 = arith.constant 0 : index
    %c0_158 = arith.constant 0 : index
    %427 = vector.load %arg26[%c0_157, %c0_158] : memref<1x32xf32, #tpu.memory_space<vmem>>, vector<1x32xf32>
    %428 = vector.broadcast %427 : vector<1x32xf32> to vector<16x32xf32>
    %429 = arith.addf %426, %428 : vector<16x32xf32>
    %c0_159 = arith.constant 0 : index
    %c0_160 = arith.constant 0 : index
    %430 = vector.load %arg27[%c0_159, %c0_160] : memref<1x32xf32, #tpu.memory_space<vmem>>, vector<1x32xf32>
    %c0_161 = arith.constant 0 : index
    %c0_162 = arith.constant 0 : index
    %431 = vector.load %arg28[%c0_161, %c0_162] : memref<1x32xf32, #tpu.memory_space<vmem>>, vector<1x32xf32>
    %432 = arith.addf %377, %429 : vector<16x32xf32>
    %cst_163 = arith.constant dense<0.000000e+00> : vector<16xf32>
    %433 = vector.multi_reduction <add>, %432, %cst_163 [1] : vector<16x32xf32> to vector<16xf32>
    %434 = vector.shape_cast %433 : vector<16xf32> to vector<16x1xf32>
    %cst_164 = arith.constant 3.200000e+01 : f32
    %435 = vector.broadcast %cst_164 : f32 to vector<16x1xf32>
    %436 = arith.divf %434, %435 : vector<16x1xf32>
    %437 = vector.broadcast %436 : vector<16x1xf32> to vector<16x32xf32>
    %438 = arith.subf %432, %437 : vector<16x32xf32>
    %439 = arith.mulf %438, %438 : vector<16x32xf32>
    %cst_165 = arith.constant dense<0.000000e+00> : vector<16xf32>
    %440 = vector.multi_reduction <add>, %439, %cst_165 [1] : vector<16x32xf32> to vector<16xf32>
    %441 = vector.shape_cast %440 : vector<16xf32> to vector<16x1xf32>
    %cst_166 = arith.constant 3.200000e+01 : f32
    %442 = vector.broadcast %cst_166 : f32 to vector<16x1xf32>
    %443 = arith.divf %441, %442 : vector<16x1xf32>
    %cst_167 = arith.constant 9.99999974E-6 : f32
    %444 = vector.broadcast %cst_167 : f32 to vector<16x1xf32>
    %445 = arith.addf %443, %444 : vector<16x1xf32>
    %446 = math.rsqrt %445 : vector<16x1xf32>
    %447 = vector.broadcast %446 : vector<16x1xf32> to vector<16x32xf32>
    %448 = arith.mulf %438, %447 : vector<16x32xf32>
    %449 = vector.broadcast %430 : vector<1x32xf32> to vector<16x32xf32>
    %450 = arith.mulf %448, %449 : vector<16x32xf32>
    %451 = vector.broadcast %431 : vector<1x32xf32> to vector<16x32xf32>
    %452 = arith.addf %450, %451 : vector<16x32xf32>
    %453 = vector.shape_cast %452 : vector<16x32xf32> to vector<2x8x32xf32>
    %c0_168 = arith.constant 0 : index
    %c0_169 = arith.constant 0 : index
    %c0_170 = arith.constant 0 : index
    %454 = vector.load %arg29[%c0_168, %c0_169, %c0_170] : memref<2x8x32xf32, #tpu.memory_space<vmem>>, vector<2x8x32xf32>
    tpu.vector_store %arg29[%c0_168, %c0_169, %c0_170], %453 {strides = array<i32>} : memref<2x8x32xf32, #tpu.memory_space<vmem>>, vector<2x8x32xf32>,
    return
  }
  func.func @transform_0(%arg0: i32) -> (i32, i32, i32) {
    %c0_i32 = arith.constant 0 : i32
    %c0_i32_0 = arith.constant 0 : i32
    %c0_i32_1 = arith.constant 0 : i32
    return %arg0, %c0_i32, %c0_i32_0 : i32, i32, i32
  }
  func.func @transform_1(%arg0: i32) -> (i32, i32, i32) {
    %c0_i32 = arith.constant 0 : i32
    %c0_i32_0 = arith.constant 0 : i32
    %c0_i32_1 = arith.constant 0 : i32
    return %arg0, %c0_i32, %c0_i32_0 : i32, i32, i32
  }
  func.func @transform_2(%arg0: i32) -> (i32, i32, i32) {
    %c0_i32 = arith.constant 0 : i32
    %c0_i32_0 = arith.constant 0 : i32
    %c0_i32_1 = arith.constant 0 : i32
    return %arg0, %c0_i32, %c0_i32_0 : i32, i32, i32
  }
  func.func @transform_3(%arg0: i32) -> (i32, i32, i32) {
    %c0_i32 = arith.constant 0 : i32
    %c0_i32_0 = arith.constant 0 : i32
    %c0_i32_1 = arith.constant 0 : i32
    return %arg0, %c0_i32, %c0_i32_0 : i32, i32, i32
  }
  func.func @transform_4(%arg0: i32) -> (i32, i32) {
    %c0_i32 = arith.constant 0 : i32
    %c0_i32_0 = arith.constant 0 : i32
    %c0_i32_1 = arith.constant 0 : i32
    return %c0_i32, %c0_i32_0 : i32, i32
  }
  func.func @transform_5(%arg0: i32) -> (i32, i32) {
    %c0_i32 = arith.constant 0 : i32
    %c0_i32_0 = arith.constant 0 : i32
    %c0_i32_1 = arith.constant 0 : i32
    return %c0_i32, %c0_i32_0 : i32, i32
  }
  func.func @transform_6(%arg0: i32) -> (i32, i32) {
    %c0_i32 = arith.constant 0 : i32
    %c0_i32_0 = arith.constant 0 : i32
    %c0_i32_1 = arith.constant 0 : i32
    return %c0_i32, %c0_i32_0 : i32, i32
  }
  func.func @transform_7(%arg0: i32) -> (i32, i32) {
    %c0_i32 = arith.constant 0 : i32
    %c0_i32_0 = arith.constant 0 : i32
    %c0_i32_1 = arith.constant 0 : i32
    return %c0_i32, %c0_i32_0 : i32, i32
  }
  func.func @transform_8(%arg0: i32) -> (i32, i32) {
    %c0_i32 = arith.constant 0 : i32
    %c0_i32_0 = arith.constant 0 : i32
    %c0_i32_1 = arith.constant 0 : i32
    return %c0_i32, %c0_i32_0 : i32, i32
  }
  func.func @transform_9(%arg0: i32) -> (i32, i32) {
    %c0_i32 = arith.constant 0 : i32
    %c0_i32_0 = arith.constant 0 : i32
    %c0_i32_1 = arith.constant 0 : i32
    return %c0_i32, %c0_i32_0 : i32, i32
  }
  func.func @transform_10(%arg0: i32) -> (i32, i32) {
    %c0_i32 = arith.constant 0 : i32
    %c0_i32_0 = arith.constant 0 : i32
    %c0_i32_1 = arith.constant 0 : i32
    return %c0_i32, %c0_i32_0 : i32, i32
  }
  func.func @transform_11(%arg0: i32) -> (i32, i32) {
    %c0_i32 = arith.constant 0 : i32
    %c0_i32_0 = arith.constant 0 : i32
    %c0_i32_1 = arith.constant 0 : i32
    return %c0_i32, %c0_i32_0 : i32, i32
  }
  func.func @transform_12(%arg0: i32) -> (i32, i32) {
    %c0_i32 = arith.constant 0 : i32
    %c0_i32_0 = arith.constant 0 : i32
    %c0_i32_1 = arith.constant 0 : i32
    return %c0_i32, %c0_i32_0 : i32, i32
  }
  func.func @transform_13(%arg0: i32) -> (i32, i32) {
    %c0_i32 = arith.constant 0 : i32
    %c0_i32_0 = arith.constant 0 : i32
    %c0_i32_1 = arith.constant 0 : i32
    return %c0_i32, %c0_i32_0 : i32, i32
  }
  func.func @transform_14(%arg0: i32) -> (i32, i32) {
    %c0_i32 = arith.constant 0 : i32
    %c0_i32_0 = arith.constant 0 : i32
    %c0_i32_1 = arith.constant 0 : i32
    return %c0_i32, %c0_i32_0 : i32, i32
  }
  func.func @transform_15(%arg0: i32) -> (i32, i32) {
    %c0_i32 = arith.constant 0 : i32
    %c0_i32_0 = arith.constant 0 : i32
    %c0_i32_1 = arith.constant 0 : i32
    return %c0_i32, %c0_i32_0 : i32, i32
  }
  func.func @transform_16(%arg0: i32) -> (i32, i32) {
    %c0_i32 = arith.constant 0 : i32
    %c0_i32_0 = arith.constant 0 : i32
    %c0_i32_1 = arith.constant 0 : i32
    return %c0_i32, %c0_i32_0 : i32, i32
  }
  func.func @transform_17(%arg0: i32) -> (i32, i32) {
    %c0_i32 = arith.constant 0 : i32
    %c0_i32_0 = arith.constant 0 : i32
    %c0_i32_1 = arith.constant 0 : i32
    return %c0_i32, %c0_i32_0 : i32, i32
  }
  func.func @transform_18(%arg0: i32) -> (i32, i32) {
    %c0_i32 = arith.constant 0 : i32
    %c0_i32_0 = arith.constant 0 : i32
    %c0_i32_1 = arith.constant 0 : i32
    return %c0_i32, %c0_i32_0 : i32, i32
  }
  func.func @transform_19(%arg0: i32) -> (i32, i32) {
    %c0_i32 = arith.constant 0 : i32
    %c0_i32_0 = arith.constant 0 : i32
    %c0_i32_1 = arith.constant 0 : i32
    return %c0_i32, %c0_i32_0 : i32, i32
  }
  func.func @transform_20(%arg0: i32) -> (i32, i32) {
    %c0_i32 = arith.constant 0 : i32
    %c0_i32_0 = arith.constant 0 : i32
    %c0_i32_1 = arith.constant 0 : i32
    return %c0_i32, %c0_i32_0 : i32, i32
  }
  func.func @transform_21(%arg0: i32) -> (i32, i32) {
    %c0_i32 = arith.constant 0 : i32
    %c0_i32_0 = arith.constant 0 : i32
    %c0_i32_1 = arith.constant 0 : i32
    return %c0_i32, %c0_i32_0 : i32, i32
  }
  func.func @transform_22(%arg0: i32) -> (i32, i32) {
    %c0_i32 = arith.constant 0 : i32
    %c0_i32_0 = arith.constant 0 : i32
    %c0_i32_1 = arith.constant 0 : i32
    return %c0_i32, %c0_i32_0 : i32, i32
  }
  func.func @transform_23(%arg0: i32) -> (i32, i32) {
    %c0_i32 = arith.constant 0 : i32
    %c0_i32_0 = arith.constant 0 : i32
    %c0_i32_1 = arith.constant 0 : i32
    return %c0_i32, %c0_i32_0 : i32, i32
  }
  func.func @transform_24(%arg0: i32) -> (i32, i32) {
    %c0_i32 = arith.constant 0 : i32
    %c0_i32_0 = arith.constant 0 : i32
    %c0_i32_1 = arith.constant 0 : i32
    return %c0_i32, %c0_i32_0 : i32, i32
  }
  func.func @transform_25(%arg0: i32) -> (i32, i32) {
    %c0_i32 = arith.constant 0 : i32
    %c0_i32_0 = arith.constant 0 : i32
    %c0_i32_1 = arith.constant 0 : i32
    return %c0_i32, %c0_i32_0 : i32, i32
  }
  func.func @transform_26(%arg0: i32) -> (i32, i32) {
    %c0_i32 = arith.constant 0 : i32
    %c0_i32_0 = arith.constant 0 : i32
    %c0_i32_1 = arith.constant 0 : i32
    return %c0_i32, %c0_i32_0 : i32, i32
  }
  func.func @transform_27(%arg0: i32) -> (i32, i32) {
    %c0_i32 = arith.constant 0 : i32
    %c0_i32_0 = arith.constant 0 : i32
    %c0_i32_1 = arith.constant 0 : i32
    return %c0_i32, %c0_i32_0 : i32, i32
  }
  func.func @transform_28(%arg0: i32) -> (i32, i32, i32) {
    %c0_i32 = arith.constant 0 : i32
    %c0_i32_0 = arith.constant 0 : i32
    %c0_i32_1 = arith.constant 0 : i32
    return %arg0, %c0_i32, %c0_i32_0 : i32, i32, i32
  }
}

</mosaic_0001>

<llo_original>
// kernel: tpu_custom_call.1
$region0: #{tpu_custom_call.1}
  #allocation0 [shape = 'u32[]', space=smem, size = 0x4, offset = 0x4, fixed_abs, tag = 'smem constant byte address 0x4 - core index']
  #allocation1 [shape = 'u32[144,128]{1,0:T(1,128)}', space=vmem, size = 0x12000, scoped, tag = 'internal scratch']
  %s0 = inlined_call_operand.vmem [shape: f32[2,8,32], index: 0, kind: input, shape index: {}]
  %s1 = inlined_call_operand.vmem [shape: f32[2,8,32], index: 1, kind: input, shape index: {}]
  %s2 = inlined_call_operand.vmem [shape: f32[2,32,64], index: 2, kind: input, shape index: {}]
  %s3 = inlined_call_operand.hbm [shape: f32[2,32,64], index: 3, kind: input, shape index: {}]
  %s4 = inlined_call_operand.hbm [shape: bf16[32,32], index: 4, kind: input, shape index: {}]
  %s5 = inlined_call_operand.hbm [shape: f32[1,32], index: 5, kind: input, shape index: {}]
  %s6 = inlined_call_operand.hbm [shape: bf16[32,32], index: 6, kind: input, shape index: {}]
  %s7 = inlined_call_operand.vmem [shape: f32[32,1], index: 7, kind: input, shape index: {}]
  %s8 = inlined_call_operand.vmem [shape: bf16[32,32], index: 8, kind: input, shape index: {}]
  %s9 = inlined_call_operand.vmem [shape: f32[32,1], index: 9, kind: input, shape index: {}]
  %s10 = inlined_call_operand.hbm [shape: bf16[32,32], index: 10, kind: input, shape index: {}]
  %s11 = inlined_call_operand.vmem [shape: f32[1,32], index: 11, kind: input, shape index: {}]
  %s12 = inlined_call_operand.hbm [shape: f32[1,32], index: 12, kind: input, shape index: {}]
  %s13 = inlined_call_operand.hbm [shape: f32[1,32], index: 13, kind: input, shape index: {}]
  %s14 = inlined_call_operand.hbm [shape: bf16[32,64], index: 14, kind: input, shape index: {}]
  %s15 = inlined_call_operand.hbm [shape: f32[1,64], index: 15, kind: input, shape index: {}]
  %s16 = inlined_call_operand.hbm [shape: bf16[32,32], index: 16, kind: input, shape index: {}]
  %s17 = inlined_call_operand.hbm [shape: f32[1,32], index: 17, kind: input, shape index: {}]
  %s18 = inlined_call_operand.vmem [shape: bf16[32,32], index: 18, kind: input, shape index: {}]
  %s19 = inlined_call_operand.vmem [shape: f32[1,32], index: 19, kind: input, shape index: {}]
  %s20 = inlined_call_operand.vmem [shape: f32[1,32], index: 20, kind: input, shape index: {}]
  %s21 = inlined_call_operand.vmem [shape: f32[1,32], index: 21, kind: input, shape index: {}]
  %s22 = inlined_call_operand.hbm [shape: bf16[32,64], index: 22, kind: input, shape index: {}]
  %s23 = inlined_call_operand.vmem [shape: f32[1,64], index: 23, kind: input, shape index: {}]
  %s24 = inlined_call_operand.vmem [shape: bf16[64,32], index: 24, kind: input, shape index: {}]
  %s25 = inlined_call_operand.vmem [shape: f32[1,32], index: 25, kind: input, shape index: {}]
  %s26 = inlined_call_operand.vmem [shape: f32[1,32], index: 26, kind: input, shape index: {}]
  %s27 = inlined_call_operand.vmem [shape: f32[1,32], index: 27, kind: input, shape index: {}]
  %s28 = inlined_call_operand.hbm [shape: f32[2,8,32], index: 28, kind: output, shape index: {}]
  %s29 = sld [smem:[#allocation0]]
  $region170: #{tpu_custom_call.1} parent=0
    _
  %s31 = ssub.s32 1, %s29
  %s32 = scalar_select 0, %s31, %s29
  $region1: #{tpu_custom_call.1} parent=0
    #allocation2 [shape = 'u8[32768]{0}', space=vmem, size = 0x8000, scoped, tag = 'input window, operand 3, single buffered']
    #allocation3 [shape = 's32[1]{0}', space=sflag, size = 0x4, scoped, tag = 'scoped memory for tpu_custom_call.1']
    #allocation4 [shape = 's32[1]{0}', space=sflag, size = 0x4, scoped, tag = 'scoped memory for tpu_custom_call.1']
    #allocation5 [shape = 'u8[8192]{0}', space=vmem, size = 0x2000, scoped, tag = 'input window, operand 4, single buffered']
    #allocation6 [shape = 's32[1]{0}', space=sflag, size = 0x4, scoped, tag = 'scoped memory for tpu_custom_call.1']
    #allocation7 [shape = 'u8[512]{0}', space=vmem, size = 0x400, scoped, tag = 'input window, operand 5, single buffered']
    #allocation8 [shape = 'u8[8192]{0}', space=vmem, size = 0x2000, scoped, tag = 'input window, operand 6, single buffered']
    #allocation9 [shape = 's32[1]{0}', space=sflag, size = 0x4, scoped, tag = 'scoped memory for tpu_custom_call.1']
    #allocation10 [shape = 'u8[8192]{0}', space=vmem, size = 0x2000, scoped, tag = 'input window, operand 10, single buffered']
    #allocation11 [shape = 'u8[512]{0}', space=vmem, size = 0x400, scoped, tag = 'input window, operand 12, single buffered']
    #allocation12 [shape = 's32[1]{0}', space=sflag, size = 0x4, scoped, tag = 'scoped memory for tpu_custom_call.1']
    #allocation13 [shape = 'u8[512]{0}', space=vmem, size = 0x400, scoped, tag = 'input window, operand 13, single buffered']
    #allocation14 [shape = 'u8[8192]{0}', space=vmem, size = 0x2000, scoped, tag = 'input window, operand 14, single buffered']
    #allocation15 [shape = 's32[1]{0}', space=sflag, size = 0x4, scoped, tag = 'scoped memory for tpu_custom_call.1']
    #allocation16 [shape = 'u8[512]{0}', space=vmem, size = 0x400, scoped, tag = 'input window, operand 15, single buffered']
    #allocation17 [shape = 'u8[8192]{0}', space=vmem, size = 0x2000, scoped, tag = 'input window, operand 16, single buffered']
    #allocation18 [shape = 's32[1]{0}', space=sflag, size = 0x4, scoped, tag = 'scoped memory for tpu_custom_call.1']
    #allocation19 [shape = 'u8[512]{0}', space=vmem, size = 0x400, scoped, tag = 'input window, operand 17, single buffered']
    #allocation20 [shape = 'u8[8192]{0}', space=vmem, size = 0x2000, scoped, tag = 'input window, operand 22, single buffered']
    #allocation21 [shape = 's32[1]{0}', space=sflag, size = 0x4, scoped, tag = 'scoped memory for tpu_custom_call.1']
    #allocation22 [shape = 'u8[8192]{0}', space=vmem, size = 0x2000, scoped, tag = 'output window, operand 0, single buffered']
    %33 = vsyncpa [#allocation3], 0
    %34 = vsyncpa [#allocation6], 0
    %35 = vsyncpa [#allocation9], 0
    %36 = vsyncpa [#allocation12], 0
    %37 = vsyncpa [#allocation15], 0
    %38 = vsyncpa [#allocation18], 0
    %39 = vsyncpa [#allocation21], 0
    %40 = vsyncpa [#allocation4], 0
    // Predicated region
    $region2: #{tpu_custom_call.1} parent=1 // pred_check
      _
    $region3: #{tpu_custom_call.1} parent=1 // pred_check_branch
      %42 = sbr.rel (0) target = $region5
    $region4: #{tpu_custom_call.1} parent=1 // pred_region
      _
    $region5: #{tpu_custom_call.1} parent=1 // pred_fallthru
      _
    // Predicated region
    $region6: #{tpu_custom_call.1} parent=1 // pred_check
      _
    $region7: #{tpu_custom_call.1} parent=1 // pred_check_branch
      %44 = sbr.rel (0) target = $region9
    $region8: #{tpu_custom_call.1} parent=1 // pred_region
      _
    $region9: #{tpu_custom_call.1} parent=1 // pred_fallthru
      _
    // Predicated region
    $region10: #{tpu_custom_call.1} parent=1 // pred_check
      _
    $region11: #{tpu_custom_call.1} parent=1 // pred_check_branch
      %46 = sbr.rel (0) target = $region13
    $region12: #{tpu_custom_call.1} parent=1 // pred_region
      _
    $region13: #{tpu_custom_call.1} parent=1 // pred_fallthru
      _
    // Predicated region
    $region14: #{tpu_custom_call.1} parent=1 // pred_check
      _
    $region15: #{tpu_custom_call.1} parent=1 // pred_check_branch
      %48 = sbr.rel (0) target = $region17
    $region16: #{tpu_custom_call.1} parent=1 // pred_region
      %s50 = ssub.s32 1024, 1024
      %51 = vsyncadd [#allocation3], %s50
      %s52 = sshll.u32 [#allocation2], 4
      %s53 = int_to_ptr.vmem [resolvable:$true] %s52
      %58 = dma.hbm_to_vmem [thread:$0]  %s3, 1024, %s53, [#allocation3], 128, 128, 8
    $region17: #{tpu_custom_call.1} parent=1 // pred_fallthru
      _
    // Predicated region
    $region18: #{tpu_custom_call.1} parent=1 // pred_check
      _
    $region19: #{tpu_custom_call.1} parent=1 // pred_check_branch
      %60 = sbr.rel (0) target = $region21
    $region20: #{tpu_custom_call.1} parent=1 // pred_region
      %s62 = ssub.s32 256, 256
      %63 = vsyncadd [#allocation6], %s62
      %s64 = sshll.u32 [#allocation5], 4
      %s65 = int_to_ptr.vmem [resolvable:$true] %s64
      %70 = dma.hbm_to_vmem [thread:$0]  %s4, 256, %s65, [#allocation6], 64, 64, 4
    $region21: #{tpu_custom_call.1} parent=1 // pred_fallthru
      _
    // Predicated region
    $region22: #{tpu_custom_call.1} parent=1 // pred_check
      _
    $region23: #{tpu_custom_call.1} parent=1 // pred_check_branch
      %72 = sbr.rel (0) target = $region25
    $region24: #{tpu_custom_call.1} parent=1 // pred_region
      %s74 = ssub.s32 16, 16
      %75 = vsyncadd [#allocation6], %s74
      %s77 = sshll.u32 [#allocation7], 4
      %s78 = int_to_ptr.vmem [resolvable:$true] %s77
      %80 = dma.hbm_to_vmem [thread:$0]  %s5, 16, %s78, [#allocation6]
    $region25: #{tpu_custom_call.1} parent=1 // pred_fallthru
      _
    // Predicated region
    $region26: #{tpu_custom_call.1} parent=1 // pred_check
      _
    $region27: #{tpu_custom_call.1} parent=1 // pred_check_branch
      %82 = sbr.rel (0) target = $region29
    $region28: #{tpu_custom_call.1} parent=1 // pred_region
      %s84 = ssub.s32 256, 256
      %85 = vsyncadd [#allocation9], %s84
      %s86 = sshll.u32 [#allocation8], 4
      %s87 = int_to_ptr.vmem [resolvable:$true] %s86
      %92 = dma.hbm_to_vmem [thread:$0]  %s6, 256, %s87, [#allocation9], 64, 64, 4
    $region29: #{tpu_custom_call.1} parent=1 // pred_fallthru
      _
    // Predicated region
    $region30: #{tpu_custom_call.1} parent=1 // pred_check
      _
    $region31: #{tpu_custom_call.1} parent=1 // pred_check_branch
      %94 = sbr.rel (0) target = $region33
    $region32: #{tpu_custom_call.1} parent=1 // pred_region
      _
    $region33: #{tpu_custom_call.1} parent=1 // pred_fallthru
      _
    // Predicated region
    $region34: #{tpu_custom_call.1} parent=1 // pred_check
      _
    $region35: #{tpu_custom_call.1} parent=1 // pred_check_branch
      %96 = sbr.rel (0) target = $region37
    $region36: #{tpu_custom_call.1} parent=1 // pred_region
      _
    $region37: #{tpu_custom_call.1} parent=1 // pred_fallthru
      _
    // Predicated region
    $region38: #{tpu_custom_call.1} parent=1 // pred_check
      _
    $region39: #{tpu_custom_call.1} parent=1 // pred_check_branch
      %98 = sbr.rel (0) target = $region41
    $region40: #{tpu_custom_call.1} parent=1 // pred_region
      _
    $region41: #{tpu_custom_call.1} parent=1 // pred_fallthru
      _
    // Predicated region
    $region42: #{tpu_custom_call.1} parent=1 // pred_check
      _
    $region43: #{tpu_custom_call.1} parent=1 // pred_check_branch
      %100 = sbr.rel (0) target = $region45
    $region44: #{tpu_custom_call.1} parent=1 // pred_region
      %s102 = ssub.s32 256, 256
      %103 = vsyncadd [#allocation9], %s102
      %s104 = sshll.u32 [#allocation10], 4
      %s105 = int_to_ptr.vmem [resolvable:$true] %s104
      %110 = dma.hbm_to_vmem [thread:$0]  %s10, 256, %s105, [#allocation9], 64, 64, 4
    $region45: #{tpu_custom_call.1} parent=1 // pred_fallthru
      _
    // Predicated region
    $region46: #{tpu_custom_call.1} parent=1 // pred_check
      _
    $region47: #{tpu_custom_call.1} parent=1 // pred_check_branch
      %112 = sbr.rel (0) target = $region49
    $region48: #{tpu_custom_call.1} parent=1 // pred_region
      _
    $region49: #{tpu_custom_call.1} parent=1 // pred_fallthru
      _
    // Predicated region
    $region50: #{tpu_custom_call.1} parent=1 // pred_check
      _
    $region51: #{tpu_custom_call.1} parent=1 // pred_check_branch
      %114 = sbr.rel (0) target = $region53
    $region52: #{tpu_custom_call.1} parent=1 // pred_region
      %s116 = ssub.s32 16, 16
      %117 = vsyncadd [#allocation12], %s116
      %s119 = sshll.u32 [#allocation11], 4
      %s120 = int_to_ptr.vmem [resolvable:$true] %s119
      %122 = dma.hbm_to_vmem [thread:$0]  %s12, 16, %s120, [#allocation12]
    $region53: #{tpu_custom_call.1} parent=1 // pred_fallthru
      _
    // Predicated region
    $region54: #{tpu_custom_call.1} parent=1 // pred_check
      _
    $region55: #{tpu_custom_call.1} parent=1 // pred_check_branch
      %124 = sbr.rel (0) target = $region57
    $region56: #{tpu_custom_call.1} parent=1 // pred_region
      %s126 = ssub.s32 16, 16
      %127 = vsyncadd [#allocation12], %s126
      %s129 = sshll.u32 [#allocation13], 4
      %s130 = int_to_ptr.vmem [resolvable:$true] %s129
      %132 = dma.hbm_to_vmem [thread:$0]  %s13, 16, %s130, [#allocation12]
    $region57: #{tpu_custom_call.1} parent=1 // pred_fallthru
      _
    // Predicated region
    $region58: #{tpu_custom_call.1} parent=1 // pred_check
      _
    $region59: #{tpu_custom_call.1} parent=1 // pred_check_branch
      %134 = sbr.rel (0) target = $region61
    $region60: #{tpu_custom_call.1} parent=1 // pred_region
      %s136 = ssub.s32 256, 256
      %137 = vsyncadd [#allocation15], %s136
      %s138 = sshll.u32 [#allocation14], 4
      %s139 = int_to_ptr.vmem [resolvable:$true] %s138
      %144 = dma.hbm_to_vmem [thread:$0]  %s14, 256, %s139, [#allocation15], 64, 64, 4
    $region61: #{tpu_custom_call.1} parent=1 // pred_fallthru
      _
    // Predicated region
    $region62: #{tpu_custom_call.1} parent=1 // pred_check
      _
    $region63: #{tpu_custom_call.1} parent=1 // pred_check_branch
      %146 = sbr.rel (0) target = $region65
    $region64: #{tpu_custom_call.1} parent=1 // pred_region
      %s148 = ssub.s32 16, 16
      %149 = vsyncadd [#allocation15], %s148
      %s151 = sshll.u32 [#allocation16], 4
      %s152 = int_to_ptr.vmem [resolvable:$true] %s151
      %154 = dma.hbm_to_vmem [thread:$0]  %s15, 16, %s152, [#allocation15]
    $region65: #{tpu_custom_call.1} parent=1 // pred_fallthru
      _
    // Predicated region
    $region66: #{tpu_custom_call.1} parent=1 // pred_check
      _
    $region67: #{tpu_custom_call.1} parent=1 // pred_check_branch
      %156 = sbr.rel (0) target = $region69
    $region68: #{tpu_custom_call.1} parent=1 // pred_region
      %s158 = ssub.s32 256, 256
      %159 = vsyncadd [#allocation18], %s158
      %s160 = sshll.u32 [#allocation17], 4
      %s161 = int_to_ptr.vmem [resolvable:$true] %s160
      %166 = dma.hbm_to_vmem [thread:$0]  %s16, 256, %s161, [#allocation18], 64, 64, 4
    $region69: #{tpu_custom_call.1} parent=1 // pred_fallthru
      _
    // Predicated region
    $region70: #{tpu_custom_call.1} parent=1 // pred_check
      _
    $region71: #{tpu_custom_call.1} parent=1 // pred_check_branch
      %168 = sbr.rel (0) target = $region73
    $region72: #{tpu_custom_call.1} parent=1 // pred_region
      %s170 = ssub.s32 16, 16
      %171 = vsyncadd [#allocation18], %s170
      %s173 = sshll.u32 [#allocation19], 4
      %s174 = int_to_ptr.vmem [resolvable:$true] %s173
      %176 = dma.hbm_to_vmem [thread:$0]  %s17, 16, %s174, [#allocation18]
    $region73: #{tpu_custom_call.1} parent=1 // pred_fallthru
      _
    // Predicated region
    $region74: #{tpu_custom_call.1} parent=1 // pred_check
      _
    $region75: #{tpu_custom_call.1} parent=1 // pred_check_branch
      %178 = sbr.rel (0) target = $region77
    $region76: #{tpu_custom_call.1} parent=1 // pred_region
      _
    $region77: #{tpu_custom_call.1} parent=1 // pred_fallthru
      _
    // Predicated region
    $region78: #{tpu_custom_call.1} parent=1 // pred_check
      _
    $region79: #{tpu_custom_call.1} parent=1 // pred_check_branch
      %180 = sbr.rel (0) target = $region81
    $region80: #{tpu_custom_call.1} parent=1 // pred_region
      _
    $region81: #{tpu_custom_call.1} parent=1 // pred_fallthru
      _
    // Predicated region
    $region82: #{tpu_custom_call.1} parent=1 // pred_check
      _
    $region83: #{tpu_custom_call.1} parent=1 // pred_check_branch
      %182 = sbr.rel (0) target = $region85
    $region84: #{tpu_custom_call.1} parent=1 // pred_region
      _
    $region85: #{tpu_custom_call.1} parent=1 // pred_fallthru
      _
    // Predicated region
    $region86: #{tpu_custom_call.1} parent=1 // pred_check
      _
    $region87: #{tpu_custom_call.1} parent=1 // pred_check_branch
      %184 = sbr.rel (0) target = $region89
    $region88: #{tpu_custom_call.1} parent=1 // pred_region
      _
    $region89: #{tpu_custom_call.1} parent=1 // pred_fallthru
      _
    // Predicated region
    $region90: #{tpu_custom_call.1} parent=1 // pred_check
      _
    $region91: #{tpu_custom_call.1} parent=1 // pred_check_branch
      %186 = sbr.rel (0) target = $region93
    $region92: #{tpu_custom_call.1} parent=1 // pred_region
      %s188 = ssub.s32 256, 256
      %189 = vsyncadd [#allocation21], %s188
      %s190 = sshll.u32 [#allocation20], 4
      %s191 = int_to_ptr.vmem [resolvable:$true] %s190
      %196 = dma.hbm_to_vmem [thread:$0]  %s22, 256, %s191, [#allocation21], 64, 64, 4
    $region93: #{tpu_custom_call.1} parent=1 // pred_fallthru
      _
    // Predicated region
    $region94: #{tpu_custom_call.1} parent=1 // pred_check
      _
    $region95: #{tpu_custom_call.1} parent=1 // pred_check_branch
      %198 = sbr.rel (0) target = $region97
    $region96: #{tpu_custom_call.1} parent=1 // pred_region
      _
    $region97: #{tpu_custom_call.1} parent=1 // pred_fallthru
      _
    // Predicated region
    $region98: #{tpu_custom_call.1} parent=1 // pred_check
      _
    $region99: #{tpu_custom_call.1} parent=1 // pred_check_branch
      %200 = sbr.rel (0) target = $region101
    $region100: #{tpu_custom_call.1} parent=1 // pred_region
      _
    $region101: #{tpu_custom_call.1} parent=1 // pred_fallthru
      _
    // Predicated region
    $region102: #{tpu_custom_call.1} parent=1 // pred_check
      _
    $region103: #{tpu_custom_call.1} parent=1 // pred_check_branch
      %202 = sbr.rel (0) target = $region105
    $region104: #{tpu_custom_call.1} parent=1 // pred_region
      _
    $region105: #{tpu_custom_call.1} parent=1 // pred_fallthru
      _
    // Predicated region
    $region106: #{tpu_custom_call.1} parent=1 // pred_check
      _
    $region107: #{tpu_custom_call.1} parent=1 // pred_check_branch
      %204 = sbr.rel (0) target = $region109
    $region108: #{tpu_custom_call.1} parent=1 // pred_region
      _
    $region109: #{tpu_custom_call.1} parent=1 // pred_fallthru
      _
    // Predicated region
    $region110: #{tpu_custom_call.1} parent=1 // pred_check
      _
    $region111: #{tpu_custom_call.1} parent=1 // pred_check_branch
      %206 = sbr.rel (0) target = $region113
    $region112: #{tpu_custom_call.1} parent=1 // pred_region
      _
    $region113: #{tpu_custom_call.1} parent=1 // pred_fallthru
      _
    // Predicated region
    $region114: #{tpu_custom_call.1} parent=1 // pred_check
      _
    $region115: #{tpu_custom_call.1} parent=1 // pred_check_branch
      %208 = sbr.rel (0) target = $region117
    $region116: #{tpu_custom_call.1} parent=1 // pred_region
      %209 = dma.done [#allocation3], 1024
    $region117: #{tpu_custom_call.1} parent=1 // pred_fallthru
      _
    // Predicated region
    $region118: #{tpu_custom_call.1} parent=1 // pred_check
      _
    $region119: #{tpu_custom_call.1} parent=1 // pred_check_branch
      %211 = sbr.rel (0) target = $region121
    $region120: #{tpu_custom_call.1} parent=1 // pred_region
      %212 = dma.done [#allocation6], 256
    $region121: #{tpu_custom_call.1} parent=1 // pred_fallthru
      _
    // Predicated region
    $region122: #{tpu_custom_call.1} parent=1 // pred_check
      _
    $region123: #{tpu_custom_call.1} parent=1 // pred_check_branch
      %214 = sbr.rel (0) target = $region125
    $region124: #{tpu_custom_call.1} parent=1 // pred_region
      %215 = dma.done [#allocation6], 16
    $region125: #{tpu_custom_call.1} parent=1 // pred_fallthru
      _
    // Predicated region
    $region126: #{tpu_custom_call.1} parent=1 // pred_check
      _
    $region127: #{tpu_custom_call.1} parent=1 // pred_check_branch
      %217 = sbr.rel (0) target = $region129
    $region128: #{tpu_custom_call.1} parent=1 // pred_region
      %218 = dma.done [#allocation9], 256
    $region129: #{tpu_custom_call.1} parent=1 // pred_fallthru
      _
    // Predicated region
    $region130: #{tpu_custom_call.1} parent=1 // pred_check
      _
    $region131: #{tpu_custom_call.1} parent=1 // pred_check_branch
      %220 = sbr.rel (0) target = $region133
    $region132: #{tpu_custom_call.1} parent=1 // pred_region
      %221 = dma.done [#allocation9], 256
    $region133: #{tpu_custom_call.1} parent=1 // pred_fallthru
      _
    // Predicated region
    $region134: #{tpu_custom_call.1} parent=1 // pred_check
      _
    $region135: #{tpu_custom_call.1} parent=1 // pred_check_branch
      %223 = sbr.rel (0) target = $region137
    $region136: #{tpu_custom_call.1} parent=1 // pred_region
      %224 = dma.done [#allocation12], 16
    $region137: #{tpu_custom_call.1} parent=1 // pred_fallthru
      _
    // Predicated region
    $region138: #{tpu_custom_call.1} parent=1 // pred_check
      _
    $region139: #{tpu_custom_call.1} parent=1 // pred_check_branch
      %226 = sbr.rel (0) target = $region141
    $region140: #{tpu_custom_call.1} parent=1 // pred_region
      %227 = dma.done [#allocation12], 16
    $region141: #{tpu_custom_call.1} parent=1 // pred_fallthru
      _
    // Predicated region
    $region142: #{tpu_custom_call.1} parent=1 // pred_check
      _
    $region143: #{tpu_custom_call.1} parent=1 // pred_check_branch
      %229 = sbr.rel (0) target = $region145
    $region144: #{tpu_custom_call.1} parent=1 // pred_region
      %230 = dma.done [#allocation15], 256
    $region145: #{tpu_custom_call.1} parent=1 // pred_fallthru
      _
    // Predicated region
    $region146: #{tpu_custom_call.1} parent=1 // pred_check
      _
    $region147: #{tpu_custom_call.1} parent=1 // pred_check_branch
      %232 = sbr.rel (0) target = $region149
    $region148: #{tpu_custom_call.1} parent=1 // pred_region
      %233 = dma.done [#allocation15], 16
    $region149: #{tpu_custom_call.1} parent=1 // pred_fallthru
      _
    // Predicated region
    $region150: #{tpu_custom_call.1} parent=1 // pred_check
      _
    $region151: #{tpu_custom_call.1} parent=1 // pred_check_branch
      %235 = sbr.rel (0) target = $region153
    $region152: #{tpu_custom_call.1} parent=1 // pred_region
      %236 = dma.done [#allocation18], 256
    $region153: #{tpu_custom_call.1} parent=1 // pred_fallthru
      _
    // Predicated region
    $region154: #{tpu_custom_call.1} parent=1 // pred_check
      _
    $region155: #{tpu_custom_call.1} parent=1 // pred_check_branch
      %238 = sbr.rel (0) target = $region157
    $region156: #{tpu_custom_call.1} parent=1 // pred_region
      %239 = dma.done [#allocation18], 16
    $region157: #{tpu_custom_call.1} parent=1 // pred_fallthru
      _
    // Predicated region
    $region158: #{tpu_custom_call.1} parent=1 // pred_check
      _
    $region159: #{tpu_custom_call.1} parent=1 // pred_check_branch
      %241 = sbr.rel (0) target = $region161
    $region160: #{tpu_custom_call.1} parent=1 // pred_region
      %242 = dma.done [#allocation21], 256
    $region161: #{tpu_custom_call.1} parent=1 // pred_fallthru
      _
    %v244 = vld [vmem:[%s0] sm:$0xff]
    %v245 = vld [vmem:[%s0 + $0x8] sm:$0xff]
    %v246 = vld [vmem:[%s1] sm:$0xff]
    %v247 = vld [vmem:[%s1 + $0x8] sm:$0xff]
    %v248 = vld [vmem:[#allocation5] sm:$0xf]
    %v249 = vld [vmem:[#allocation5 + $0x4] sm:$0xf]
    %v250 = vld [vmem:[#allocation5 + $0x8] sm:$0xf]
    %v251 = vld [vmem:[#allocation5 + $0xc] sm:$0xf]
    %v252 = vld [vmem:[#allocation8] sm:$0xf]
    %v253 = vld [vmem:[#allocation8 + $0x4] sm:$0xf]
    %v254 = vld [vmem:[#allocation8 + $0x8] sm:$0xf]
    %v255 = vld [vmem:[#allocation8 + $0xc] sm:$0xf]
    %v256 = vld [vmem:[%s8] sm:$0xf]
    %v257 = vld [vmem:[%s8 + $0x4] sm:$0xf]
    %v258 = vld [vmem:[%s8 + $0x8] sm:$0xf]
    %v259 = vld [vmem:[%s8 + $0xc] sm:$0xf]
    %v260 = vld [vmem:[#allocation7] sm:$0x1]
    %v261 = vld [vmem:[%s7] sm:$0xff]
    %v262 = vld [vmem:[%s7 + $0x8] sm:$0xff]
    %v263 = vld [vmem:[%s7 + $0x10] sm:$0xff]
    %v264 = vld [vmem:[%s7 + $0x18] sm:$0xff]
    %v265 = vld [vmem:[%s9] sm:$0xff]
    %v266 = vld [vmem:[%s9 + $0x8] sm:$0xff]
    %v267 = vld [vmem:[%s9 + $0x10] sm:$0xff]
    %v268 = vld [vmem:[%s9 + $0x18] sm:$0xff]
    %v269 = vadd.f32 %v244, %v246
    %v270 = vadd.f32 %v245, %v247
    %v271 = vpack.c.bf16 %v270, %v269
    %v273 = vlaneseq
    %v274 = vshrl.u32 %v273, 7
    %v275 = vsub.s32 0, %v274
    %v276 = vrot.slane %v260, %v275
    %v282 = vunpack.c.l.b16 %v248
    %v283 = vunpack.c.l.b16 %v249
    %v284 = vunpack.c.l.b16 %v250
    %v285 = vunpack.c.l.b16 %v251
    %v286 = vpack.c.b16 %v283, %v282
    %v287 = vpack.c.b16 %v285, %v284
    %vm290 = vcmask 261120
    %v292 = vsel %vm290, %v271, 0
    %294 = vmatprep.subr.bf16.mxu0 0
    %295 = vmatpush1.bf16.msra.mxu0 0
    %296 = vmatprep.subr.bf16.mxu0 0
    %297 = vmatpush1.bf16.msra.mxu0 0
    %298 = vmatprep.subr.bf16.mxu0 0
    %299 = vmatpush1.bf16.msra.mxu0 0
    %300 = vmatprep.subr.bf16.mxu0 0
    %301 = vmatpush1.bf16.msra.mxu0 0
    %302 = vmatprep.subr.bf16.mxu0 0
    %303 = vmatpush1.bf16.msra.mxu0 0
    %304 = vmatprep.subr.bf16.mxu0 0
    %305 = vmatpush1.bf16.msra.mxu0 0
    %306 = vmatprep.subr.bf16.mxu0 0
    %307 = vmatpush1.bf16.msra.mxu0 %v287
    %308 = vmatprep.subr.bf16.mxu0 0
    %309 = vmatpush1.bf16.msra.mxu0 %v286
    %310 = vmatprep.subr.bf16.mxu0 0
    %311 = vmatpush2.bf16.msra.mxu0 0
    %312 = vmatprep.subr.bf16.mxu0 0
    %313 = vmatpush2.bf16.msra.mxu0 0
    %314 = vmatprep.subr.bf16.mxu0 0
    %315 = vmatpush2.bf16.msra.mxu0 0
    %316 = vmatprep.subr.bf16.mxu0 0
    %317 = vmatpush2.bf16.msra.mxu0 0
    %318 = vmatprep.subr.bf16.mxu0 0
    %319 = vmatpush2.bf16.msra.mxu0 0
    %320 = vmatprep.subr.bf16.mxu0 0
    %321 = vmatpush2.bf16.msra.mxu0 0
    %322 = vmatprep.subr.bf16.mxu0 0
    %323 = vmatpush2.bf16.msra.mxu0 0
    %324 = vmatprep.subr.bf16.mxu0 0
    %325 = vmatpush2.bf16.msra.mxu0 0
    %326 = vmatprep.mubr.bf16.mxu0 0
    %327 = vmatmul.mubr.bf16.gmra.mxu0 %v292
    %v328 = vpop.f32.mrf.mxu0
    %v329 = vadd.f32 %v276, %v328
    %v330 = vpop.f32.mrf.mxu0
    %v331 = vpop.f32.mrf.mxu0
    %v332 = vadd.f32 %v276, %v331
    %v333 = vpop.f32.mrf.mxu0
    %334 = vdwg.mxu0
    %v335 = vld [vmem:[%s2] sm:$0xff]
    %v336 = vld [vmem:[%s2 + $0x8] sm:$0xff]
    %v337 = vld [vmem:[%s2 + $0x10] sm:$0xff]
    %v338 = vld [vmem:[%s2 + $0x18] sm:$0xff]
    %v339 = vld [vmem:[#allocation2] sm:$0xff]
    %v340 = vld [vmem:[#allocation2 + $0x8] sm:$0xff]
    %v341 = vld [vmem:[#allocation2 + $0x10] sm:$0xff]
    %v342 = vld [vmem:[#allocation2 + $0x18] sm:$0xff]
    %v343 = vadd.f32 %v335, %v339
    %v344 = vadd.f32 %v336, %v340
    %v345 = vadd.f32 %v337, %v341
    %v346 = vadd.f32 %v338, %v342
    %v347 = vpack.c.bf16 %v344, %v343
    %v348 = vpack.c.bf16 %v346, %v345
    %350 = vset.pattern.permute.xlu0 0
    %351 = vperm.xlu0 %350, %v261
    %v352 = vpop.permute.xlu0 %351
    %355 = vset.pattern.permute.xlu0 0
    %356 = vperm.xlu0 %355, %v262
    %v357 = vpop.permute.xlu0 %356
    %360 = vset.pattern.permute.xlu0 0
    %361 = vperm.xlu0 %360, %v263
    %v362 = vpop.permute.xlu0 %361
    %365 = vset.pattern.permute.xlu0 0
    %366 = vperm.xlu0 %365, %v264
    %v367 = vpop.permute.xlu0 %366
    %v373 = vunpack.c.l.b16 %v252
    %v374 = vunpack.c.l.b16 %v253
    %v375 = vunpack.c.l.b16 %v254
    %v376 = vunpack.c.l.b16 %v255
    %v377 = vpack.c.b16 %v374, %v373
    %v378 = vpack.c.b16 %v376, %v375
    %v380 = vsel %vm290, %v377, 0
    %v383 = vsel %vm290, %v378, 0
    %385 = vmatprep.subr.bf16.mxu0 0
    %386 = vmatpush1.bf16.msra.mxu0 0
    %387 = vmatprep.subr.bf16.mxu0 0
    %388 = vmatpush1.bf16.msra.mxu0 0
    %389 = vmatprep.subr.bf16.mxu0 0
    %390 = vmatpush1.bf16.msra.mxu0 0
    %391 = vmatprep.subr.bf16.mxu0 0
    %392 = vmatpush1.bf16.msra.mxu0 0
    %393 = vmatprep.subr.bf16.mxu0 0
    %394 = vmatpush1.bf16.msra.mxu0 0
    %395 = vmatprep.subr.bf16.mxu0 0
    %396 = vmatpush1.bf16.msra.mxu0 0
    %397 = vmatprep.subr.bf16.mxu0 0
    %398 = vmatpush1.bf16.msra.mxu0 %v348
    %399 = vmatprep.subr.bf16.mxu0 0
    %400 = vmatpush1.bf16.msra.mxu0 %v347
    %401 = vmatprep.subr.bf16.mxu0 0
    %402 = vmatpush2.bf16.msra.mxu0 0
    %403 = vmatprep.subr.bf16.mxu0 0
    %404 = vmatpush2.bf16.msra.mxu0 0
    %405 = vmatprep.subr.bf16.mxu0 0
    %406 = vmatpush2.bf16.msra.mxu0 0
    %407 = vmatprep.subr.bf16.mxu0 0
    %408 = vmatpush2.bf16.msra.mxu0 0
    %409 = vmatprep.subr.bf16.mxu0 0
    %410 = vmatpush2.bf16.msra.mxu0 0
    %411 = vmatprep.subr.bf16.mxu0 0
    %412 = vmatpush2.bf16.msra.mxu0 0
    %413 = vmatprep.subr.bf16.mxu0 0
    %414 = vmatpush2.bf16.msra.mxu0 0
    %415 = vmatprep.subr.bf16.mxu0 0
    %416 = vmatpush2.bf16.msra.mxu0 0
    %417 = vmatprep.mubr.bf16.mxu0 0
    %418 = vmatmul.mubr.bf16.gmra.mxu0 %v380
    %v419 = vpop.f32.mrf.mxu0
    %v420 = vadd.f32 %v352, %v419
    %v421 = vpop.f32.mrf.mxu0
    %v422 = vpop.f32.mrf.mxu0
    %v423 = vadd.f32 %v357, %v422
    %v424 = vpop.f32.mrf.mxu0
    %425 = vmatprep.mubr.bf16.mxu0 0
    %426 = vmatmul.mubr.bf16.gmra.mxu0 %v383
    %v427 = vpop.f32.mrf.mxu0
    %v428 = vadd.f32 %v362, %v427
    %v429 = vpop.f32.mrf.mxu0
    %v430 = vpop.f32.mrf.mxu0
    %v431 = vadd.f32 %v367, %v430
    %v432 = vpop.f32.mrf.mxu0
    %433 = vdwg.mxu0
    %v434 = vpack.c.bf16 %v423, %v420
    %v435 = vpack.c.bf16 %v431, %v428
    %v436 = vpack.c.bf16 %v336, %v335
    %v437 = vpack.c.bf16 %v338, %v337
    %439 = vset.pattern.permute.xlu0 0
    %440 = vperm.xlu0 %439, %v265
    %v441 = vpop.permute.xlu0 %440
    %444 = vset.pattern.permute.xlu0 0
    %445 = vperm.xlu0 %444, %v266
    %v446 = vpop.permute.xlu0 %445
    %449 = vset.pattern.permute.xlu0 0
    %450 = vperm.xlu0 %449, %v267
    %v451 = vpop.permute.xlu0 %450
    %454 = vset.pattern.permute.xlu0 0
    %455 = vperm.xlu0 %454, %v268
    %v456 = vpop.permute.xlu0 %455
    %v462 = vunpack.c.l.b16 %v256
    %v463 = vunpack.c.l.b16 %v257
    %v464 = vunpack.c.l.b16 %v258
    %v465 = vunpack.c.l.b16 %v259
    %v466 = vpack.c.b16 %v463, %v462
    %v467 = vpack.c.b16 %v465, %v464
    %v469 = vsel %vm290, %v466, 0
    %v472 = vsel %vm290, %v467, 0
    %474 = vmatprep.subr.bf16.mxu0 0
    %475 = vmatpush1.bf16.msra.mxu0 0
    %476 = vmatprep.subr.bf16.mxu0 0
    %477 = vmatpush1.bf16.msra.mxu0 0
    %478 = vmatprep.subr.bf16.mxu0 0
    %479 = vmatpush1.bf16.msra.mxu0 0
    %480 = vmatprep.subr.bf16.mxu0 0
    %481 = vmatpush1.bf16.msra.mxu0 0
    %482 = vmatprep.subr.bf16.mxu0 0
    %483 = vmatpush1.bf16.msra.mxu0 0
    %484 = vmatprep.subr.bf16.mxu0 0
    %485 = vmatpush1.bf16.msra.mxu0 0
    %486 = vmatprep.subr.bf16.mxu0 0
    %487 = vmatpush1.bf16.msra.mxu0 %v437
    %488 = vmatprep.subr.bf16.mxu0 0
    %489 = vmatpush1.bf16.msra.mxu0 %v436
    %490 = vmatprep.subr.bf16.mxu0 0
    %491 = vmatpush2.bf16.msra.mxu0 0
    %492 = vmatprep.subr.bf16.mxu0 0
    %493 = vmatpush2.bf16.msra.mxu0 0
    %494 = vmatprep.subr.bf16.mxu0 0
    %495 = vmatpush2.bf16.msra.mxu0 0
    %496 = vmatprep.subr.bf16.mxu0 0
    %497 = vmatpush2.bf16.msra.mxu0 0
    %498 = vmatprep.subr.bf16.mxu0 0
    %499 = vmatpush2.bf16.msra.mxu0 0
    %500 = vmatprep.subr.bf16.mxu0 0
    %501 = vmatpush2.bf16.msra.mxu0 0
    %502 = vmatprep.subr.bf16.mxu0 0
    %503 = vmatpush2.bf16.msra.mxu0 0
    %504 = vmatprep.subr.bf16.mxu0 0
    %505 = vmatpush2.bf16.msra.mxu0 0
    %506 = vmatprep.mubr.bf16.mxu0 0
    %507 = vmatmul.mubr.bf16.gmra.mxu0 %v469
    %v508 = vpop.f32.mrf.mxu0
    %v509 = vadd.f32 %v441, %v508
    %v510 = vpop.f32.mrf.mxu0
    %v511 = vpop.f32.mrf.mxu0
    %v512 = vadd.f32 %v446, %v511
    %v513 = vpop.f32.mrf.mxu0
    %514 = vmatprep.mubr.bf16.mxu0 0
    %515 = vmatmul.mubr.bf16.gmra.mxu0 %v472
    %v516 = vpop.f32.mrf.mxu0
    %v517 = vadd.f32 %v451, %v516
    %v518 = vpop.f32.mrf.mxu0
    %v519 = vpop.f32.mrf.mxu0
    %v520 = vadd.f32 %v456, %v519
    %v521 = vpop.f32.mrf.mxu0
    %522 = vdwg.mxu0
    %v523 = vpack.c.bf16 %v512, %v509
    %v524 = vpack.c.bf16 %v520, %v517
    %v525 = vpack.c.bf16 %v329, %v329
    %vm526 = vcmask 64512
    %v528 = vsel %vm526, %v525, 0
    %vm530 = vcmask 1043456
    %v532 = vsel %vm530, %v434, 0
    %534 = vmatprep.subr.bf16.mxu0 0
    %535 = vmatpush1.bf16.msra.mxu0 0
    %536 = vmatprep.subr.bf16.mxu0 0
    %537 = vmatpush1.bf16.msra.mxu0 0
    %538 = vmatprep.subr.bf16.mxu0 0
    %539 = vmatpush1.bf16.msra.mxu0 0
    %540 = vmatprep.subr.bf16.mxu0 0
    %541 = vmatpush1.bf16.msra.mxu0 0
    %542 = vmatprep.subr.bf16.mxu0 0
    %543 = vmatpush1.bf16.msra.mxu0 0
    %544 = vmatprep.subr.bf16.mxu0 0
    %545 = vmatpush1.bf16.msra.mxu0 0
    %546 = vmatprep.subr.bf16.mxu0 0
    %547 = vmatpush1.bf16.msra.mxu0 0
    %548 = vmatprep.subr.bf16.mxu0 0
    %549 = vmatpush1.bf16.msra.mxu0 %v532
    %550 = vmatprep.subr.bf16.mxu0 0
    %551 = vmatpush2.bf16.msra.mxu0 0
    %552 = vmatprep.subr.bf16.mxu0 0
    %553 = vmatpush2.bf16.msra.mxu0 0
    %554 = vmatprep.subr.bf16.mxu0 0
    %555 = vmatpush2.bf16.msra.mxu0 0
    %556 = vmatprep.subr.bf16.mxu0 0
    %557 = vmatpush2.bf16.msra.mxu0 0
    %558 = vmatprep.subr.bf16.mxu0 0
    %559 = vmatpush2.bf16.msra.mxu0 0
    %560 = vmatprep.subr.bf16.mxu0 0
    %561 = vmatpush2.bf16.msra.mxu0 0
    %562 = vmatprep.subr.bf16.mxu0 0
    %563 = vmatpush2.bf16.msra.mxu0 0
    %564 = vmatprep.subr.bf16.mxu0 0
    %565 = vmatpush2.bf16.msra.mxu0 0
    %566 = vmatprep.mubr.bf16.mxu0 0
    %567 = vmatmul.mubr.bf16.gmra.mxu0 %v528
    %v568 = vpop.f32.mrf.mxu0
    %v569 = vadd.f32 0.0, %v568
    %v570 = vpop.f32.mrf.mxu0
    %v571 = vpop.f32.mrf.mxu0
    %v572 = vpop.f32.mrf.mxu0
    %573 = vdwg.mxu0
    %vm574 = vcmask 523264
    %v575 = vsel %vm574, %v569, -inf
    %576 = vmax.xlane.f32.xlu0 %v575
    %v577 = vpop.xlane.xlu0 %576
    %v578 = vsub.f32 %v569, %v577
    %v579 = vmul.f32 %v578, 1.442695
    %v580 = vpow.pop %v579
    %v581 = vsel %vm574, %v580, 0.0
    %582 = vadd.xlane.f32.xlu0 %v581
    %v583 = vpop.xlane.xlu0 %582
    %v584 = vrcp.pop %v583
    %v585 = vmul.f32 %v580, %v584
    %v586 = vpack.c.bf16 %v585, %v585
    %v588 = vsel %vm574, %v586, 0
    %v591 = vsel %vm574, %v523, 0
    %593 = vmatprep.subr.bf16.mxu0 0
    %594 = vmatpush1.bf16.xpose.msra.mxu0 0
    %595 = vmatprep.subr.bf16.mxu0 0
    %596 = vmatpush1.bf16.xpose.msra.mxu0 0
    %597 = vmatprep.subr.bf16.mxu0 0
    %598 = vmatpush1.bf16.xpose.msra.mxu0 0
    %599 = vmatprep.subr.bf16.mxu0 0
    %600 = vmatpush1.bf16.xpose.msra.mxu0 0
    %601 = vmatprep.subr.bf16.mxu0 0
    %602 = vmatpush1.bf16.xpose.msra.mxu0 0
    %603 = vmatprep.subr.bf16.mxu0 0
    %604 = vmatpush1.bf16.xpose.msra.mxu0 0
    %605 = vmatprep.subr.bf16.mxu0 0
    %606 = vmatpush1.bf16.xpose.msra.mxu0 0
    %607 = vmatprep.subr.bf16.mxu0 0
    %608 = vmatpush1.bf16.xpose.msra.mxu0 %v591
    %609 = vmatprep.subr.bf16.mxu0 0
    %610 = vmatpush2.bf16.xpose.msra.mxu0 0
    %611 = vmatprep.subr.bf16.mxu0 0
    %612 = vmatpush2.bf16.xpose.msra.mxu0 0
    %613 = vmatprep.subr.bf16.mxu0 0
    %614 = vmatpush2.bf16.xpose.msra.mxu0 0
    %615 = vmatprep.subr.bf16.mxu0 0
    %616 = vmatpush2.bf16.xpose.msra.mxu0 0
    %617 = vmatprep.subr.bf16.mxu0 0
    %618 = vmatpush2.bf16.xpose.msra.mxu0 0
    %619 = vmatprep.subr.bf16.mxu0 0
    %620 = vmatpush2.bf16.xpose.msra.mxu0 0
    %621 = vmatprep.subr.bf16.mxu0 0
    %622 = vmatpush2.bf16.xpose.msra.mxu0 0
    %623 = vmatprep.subr.bf16.mxu0 0
    %624 = vmatpush2.bf16.xpose.msra.mxu0 0
    %625 = vmatprep.mubr.bf16.mxu0 0
    %626 = vmatmul.mubr.bf16.gmra.mxu0 %v588
    %v627 = vpop.f32.mrf.mxu0
    %v628 = vadd.f32 0.0, %v627
    %v629 = vpop.f32.mrf.mxu0
    %v630 = vpop.f32.mrf.mxu0
    %v631 = vpop.f32.mrf.mxu0
    %632 = vdwg.mxu0
    %634 = vrot.lane.b32.xlu0 %v525, 120
    %v635 = vpop.permute.xlu0 %634
    %v637 = vrot.slane %v434, 4
    %v639 = vsel %vm526, %v635, 0
    %v642 = vsel %vm530, %v637, 0
    %644 = vmatprep.subr.bf16.mxu0 0
    %645 = vmatpush1.bf16.msra.mxu0 0
    %646 = vmatprep.subr.bf16.mxu0 0
    %647 = vmatpush1.bf16.msra.mxu0 0
    %648 = vmatprep.subr.bf16.mxu0 0
    %649 = vmatpush1.bf16.msra.mxu0 0
    %650 = vmatprep.subr.bf16.mxu0 0
    %651 = vmatpush1.bf16.msra.mxu0 0
    %652 = vmatprep.subr.bf16.mxu0 0
    %653 = vmatpush1.bf16.msra.mxu0 0
    %654 = vmatprep.subr.bf16.mxu0 0
    %655 = vmatpush1.bf16.msra.mxu0 0
    %656 = vmatprep.subr.bf16.mxu0 0
    %657 = vmatpush1.bf16.msra.mxu0 0
    %658 = vmatprep.subr.bf16.mxu0 0
    %659 = vmatpush1.bf16.msra.mxu0 %v642
    %660 = vmatprep.subr.bf16.mxu0 0
    %661 = vmatpush2.bf16.msra.mxu0 0
    %662 = vmatprep.subr.bf16.mxu0 0
    %663 = vmatpush2.bf16.msra.mxu0 0
    %664 = vmatprep.subr.bf16.mxu0 0
    %665 = vmatpush2.bf16.msra.mxu0 0
    %666 = vmatprep.subr.bf16.mxu0 0
    %667 = vmatpush2.bf16.msra.mxu0 0
    %668 = vmatprep.subr.bf16.mxu0 0
    %669 = vmatpush2.bf16.msra.mxu0 0
    %670 = vmatprep.subr.bf16.mxu0 0
    %671 = vmatpush2.bf16.msra.mxu0 0
    %672 = vmatprep.subr.bf16.mxu0 0
    %673 = vmatpush2.bf16.msra.mxu0 0
    %674 = vmatprep.subr.bf16.mxu0 0
    %675 = vmatpush2.bf16.msra.mxu0 0
    %676 = vmatprep.mubr.bf16.mxu0 0
    %677 = vmatmul.mubr.bf16.gmra.mxu0 %v639
    %v678 = vpop.f32.mrf.mxu0
    %v679 = vadd.f32 0.0, %v678
    %v680 = vpop.f32.mrf.mxu0
    %v681 = vpop.f32.mrf.mxu0
    %v682 = vpop.f32.mrf.mxu0
    %683 = vdwg.mxu0
    %v684 = vsel %vm574, %v679, -inf
    %685 = vmax.xlane.f32.xlu0 %v684
    %v686 = vpop.xlane.xlu0 %685
    %v687 = vsub.f32 %v679, %v686
    %v688 = vmul.f32 %v687, 1.442695
    %v689 = vpow.pop %v688
    %v690 = vsel %vm574, %v689, 0.0
    %691 = vadd.xlane.f32.xlu0 %v690
    %v692 = vpop.xlane.xlu0 %691
    %v693 = vrcp.pop %v692
    %v694 = vmul.f32 %v689, %v693
    %v695 = vpack.c.bf16 %v694, %v694
    %v697 = vrot.slane %v523, 4
    %v699 = vsel %vm574, %v695, 0
    %v702 = vsel %vm574, %v697, 0
    %704 = vmatprep.subr.bf16.mxu0 0
    %705 = vmatpush1.bf16.xpose.msra.mxu0 0
    %706 = vmatprep.subr.bf16.mxu0 0
    %707 = vmatpush1.bf16.xpose.msra.mxu0 0
    %708 = vmatprep.subr.bf16.mxu0 0
    %709 = vmatpush1.bf16.xpose.msra.mxu0 0
    %710 = vmatprep.subr.bf16.mxu0 0
    %711 = vmatpush1.bf16.xpose.msra.mxu0 0
    %712 = vmatprep.subr.bf16.mxu0 0
    %713 = vmatpush1.bf16.xpose.msra.mxu0 0
    %714 = vmatprep.subr.bf16.mxu0 0
    %715 = vmatpush1.bf16.xpose.msra.mxu0 0
    %716 = vmatprep.subr.bf16.mxu0 0
    %717 = vmatpush1.bf16.xpose.msra.mxu0 0
    %718 = vmatprep.subr.bf16.mxu0 0
    %719 = vmatpush1.bf16.xpose.msra.mxu0 %v702
    %720 = vmatprep.subr.bf16.mxu0 0
    %721 = vmatpush2.bf16.xpose.msra.mxu0 0
    %722 = vmatprep.subr.bf16.mxu0 0
    %723 = vmatpush2.bf16.xpose.msra.mxu0 0
    %724 = vmatprep.subr.bf16.mxu0 0
    %725 = vmatpush2.bf16.xpose.msra.mxu0 0
    %726 = vmatprep.subr.bf16.mxu0 0
    %727 = vmatpush2.bf16.xpose.msra.mxu0 0
    %728 = vmatprep.subr.bf16.mxu0 0
    %729 = vmatpush2.bf16.xpose.msra.mxu0 0
    %730 = vmatprep.subr.bf16.mxu0 0
    %731 = vmatpush2.bf16.xpose.msra.mxu0 0
    %732 = vmatprep.subr.bf16.mxu0 0
    %733 = vmatpush2.bf16.xpose.msra.mxu0 0
    %734 = vmatprep.subr.bf16.mxu0 0
    %735 = vmatpush2.bf16.xpose.msra.mxu0 0
    %736 = vmatprep.mubr.bf16.mxu0 0
    %737 = vmatmul.mubr.bf16.gmra.mxu0 %v699
    %v738 = vpop.f32.mrf.mxu0
    %v739 = vadd.f32 0.0, %v738
    %v740 = vpop.f32.mrf.mxu0
    %v741 = vpop.f32.mrf.mxu0
    %v742 = vpop.f32.mrf.mxu0
    %743 = vdwg.mxu0
    %744 = vrot.lane.b32.xlu0 %v525, 112
    %v745 = vpop.permute.xlu0 %744
    %v747 = vsel %vm526, %v745, 0
    %v750 = vsel %vm530, %v435, 0
    %752 = vmatprep.subr.bf16.mxu0 0
    %753 = vmatpush1.bf16.msra.mxu0 0
    %754 = vmatprep.subr.bf16.mxu0 0
    %755 = vmatpush1.bf16.msra.mxu0 0
    %756 = vmatprep.subr.bf16.mxu0 0
    %757 = vmatpush1.bf16.msra.mxu0 0
    %758 = vmatprep.subr.bf16.mxu0 0
    %759 = vmatpush1.bf16.msra.mxu0 0
    %760 = vmatprep.subr.bf16.mxu0 0
    %761 = vmatpush1.bf16.msra.mxu0 0
    %762 = vmatprep.subr.bf16.mxu0 0
    %763 = vmatpush1.bf16.msra.mxu0 0
    %764 = vmatprep.subr.bf16.mxu0 0
    %765 = vmatpush1.bf16.msra.mxu0 0
    %766 = vmatprep.subr.bf16.mxu0 0
    %767 = vmatpush1.bf16.msra.mxu0 %v750
    %768 = vmatprep.subr.bf16.mxu0 0
    %769 = vmatpush2.bf16.msra.mxu0 0
    %770 = vmatprep.subr.bf16.mxu0 0
    %771 = vmatpush2.bf16.msra.mxu0 0
    %772 = vmatprep.subr.bf16.mxu0 0
    %773 = vmatpush2.bf16.msra.mxu0 0
    %774 = vmatprep.subr.bf16.mxu0 0
    %775 = vmatpush2.bf16.msra.mxu0 0
    %776 = vmatprep.subr.bf16.mxu0 0
    %777 = vmatpush2.bf16.msra.mxu0 0
    %778 = vmatprep.subr.bf16.mxu0 0
    %779 = vmatpush2.bf16.msra.mxu0 0
    %780 = vmatprep.subr.bf16.mxu0 0
    %781 = vmatpush2.bf16.msra.mxu0 0
    %782 = vmatprep.subr.bf16.mxu0 0
    %783 = vmatpush2.bf16.msra.mxu0 0
    %784 = vmatprep.mubr.bf16.mxu0 0
    %785 = vmatmul.mubr.bf16.gmra.mxu0 %v747
    %v786 = vpop.f32.mrf.mxu0
    %v787 = vadd.f32 0.0, %v786
    %v788 = vpop.f32.mrf.mxu0
    %v789 = vpop.f32.mrf.mxu0
    %v790 = vpop.f32.mrf.mxu0
    %791 = vdwg.mxu0
    %v792 = vsel %vm574, %v787, -inf
    %793 = vmax.xlane.f32.xlu0 %v792
    %v794 = vpop.xlane.xlu0 %793
    %v795 = vsub.f32 %v787, %v794
    %v796 = vmul.f32 %v795, 1.442695
    %v797 = vpow.pop %v796
    %v798 = vsel %vm574, %v797, 0.0
    %799 = vadd.xlane.f32.xlu0 %v798
    %v800 = vpop.xlane.xlu0 %799
    %v801 = vrcp.pop %v800
    %v802 = vmul.f32 %v797, %v801
    %v803 = vpack.c.bf16 %v802, %v802
    %v805 = vsel %vm574, %v803, 0
    %v808 = vsel %vm574, %v524, 0
    %810 = vmatprep.subr.bf16.mxu0 0
    %811 = vmatpush1.bf16.xpose.msra.mxu0 0
    %812 = vmatprep.subr.bf16.mxu0 0
    %813 = vmatpush1.bf16.xpose.msra.mxu0 0
    %814 = vmatprep.subr.bf16.mxu0 0
    %815 = vmatpush1.bf16.xpose.msra.mxu0 0
    %816 = vmatprep.subr.bf16.mxu0 0
    %817 = vmatpush1.bf16.xpose.msra.mxu0 0
    %818 = vmatprep.subr.bf16.mxu0 0
    %819 = vmatpush1.bf16.xpose.msra.mxu0 0
    %820 = vmatprep.subr.bf16.mxu0 0
    %821 = vmatpush1.bf16.xpose.msra.mxu0 0
    %822 = vmatprep.subr.bf16.mxu0 0
    %823 = vmatpush1.bf16.xpose.msra.mxu0 0
    %824 = vmatprep.subr.bf16.mxu0 0
    %825 = vmatpush1.bf16.xpose.msra.mxu0 %v808
    %826 = vmatprep.subr.bf16.mxu0 0
    %827 = vmatpush2.bf16.xpose.msra.mxu0 0
    %828 = vmatprep.subr.bf16.mxu0 0
    %829 = vmatpush2.bf16.xpose.msra.mxu0 0
    %830 = vmatprep.subr.bf16.mxu0 0
    %831 = vmatpush2.bf16.xpose.msra.mxu0 0
    %832 = vmatprep.subr.bf16.mxu0 0
    %833 = vmatpush2.bf16.xpose.msra.mxu0 0
    %834 = vmatprep.subr.bf16.mxu0 0
    %835 = vmatpush2.bf16.xpose.msra.mxu0 0
    %836 = vmatprep.subr.bf16.mxu0 0
    %837 = vmatpush2.bf16.xpose.msra.mxu0 0
    %838 = vmatprep.subr.bf16.mxu0 0
    %839 = vmatpush2.bf16.xpose.msra.mxu0 0
    %840 = vmatprep.subr.bf16.mxu0 0
    %841 = vmatpush2.bf16.xpose.msra.mxu0 0
    %842 = vmatprep.mubr.bf16.mxu0 0
    %843 = vmatmul.mubr.bf16.gmra.mxu0 %v805
    %v844 = vpop.f32.mrf.mxu0
    %v845 = vadd.f32 0.0, %v844
    %v846 = vpop.f32.mrf.mxu0
    %v847 = vpop.f32.mrf.mxu0
    %v848 = vpop.f32.mrf.mxu0
    %849 = vdwg.mxu0
    %850 = vrot.lane.b32.xlu0 %v525, 104
    %v851 = vpop.permute.xlu0 %850
    %v853 = vrot.slane %v435, 4
    %v855 = vsel %vm526, %v851, 0
    %v858 = vsel %vm530, %v853, 0
    %860 = vmatprep.subr.bf16.mxu0 0
    %861 = vmatpush1.bf16.msra.mxu0 0
    %862 = vmatprep.subr.bf16.mxu0 0
    %863 = vmatpush1.bf16.msra.mxu0 0
    %864 = vmatprep.subr.bf16.mxu0 0
    %865 = vmatpush1.bf16.msra.mxu0 0
    %866 = vmatprep.subr.bf16.mxu0 0
    %867 = vmatpush1.bf16.msra.mxu0 0
    %868 = vmatprep.subr.bf16.mxu0 0
    %869 = vmatpush1.bf16.msra.mxu0 0
    %870 = vmatprep.subr.bf16.mxu0 0
    %871 = vmatpush1.bf16.msra.mxu0 0
    %872 = vmatprep.subr.bf16.mxu0 0
    %873 = vmatpush1.bf16.msra.mxu0 0
    %874 = vmatprep.subr.bf16.mxu0 0
    %875 = vmatpush1.bf16.msra.mxu0 %v858
    %876 = vmatprep.subr.bf16.mxu0 0
    %877 = vmatpush2.bf16.msra.mxu0 0
    %878 = vmatprep.subr.bf16.mxu0 0
    %879 = vmatpush2.bf16.msra.mxu0 0
    %880 = vmatprep.subr.bf16.mxu0 0
    %881 = vmatpush2.bf16.msra.mxu0 0
    %882 = vmatprep.subr.bf16.mxu0 0
    %883 = vmatpush2.bf16.msra.mxu0 0
    %884 = vmatprep.subr.bf16.mxu0 0
    %885 = vmatpush2.bf16.msra.mxu0 0
    %886 = vmatprep.subr.bf16.mxu0 0
    %887 = vmatpush2.bf16.msra.mxu0 0
    %888 = vmatprep.subr.bf16.mxu0 0
    %889 = vmatpush2.bf16.msra.mxu0 0
    %890 = vmatprep.subr.bf16.mxu0 0
    %891 = vmatpush2.bf16.msra.mxu0 0
    %892 = vmatprep.mubr.bf16.mxu0 0
    %893 = vmatmul.mubr.bf16.gmra.mxu0 %v855
    %v894 = vpop.f32.mrf.mxu0
    %v895 = vadd.f32 0.0, %v894
    %v896 = vpop.f32.mrf.mxu0
    %v897 = vpop.f32.mrf.mxu0
    %v898 = vpop.f32.mrf.mxu0
    %899 = vdwg.mxu0
    %v900 = vsel %vm574, %v895, -inf
    %901 = vmax.xlane.f32.xlu0 %v900
    %v902 = vpop.xlane.xlu0 %901
    %v903 = vsub.f32 %v895, %v902
    %v904 = vmul.f32 %v903, 1.442695
    %v905 = vpow.pop %v904
    %v906 = vsel %vm574, %v905, 0.0
    %907 = vadd.xlane.f32.xlu0 %v906
    %v908 = vpop.xlane.xlu0 %907
    %v909 = vrcp.pop %v908
    %v910 = vmul.f32 %v905, %v909
    %v911 = vpack.c.bf16 %v910, %v910
    %v913 = vrot.slane %v524, 4
    %v915 = vsel %vm574, %v911, 0
    %v918 = vsel %vm574, %v913, 0
    %920 = vmatprep.subr.bf16.mxu0 0
    %921 = vmatpush1.bf16.xpose.msra.mxu0 0
    %922 = vmatprep.subr.bf16.mxu0 0
    %923 = vmatpush1.bf16.xpose.msra.mxu0 0
    %924 = vmatprep.subr.bf16.mxu0 0
    %925 = vmatpush1.bf16.xpose.msra.mxu0 0
    %926 = vmatprep.subr.bf16.mxu0 0
    %927 = vmatpush1.bf16.xpose.msra.mxu0 0
    %928 = vmatprep.subr.bf16.mxu0 0
    %929 = vmatpush1.bf16.xpose.msra.mxu0 0
    %930 = vmatprep.subr.bf16.mxu0 0
    %931 = vmatpush1.bf16.xpose.msra.mxu0 0
    %932 = vmatprep.subr.bf16.mxu0 0
    %933 = vmatpush1.bf16.xpose.msra.mxu0 0
    %934 = vmatprep.subr.bf16.mxu0 0
    %935 = vmatpush1.bf16.xpose.msra.mxu0 %v918
    %936 = vmatprep.subr.bf16.mxu0 0
    %937 = vmatpush2.bf16.xpose.msra.mxu0 0
    %938 = vmatprep.subr.bf16.mxu0 0
    %939 = vmatpush2.bf16.xpose.msra.mxu0 0
    %940 = vmatprep.subr.bf16.mxu0 0
    %941 = vmatpush2.bf16.xpose.msra.mxu0 0
    %942 = vmatprep.subr.bf16.mxu0 0
    %943 = vmatpush2.bf16.xpose.msra.mxu0 0
    %944 = vmatprep.subr.bf16.mxu0 0
    %945 = vmatpush2.bf16.xpose.msra.mxu0 0
    %946 = vmatprep.subr.bf16.mxu0 0
    %947 = vmatpush2.bf16.xpose.msra.mxu0 0
    %948 = vmatprep.subr.bf16.mxu0 0
    %949 = vmatpush2.bf16.xpose.msra.mxu0 0
    %950 = vmatprep.subr.bf16.mxu0 0
    %951 = vmatpush2.bf16.xpose.msra.mxu0 0
    %952 = vmatprep.mubr.bf16.mxu0 0
    %953 = vmatmul.mubr.bf16.gmra.mxu0 %v915
    %v954 = vpop.f32.mrf.mxu0
    %v955 = vadd.f32 0.0, %v954
    %v956 = vpop.f32.mrf.mxu0
    %v957 = vpop.f32.mrf.mxu0
    %v958 = vpop.f32.mrf.mxu0
    %959 = vdwg.mxu0
    %961 = vrot.lane.b32.xlu0 %v739, 8
    %v962 = vpop.permute.xlu0 %961
    %965 = vrot.lane.b32.xlu0 %v845, 16
    %v966 = vpop.permute.xlu0 %965
    %969 = vrot.lane.b32.xlu0 %v955, 24
    %v970 = vpop.permute.xlu0 %969
    %v972 = vsel %vm526, %v628, %v962
    %vm973 = vcmask 130048
    %v974 = vsel %vm973, %v972, %v966
    %vm975 = vcmask 195584
    %v976 = vsel %vm975, %v974, %v970
    %s977 = scalar_lea.vmem %s2, 32
    %v978 = vld [vmem:[%s977] sm:$0xff]
    %v979 = vld [vmem:[%s977 + $0x8] sm:$0xff]
    %v980 = vld [vmem:[%s977 + $0x10] sm:$0xff]
    %v981 = vld [vmem:[%s977 + $0x18] sm:$0xff]
    %s982 = scalar_lea.vmem [#allocation2], 32
    %v983 = vld [vmem:[%s982] sm:$0xff]
    %v984 = vld [vmem:[%s982 + $0x8] sm:$0xff]
    %v985 = vld [vmem:[%s982 + $0x10] sm:$0xff]
    %v986 = vld [vmem:[%s982 + $0x18] sm:$0xff]
    %v987 = vadd.f32 %v978, %v983
    %v988 = vadd.f32 %v979, %v984
    %v989 = vadd.f32 %v980, %v985
    %v990 = vadd.f32 %v981, %v986
    %v991 = vpack.c.bf16 %v988, %v987
    %v992 = vpack.c.bf16 %v990, %v989
    %993 = vmatprep.subr.bf16.mxu0 0
    %994 = vmatpush1.bf16.msra.mxu0 0
    %995 = vmatprep.subr.bf16.mxu0 0
    %996 = vmatpush1.bf16.msra.mxu0 0
    %997 = vmatprep.subr.bf16.mxu0 0
    %998 = vmatpush1.bf16.msra.mxu0 0
    %999 = vmatprep.subr.bf16.mxu0 0
    %1000 = vmatpush1.bf16.msra.mxu0 0
    %1001 = vmatprep.subr.bf16.mxu0 0
    %1002 = vmatpush1.bf16.msra.mxu0 0
    %1003 = vmatprep.subr.bf16.mxu0 0
    %1004 = vmatpush1.bf16.msra.mxu0 0
    %1005 = vmatprep.subr.bf16.mxu0 0
    %1006 = vmatpush1.bf16.msra.mxu0 %v992
    %1007 = vmatprep.subr.bf16.mxu0 0
    %1008 = vmatpush1.bf16.msra.mxu0 %v991
    %1009 = vmatprep.subr.bf16.mxu0 0
    %1010 = vmatpush2.bf16.msra.mxu0 0
    %1011 = vmatprep.subr.bf16.mxu0 0
    %1012 = vmatpush2.bf16.msra.mxu0 0
    %1013 = vmatprep.subr.bf16.mxu0 0
    %1014 = vmatpush2.bf16.msra.mxu0 0
    %1015 = vmatprep.subr.bf16.mxu0 0
    %1016 = vmatpush2.bf16.msra.mxu0 0
    %1017 = vmatprep.subr.bf16.mxu0 0
    %1018 = vmatpush2.bf16.msra.mxu0 0
    %1019 = vmatprep.subr.bf16.mxu0 0
    %1020 = vmatpush2.bf16.msra.mxu0 0
    %1021 = vmatprep.subr.bf16.mxu0 0
    %1022 = vmatpush2.bf16.msra.mxu0 0
    %1023 = vmatprep.subr.bf16.mxu0 0
    %1024 = vmatpush2.bf16.msra.mxu0 0
    %1025 = vmatprep.mubr.bf16.mxu0 0
    %1026 = vmatmul.mubr.bf16.gmra.mxu0 %v380
    %v1027 = vpop.f32.mrf.mxu0
    %v1028 = vadd.f32 %v352, %v1027
    %v1029 = vpop.f32.mrf.mxu0
    %v1030 = vpop.f32.mrf.mxu0
    %v1031 = vadd.f32 %v357, %v1030
    %v1032 = vpop.f32.mrf.mxu0
    %1033 = vmatprep.mubr.bf16.mxu0 0
    %1034 = vmatmul.mubr.bf16.gmra.mxu0 %v383
    %v1035 = vpop.f32.mrf.mxu0
    %v1036 = vadd.f32 %v362, %v1035
    %v1037 = vpop.f32.mrf.mxu0
    %v1038 = vpop.f32.mrf.mxu0
    %v1039 = vadd.f32 %v367, %v1038
    %v1040 = vpop.f32.mrf.mxu0
    %1041 = vdwg.mxu0
    %v1042 = vpack.c.bf16 %v1031, %v1028
    %v1043 = vpack.c.bf16 %v1039, %v1036
    %v1044 = vpack.c.bf16 %v979, %v978
    %v1045 = vpack.c.bf16 %v981, %v980
    %1046 = vmatprep.subr.bf16.mxu0 0
    %1047 = vmatpush1.bf16.msra.mxu0 0
    %1048 = vmatprep.subr.bf16.mxu0 0
    %1049 = vmatpush1.bf16.msra.mxu0 0
    %1050 = vmatprep.subr.bf16.mxu0 0
    %1051 = vmatpush1.bf16.msra.mxu0 0
    %1052 = vmatprep.subr.bf16.mxu0 0
    %1053 = vmatpush1.bf16.msra.mxu0 0
    %1054 = vmatprep.subr.bf16.mxu0 0
    %1055 = vmatpush1.bf16.msra.mxu0 0
    %1056 = vmatprep.subr.bf16.mxu0 0
    %1057 = vmatpush1.bf16.msra.mxu0 0
    %1058 = vmatprep.subr.bf16.mxu0 0
    %1059 = vmatpush1.bf16.msra.mxu0 %v1045
    %1060 = vmatprep.subr.bf16.mxu0 0
    %1061 = vmatpush1.bf16.msra.mxu0 %v1044
    %1062 = vmatprep.subr.bf16.mxu0 0
    %1063 = vmatpush2.bf16.msra.mxu0 0
    %1064 = vmatprep.subr.bf16.mxu0 0
    %1065 = vmatpush2.bf16.msra.mxu0 0
    %1066 = vmatprep.subr.bf16.mxu0 0
    %1067 = vmatpush2.bf16.msra.mxu0 0
    %1068 = vmatprep.subr.bf16.mxu0 0
    %1069 = vmatpush2.bf16.msra.mxu0 0
    %1070 = vmatprep.subr.bf16.mxu0 0
    %1071 = vmatpush2.bf16.msra.mxu0 0
    %1072 = vmatprep.subr.bf16.mxu0 0
    %1073 = vmatpush2.bf16.msra.mxu0 0
    %1074 = vmatprep.subr.bf16.mxu0 0
    %1075 = vmatpush2.bf16.msra.mxu0 0
    %1076 = vmatprep.subr.bf16.mxu0 0
    %1077 = vmatpush2.bf16.msra.mxu0 0
    %1078 = vmatprep.mubr.bf16.mxu0 0
    %1079 = vmatmul.mubr.bf16.gmra.mxu0 %v469
    %v1080 = vpop.f32.mrf.mxu0
    %v1081 = vadd.f32 %v441, %v1080
    %v1082 = vpop.f32.mrf.mxu0
    %v1083 = vpop.f32.mrf.mxu0
    %v1084 = vadd.f32 %v446, %v1083
    %v1085 = vpop.f32.mrf.mxu0
    %1086 = vmatprep.mubr.bf16.mxu0 0
    %1087 = vmatmul.mubr.bf16.gmra.mxu0 %v472
    %v1088 = vpop.f32.mrf.mxu0
    %v1089 = vadd.f32 %v451, %v1088
    %v1090 = vpop.f32.mrf.mxu0
    %v1091 = vpop.f32.mrf.mxu0
    %v1092 = vadd.f32 %v456, %v1091
    %v1093 = vpop.f32.mrf.mxu0
    %1094 = vdwg.mxu0
    %v1095 = vpack.c.bf16 %v1084, %v1081
    %v1096 = vpack.c.bf16 %v1092, %v1089
    %v1097 = vpack.c.bf16 %v332, %v332
    %v1099 = vsel %vm526, %v1097, 0
    %v1102 = vsel %vm530, %v1042, 0
    %1104 = vmatprep.subr.bf16.mxu0 0
    %1105 = vmatpush1.bf16.msra.mxu0 0
    %1106 = vmatprep.subr.bf16.mxu0 0
    %1107 = vmatpush1.bf16.msra.mxu0 0
    %1108 = vmatprep.subr.bf16.mxu0 0
    %1109 = vmatpush1.bf16.msra.mxu0 0
    %1110 = vmatprep.subr.bf16.mxu0 0
    %1111 = vmatpush1.bf16.msra.mxu0 0
    %1112 = vmatprep.subr.bf16.mxu0 0
    %1113 = vmatpush1.bf16.msra.mxu0 0
    %1114 = vmatprep.subr.bf16.mxu0 0
    %1115 = vmatpush1.bf16.msra.mxu0 0
    %1116 = vmatprep.subr.bf16.mxu0 0
    %1117 = vmatpush1.bf16.msra.mxu0 0
    %1118 = vmatprep.subr.bf16.mxu0 0
    %1119 = vmatpush1.bf16.msra.mxu0 %v1102
    %1120 = vmatprep.subr.bf16.mxu0 0
    %1121 = vmatpush2.bf16.msra.mxu0 0
    %1122 = vmatprep.subr.bf16.mxu0 0
    %1123 = vmatpush2.bf16.msra.mxu0 0
    %1124 = vmatprep.subr.bf16.mxu0 0
    %1125 = vmatpush2.bf16.msra.mxu0 0
    %1126 = vmatprep.subr.bf16.mxu0 0
    %1127 = vmatpush2.bf16.msra.mxu0 0
    %1128 = vmatprep.subr.bf16.mxu0 0
    %1129 = vmatpush2.bf16.msra.mxu0 0
    %1130 = vmatprep.subr.bf16.mxu0 0
    %1131 = vmatpush2.bf16.msra.mxu0 0
    %1132 = vmatprep.subr.bf16.mxu0 0
    %1133 = vmatpush2.bf16.msra.mxu0 0
    %1134 = vmatprep.subr.bf16.mxu0 0
    %1135 = vmatpush2.bf16.msra.mxu0 0
    %1136 = vmatprep.mubr.bf16.mxu0 0
    %1137 = vmatmul.mubr.bf16.gmra.mxu0 %v1099
    %v1138 = vpop.f32.mrf.mxu0
    %v1139 = vadd.f32 0.0, %v1138
    %v1140 = vpop.f32.mrf.mxu0
    %v1141 = vpop.f32.mrf.mxu0
    %v1142 = vpop.f32.mrf.mxu0
    %1143 = vdwg.mxu0
    %v1144 = vsel %vm574, %v1139, -inf
    %1145 = vmax.xlane.f32.xlu0 %v1144
    %v1146 = vpop.xlane.xlu0 %1145
    %v1147 = vsub.f32 %v1139, %v1146
    %v1148 = vmul.f32 %v1147, 1.442695
    %v1149 = vpow.pop %v1148
    %v1150 = vsel %vm574, %v1149, 0.0
    %1151 = vadd.xlane.f32.xlu0 %v1150
    %v1152 = vpop.xlane.xlu0 %1151
    %v1153 = vrcp.pop %v1152
    %v1154 = vmul.f32 %v1149, %v1153
    %v1155 = vpack.c.bf16 %v1154, %v1154
    %v1157 = vsel %vm574, %v1155, 0
    %v1160 = vsel %vm574, %v1095, 0
    %1162 = vmatprep.subr.bf16.mxu0 0
    %1163 = vmatpush1.bf16.xpose.msra.mxu0 0
    %1164 = vmatprep.subr.bf16.mxu0 0
    %1165 = vmatpush1.bf16.xpose.msra.mxu0 0
    %1166 = vmatprep.subr.bf16.mxu0 0
    %1167 = vmatpush1.bf16.xpose.msra.mxu0 0
    %1168 = vmatprep.subr.bf16.mxu0 0
    %1169 = vmatpush1.bf16.xpose.msra.mxu0 0
    %1170 = vmatprep.subr.bf16.mxu0 0
    %1171 = vmatpush1.bf16.xpose.msra.mxu0 0
    %1172 = vmatprep.subr.bf16.mxu0 0
    %1173 = vmatpush1.bf16.xpose.msra.mxu0 0
    %1174 = vmatprep.subr.bf16.mxu0 0
    %1175 = vmatpush1.bf16.xpose.msra.mxu0 0
    %1176 = vmatprep.subr.bf16.mxu0 0
    %1177 = vmatpush1.bf16.xpose.msra.mxu0 %v1160
    %1178 = vmatprep.subr.bf16.mxu0 0
    %1179 = vmatpush2.bf16.xpose.msra.mxu0 0
    %1180 = vmatprep.subr.bf16.mxu0 0
    %1181 = vmatpush2.bf16.xpose.msra.mxu0 0
    %1182 = vmatprep.subr.bf16.mxu0 0
    %1183 = vmatpush2.bf16.xpose.msra.mxu0 0
    %1184 = vmatprep.subr.bf16.mxu0 0
    %1185 = vmatpush2.bf16.xpose.msra.mxu0 0
    %1186 = vmatprep.subr.bf16.mxu0 0
    %1187 = vmatpush2.bf16.xpose.msra.mxu0 0
    %1188 = vmatprep.subr.bf16.mxu0 0
    %1189 = vmatpush2.bf16.xpose.msra.mxu0 0
    %1190 = vmatprep.subr.bf16.mxu0 0
    %1191 = vmatpush2.bf16.xpose.msra.mxu0 0
    %1192 = vmatprep.subr.bf16.mxu0 0
    %1193 = vmatpush2.bf16.xpose.msra.mxu0 0
    %1194 = vmatprep.mubr.bf16.mxu0 0
    %1195 = vmatmul.mubr.bf16.gmra.mxu0 %v1157
    %v1196 = vpop.f32.mrf.mxu0
    %v1197 = vadd.f32 0.0, %v1196
    %v1198 = vpop.f32.mrf.mxu0
    %v1199 = vpop.f32.mrf.mxu0
    %v1200 = vpop.f32.mrf.mxu0
    %1201 = vdwg.mxu0
    %1203 = vrot.lane.b32.xlu0 %v1097, 120
    %v1204 = vpop.permute.xlu0 %1203
    %v1206 = vrot.slane %v1042, 4
    %v1208 = vsel %vm526, %v1204, 0
    %v1211 = vsel %vm530, %v1206, 0
    %1213 = vmatprep.subr.bf16.mxu0 0
    %1214 = vmatpush1.bf16.msra.mxu0 0
    %1215 = vmatprep.subr.bf16.mxu0 0
    %1216 = vmatpush1.bf16.msra.mxu0 0
    %1217 = vmatprep.subr.bf16.mxu0 0
    %1218 = vmatpush1.bf16.msra.mxu0 0
    %1219 = vmatprep.subr.bf16.mxu0 0
    %1220 = vmatpush1.bf16.msra.mxu0 0
    %1221 = vmatprep.subr.bf16.mxu0 0
    %1222 = vmatpush1.bf16.msra.mxu0 0
    %1223 = vmatprep.subr.bf16.mxu0 0
    %1224 = vmatpush1.bf16.msra.mxu0 0
    %1225 = vmatprep.subr.bf16.mxu0 0
    %1226 = vmatpush1.bf16.msra.mxu0 0
    %1227 = vmatprep.subr.bf16.mxu0 0
    %1228 = vmatpush1.bf16.msra.mxu0 %v1211
    %1229 = vmatprep.subr.bf16.mxu0 0
    %1230 = vmatpush2.bf16.msra.mxu0 0
    %1231 = vmatprep.subr.bf16.mxu0 0
    %1232 = vmatpush2.bf16.msra.mxu0 0
    %1233 = vmatprep.subr.bf16.mxu0 0
    %1234 = vmatpush2.bf16.msra.mxu0 0
    %1235 = vmatprep.subr.bf16.mxu0 0
    %1236 = vmatpush2.bf16.msra.mxu0 0
    %1237 = vmatprep.subr.bf16.mxu0 0
    %1238 = vmatpush2.bf16.msra.mxu0 0
    %1239 = vmatprep.subr.bf16.mxu0 0
    %1240 = vmatpush2.bf16.msra.mxu0 0
    %1241 = vmatprep.subr.bf16.mxu0 0
    %1242 = vmatpush2.bf16.msra.mxu0 0
    %1243 = vmatprep.subr.bf16.mxu0 0
    %1244 = vmatpush2.bf16.msra.mxu0 0
    %1245 = vmatprep.mubr.bf16.mxu0 0
    %1246 = vmatmul.mubr.bf16.gmra.mxu0 %v1208
    %v1247 = vpop.f32.mrf.mxu0
    %v1248 = vadd.f32 0.0, %v1247
    %v1249 = vpop.f32.mrf.mxu0
    %v1250 = vpop.f32.mrf.mxu0
    %v1251 = vpop.f32.mrf.mxu0
    %1252 = vdwg.mxu0
    %v1253 = vsel %vm574, %v1248, -inf
    %1254 = vmax.xlane.f32.xlu0 %v1253
    %v1255 = vpop.xlane.xlu0 %1254
    %v1256 = vsub.f32 %v1248, %v1255
    %v1257 = vmul.f32 %v1256, 1.442695
    %v1258 = vpow.pop %v1257
    %v1259 = vsel %vm574, %v1258, 0.0
    %1260 = vadd.xlane.f32.xlu0 %v1259
    %v1261 = vpop.xlane.xlu0 %1260
    %v1262 = vrcp.pop %v1261
    %v1263 = vmul.f32 %v1258, %v1262
    %v1264 = vpack.c.bf16 %v1263, %v1263
    %v1266 = vrot.slane %v1095, 4
    %v1268 = vsel %vm574, %v1264, 0
    %v1271 = vsel %vm574, %v1266, 0
    %1273 = vmatprep.subr.bf16.mxu0 0
    %1274 = vmatpush1.bf16.xpose.msra.mxu0 0
    %1275 = vmatprep.subr.bf16.mxu0 0
    %1276 = vmatpush1.bf16.xpose.msra.mxu0 0
    %1277 = vmatprep.subr.bf16.mxu0 0
    %1278 = vmatpush1.bf16.xpose.msra.mxu0 0
    %1279 = vmatprep.subr.bf16.mxu0 0
    %1280 = vmatpush1.bf16.xpose.msra.mxu0 0
    %1281 = vmatprep.subr.bf16.mxu0 0
    %1282 = vmatpush1.bf16.xpose.msra.mxu0 0
    %1283 = vmatprep.subr.bf16.mxu0 0
    %1284 = vmatpush1.bf16.xpose.msra.mxu0 0
    %1285 = vmatprep.subr.bf16.mxu0 0
    %1286 = vmatpush1.bf16.xpose.msra.mxu0 0
    %1287 = vmatprep.subr.bf16.mxu0 0
    %1288 = vmatpush1.bf16.xpose.msra.mxu0 %v1271
    %1289 = vmatprep.subr.bf16.mxu0 0
    %1290 = vmatpush2.bf16.xpose.msra.mxu0 0
    %1291 = vmatprep.subr.bf16.mxu0 0
    %1292 = vmatpush2.bf16.xpose.msra.mxu0 0
    %1293 = vmatprep.subr.bf16.mxu0 0
    %1294 = vmatpush2.bf16.xpose.msra.mxu0 0
    %1295 = vmatprep.subr.bf16.mxu0 0
    %1296 = vmatpush2.bf16.xpose.msra.mxu0 0
    %1297 = vmatprep.subr.bf16.mxu0 0
    %1298 = vmatpush2.bf16.xpose.msra.mxu0 0
    %1299 = vmatprep.subr.bf16.mxu0 0
    %1300 = vmatpush2.bf16.xpose.msra.mxu0 0
    %1301 = vmatprep.subr.bf16.mxu0 0
    %1302 = vmatpush2.bf16.xpose.msra.mxu0 0
    %1303 = vmatprep.subr.bf16.mxu0 0
    %1304 = vmatpush2.bf16.xpose.msra.mxu0 0
    %1305 = vmatprep.mubr.bf16.mxu0 0
    %1306 = vmatmul.mubr.bf16.gmra.mxu0 %v1268
    %v1307 = vpop.f32.mrf.mxu0
    %v1308 = vadd.f32 0.0, %v1307
    %v1309 = vpop.f32.mrf.mxu0
    %v1310 = vpop.f32.mrf.mxu0
    %v1311 = vpop.f32.mrf.mxu0
    %1312 = vdwg.mxu0
    %1313 = vrot.lane.b32.xlu0 %v1097, 112
    %v1314 = vpop.permute.xlu0 %1313
    %v1316 = vsel %vm526, %v1314, 0
    %v1319 = vsel %vm530, %v1043, 0
    %1321 = vmatprep.subr.bf16.mxu0 0
    %1322 = vmatpush1.bf16.msra.mxu0 0
    %1323 = vmatprep.subr.bf16.mxu0 0
    %1324 = vmatpush1.bf16.msra.mxu0 0
    %1325 = vmatprep.subr.bf16.mxu0 0
    %1326 = vmatpush1.bf16.msra.mxu0 0
    %1327 = vmatprep.subr.bf16.mxu0 0
    %1328 = vmatpush1.bf16.msra.mxu0 0
    %1329 = vmatprep.subr.bf16.mxu0 0
    %1330 = vmatpush1.bf16.msra.mxu0 0
    %1331 = vmatprep.subr.bf16.mxu0 0
    %1332 = vmatpush1.bf16.msra.mxu0 0
    %1333 = vmatprep.subr.bf16.mxu0 0
    %1334 = vmatpush1.bf16.msra.mxu0 0
    %1335 = vmatprep.subr.bf16.mxu0 0
    %1336 = vmatpush1.bf16.msra.mxu0 %v1319
    %1337 = vmatprep.subr.bf16.mxu0 0
    %1338 = vmatpush2.bf16.msra.mxu0 0
    %1339 = vmatprep.subr.bf16.mxu0 0
    %1340 = vmatpush2.bf16.msra.mxu0 0
    %1341 = vmatprep.subr.bf16.mxu0 0
    %1342 = vmatpush2.bf16.msra.mxu0 0
    %1343 = vmatprep.subr.bf16.mxu0 0
    %1344 = vmatpush2.bf16.msra.mxu0 0
    %1345 = vmatprep.subr.bf16.mxu0 0
    %1346 = vmatpush2.bf16.msra.mxu0 0
    %1347 = vmatprep.subr.bf16.mxu0 0
    %1348 = vmatpush2.bf16.msra.mxu0 0
    %1349 = vmatprep.subr.bf16.mxu0 0
    %1350 = vmatpush2.bf16.msra.mxu0 0
    %1351 = vmatprep.subr.bf16.mxu0 0
    %1352 = vmatpush2.bf16.msra.mxu0 0
    %1353 = vmatprep.mubr.bf16.mxu0 0
    %1354 = vmatmul.mubr.bf16.gmra.mxu0 %v1316
    %v1355 = vpop.f32.mrf.mxu0
    %v1356 = vadd.f32 0.0, %v1355
    %v1357 = vpop.f32.mrf.mxu0
    %v1358 = vpop.f32.mrf.mxu0
    %v1359 = vpop.f32.mrf.mxu0
    %1360 = vdwg.mxu0
    %v1361 = vsel %vm574, %v1356, -inf
    %1362 = vmax.xlane.f32.xlu0 %v1361
    %v1363 = vpop.xlane.xlu0 %1362
    %v1364 = vsub.f32 %v1356, %v1363
    %v1365 = vmul.f32 %v1364, 1.442695
    %v1366 = vpow.pop %v1365
    %v1367 = vsel %vm574, %v1366, 0.0
    %1368 = vadd.xlane.f32.xlu0 %v1367
    %v1369 = vpop.xlane.xlu0 %1368
    %v1370 = vrcp.pop %v1369
    %v1371 = vmul.f32 %v1366, %v1370
    %v1372 = vpack.c.bf16 %v1371, %v1371
    %v1374 = vsel %vm574, %v1372, 0
    %v1377 = vsel %vm574, %v1096, 0
    %1379 = vmatprep.subr.bf16.mxu0 0
    %1380 = vmatpush1.bf16.xpose.msra.mxu0 0
    %1381 = vmatprep.subr.bf16.mxu0 0
    %1382 = vmatpush1.bf16.xpose.msra.mxu0 0
    %1383 = vmatprep.subr.bf16.mxu0 0
    %1384 = vmatpush1.bf16.xpose.msra.mxu0 0
    %1385 = vmatprep.subr.bf16.mxu0 0
    %1386 = vmatpush1.bf16.xpose.msra.mxu0 0
    %1387 = vmatprep.subr.bf16.mxu0 0
    %1388 = vmatpush1.bf16.xpose.msra.mxu0 0
    %1389 = vmatprep.subr.bf16.mxu0 0
    %1390 = vmatpush1.bf16.xpose.msra.mxu0 0
    %1391 = vmatprep.subr.bf16.mxu0 0
    %1392 = vmatpush1.bf16.xpose.msra.mxu0 0
    %1393 = vmatprep.subr.bf16.mxu0 0
    %1394 = vmatpush1.bf16.xpose.msra.mxu0 %v1377
    %1395 = vmatprep.subr.bf16.mxu0 0
    %1396 = vmatpush2.bf16.xpose.msra.mxu0 0
    %1397 = vmatprep.subr.bf16.mxu0 0
    %1398 = vmatpush2.bf16.xpose.msra.mxu0 0
    %1399 = vmatprep.subr.bf16.mxu0 0
    %1400 = vmatpush2.bf16.xpose.msra.mxu0 0
    %1401 = vmatprep.subr.bf16.mxu0 0
    %1402 = vmatpush2.bf16.xpose.msra.mxu0 0
    %1403 = vmatprep.subr.bf16.mxu0 0
    %1404 = vmatpush2.bf16.xpose.msra.mxu0 0
    %1405 = vmatprep.subr.bf16.mxu0 0
    %1406 = vmatpush2.bf16.xpose.msra.mxu0 0
    %1407 = vmatprep.subr.bf16.mxu0 0
    %1408 = vmatpush2.bf16.xpose.msra.mxu0 0
    %1409 = vmatprep.subr.bf16.mxu0 0
    %1410 = vmatpush2.bf16.xpose.msra.mxu0 0
    %1411 = vmatprep.mubr.bf16.mxu0 0
    %1412 = vmatmul.mubr.bf16.gmra.mxu0 %v1374
    %v1413 = vpop.f32.mrf.mxu0
    %v1414 = vadd.f32 0.0, %v1413
    %v1415 = vpop.f32.mrf.mxu0
    %v1416 = vpop.f32.mrf.mxu0
    %v1417 = vpop.f32.mrf.mxu0
    %1418 = vdwg.mxu0
    %1419 = vrot.lane.b32.xlu0 %v1097, 104
    %v1420 = vpop.permute.xlu0 %1419
    %v1422 = vrot.slane %v1043, 4
    %v1424 = vsel %vm526, %v1420, 0
    %v1427 = vsel %vm530, %v1422, 0
    %1429 = vmatprep.subr.bf16.mxu0 0
    %1430 = vmatpush1.bf16.msra.mxu0 0
    %1431 = vmatprep.subr.bf16.mxu0 0
    %1432 = vmatpush1.bf16.msra.mxu0 0
    %1433 = vmatprep.subr.bf16.mxu0 0
    %1434 = vmatpush1.bf16.msra.mxu0 0
    %1435 = vmatprep.subr.bf16.mxu0 0
    %1436 = vmatpush1.bf16.msra.mxu0 0
    %1437 = vmatprep.subr.bf16.mxu0 0
    %1438 = vmatpush1.bf16.msra.mxu0 0
    %1439 = vmatprep.subr.bf16.mxu0 0
    %1440 = vmatpush1.bf16.msra.mxu0 0
    %1441 = vmatprep.subr.bf16.mxu0 0
    %1442 = vmatpush1.bf16.msra.mxu0 0
    %1443 = vmatprep.subr.bf16.mxu0 0
    %1444 = vmatpush1.bf16.msra.mxu0 %v1427
    %1445 = vmatprep.subr.bf16.mxu0 0
    %1446 = vmatpush2.bf16.msra.mxu0 0
    %1447 = vmatprep.subr.bf16.mxu0 0
    %1448 = vmatpush2.bf16.msra.mxu0 0
    %1449 = vmatprep.subr.bf16.mxu0 0
    %1450 = vmatpush2.bf16.msra.mxu0 0
    %1451 = vmatprep.subr.bf16.mxu0 0
    %1452 = vmatpush2.bf16.msra.mxu0 0
    %1453 = vmatprep.subr.bf16.mxu0 0
    %1454 = vmatpush2.bf16.msra.mxu0 0
    %1455 = vmatprep.subr.bf16.mxu0 0
    %1456 = vmatpush2.bf16.msra.mxu0 0
    %1457 = vmatprep.subr.bf16.mxu0 0
    %1458 = vmatpush2.bf16.msra.mxu0 0
    %1459 = vmatprep.subr.bf16.mxu0 0
    %1460 = vmatpush2.bf16.msra.mxu0 0
    %1461 = vmatprep.mubr.bf16.mxu0 0
    %1462 = vmatmul.mubr.bf16.gmra.mxu0 %v1424
    %v1463 = vpop.f32.mrf.mxu0
    %v1464 = vadd.f32 0.0, %v1463
    %v1465 = vpop.f32.mrf.mxu0
    %v1466 = vpop.f32.mrf.mxu0
    %v1467 = vpop.f32.mrf.mxu0
    %1468 = vdwg.mxu0
    %v1469 = vsel %vm574, %v1464, -inf
    %1470 = vmax.xlane.f32.xlu0 %v1469
    %v1471 = vpop.xlane.xlu0 %1470
    %v1472 = vsub.f32 %v1464, %v1471
    %v1473 = vmul.f32 %v1472, 1.442695
    %v1474 = vpow.pop %v1473
    %v1475 = vsel %vm574, %v1474, 0.0
    %1476 = vadd.xlane.f32.xlu0 %v1475
    %v1477 = vpop.xlane.xlu0 %1476
    %v1478 = vrcp.pop %v1477
    %v1479 = vmul.f32 %v1474, %v1478
    %v1480 = vpack.c.bf16 %v1479, %v1479
    %v1482 = vrot.slane %v1096, 4
    %v1484 = vsel %vm574, %v1480, 0
    %v1487 = vsel %vm574, %v1482, 0
    %1489 = vmatprep.subr.bf16.mxu0 0
    %1490 = vmatpush1.bf16.xpose.msra.mxu0 0
    %1491 = vmatprep.subr.bf16.mxu0 0
    %1492 = vmatpush1.bf16.xpose.msra.mxu0 0
    %1493 = vmatprep.subr.bf16.mxu0 0
    %1494 = vmatpush1.bf16.xpose.msra.mxu0 0
    %1495 = vmatprep.subr.bf16.mxu0 0
    %1496 = vmatpush1.bf16.xpose.msra.mxu0 0
    %1497 = vmatprep.subr.bf16.mxu0 0
    %1498 = vmatpush1.bf16.xpose.msra.mxu0 0
    %1499 = vmatprep.subr.bf16.mxu0 0
    %1500 = vmatpush1.bf16.xpose.msra.mxu0 0
    %1501 = vmatprep.subr.bf16.mxu0 0
    %1502 = vmatpush1.bf16.xpose.msra.mxu0 0
    %1503 = vmatprep.subr.bf16.mxu0 0
    %1504 = vmatpush1.bf16.xpose.msra.mxu0 %v1487
    %1505 = vmatprep.subr.bf16.mxu0 0
    %1506 = vmatpush2.bf16.xpose.msra.mxu0 0
    %1507 = vmatprep.subr.bf16.mxu0 0
    %1508 = vmatpush2.bf16.xpose.msra.mxu0 0
    %1509 = vmatprep.subr.bf16.mxu0 0
    %1510 = vmatpush2.bf16.xpose.msra.mxu0 0
    %1511 = vmatprep.subr.bf16.mxu0 0
    %1512 = vmatpush2.bf16.xpose.msra.mxu0 0
    %1513 = vmatprep.subr.bf16.mxu0 0
    %1514 = vmatpush2.bf16.xpose.msra.mxu0 0
    %1515 = vmatprep.subr.bf16.mxu0 0
    %1516 = vmatpush2.bf16.xpose.msra.mxu0 0
    %1517 = vmatprep.subr.bf16.mxu0 0
    %1518 = vmatpush2.bf16.xpose.msra.mxu0 0
    %1519 = vmatprep.subr.bf16.mxu0 0
    %1520 = vmatpush2.bf16.xpose.msra.mxu0 0
    %1521 = vmatprep.mubr.bf16.mxu0 0
    %1522 = vmatmul.mubr.bf16.gmra.mxu0 %v1484
    %v1523 = vpop.f32.mrf.mxu0
    %v1524 = vadd.f32 0.0, %v1523
    %v1525 = vpop.f32.mrf.mxu0
    %v1526 = vpop.f32.mrf.mxu0
    %v1527 = vpop.f32.mrf.mxu0
    %1528 = vdwg.mxu0
    %1530 = vrot.lane.b32.xlu0 %v1308, 8
    %v1531 = vpop.permute.xlu0 %1530
    %1534 = vrot.lane.b32.xlu0 %v1414, 16
    %v1535 = vpop.permute.xlu0 %1534
    %1538 = vrot.lane.b32.xlu0 %v1524, 24
    %v1539 = vpop.permute.xlu0 %1538
    %v1541 = vsel %vm526, %v1197, %v1531
    %v1542 = vsel %vm973, %v1541, %v1535
    %v1543 = vsel %vm975, %v1542, %v1539
    %v1544 = vpack.c.bf16 %v1543, %v976
    %v1545 = vld [vmem:[#allocation10] sm:$0xf]
    %v1546 = vld [vmem:[#allocation10 + $0x4] sm:$0xf]
    %v1547 = vld [vmem:[#allocation10 + $0x8] sm:$0xf]
    %v1548 = vld [vmem:[#allocation10 + $0xc] sm:$0xf]
    %v1549 = vld [vmem:[%s11] sm:$0x1]
    %v1551 = vlaneseq
    %v1552 = vshrl.u32 %v1551, 7
    %v1553 = vsub.s32 0, %v1552
    %v1554 = vrot.slane %v1549, %v1553
    %v1560 = vunpack.c.l.b16 %v1545
    %v1561 = vunpack.c.l.b16 %v1546
    %v1562 = vunpack.c.l.b16 %v1547
    %v1563 = vunpack.c.l.b16 %v1548
    %v1564 = vpack.c.b16 %v1561, %v1560
    %v1565 = vpack.c.b16 %v1563, %v1562
    %v1569 = vsel %vm290, %v1544, 0
    %1571 = vmatprep.subr.bf16.mxu0 0
    %1572 = vmatpush1.bf16.msra.mxu0 0
    %1573 = vmatprep.subr.bf16.mxu0 0
    %1574 = vmatpush1.bf16.msra.mxu0 0
    %1575 = vmatprep.subr.bf16.mxu0 0
    %1576 = vmatpush1.bf16.msra.mxu0 0
    %1577 = vmatprep.subr.bf16.mxu0 0
    %1578 = vmatpush1.bf16.msra.mxu0 0
    %1579 = vmatprep.subr.bf16.mxu0 0
    %1580 = vmatpush1.bf16.msra.mxu0 0
    %1581 = vmatprep.subr.bf16.mxu0 0
    %1582 = vmatpush1.bf16.msra.mxu0 0
    %1583 = vmatprep.subr.bf16.mxu0 0
    %1584 = vmatpush1.bf16.msra.mxu0 %v1565
    %1585 = vmatprep.subr.bf16.mxu0 0
    %1586 = vmatpush1.bf16.msra.mxu0 %v1564
    %1587 = vmatprep.subr.bf16.mxu0 0
    %1588 = vmatpush2.bf16.msra.mxu0 0
    %1589 = vmatprep.subr.bf16.mxu0 0
    %1590 = vmatpush2.bf16.msra.mxu0 0
    %1591 = vmatprep.subr.bf16.mxu0 0
    %1592 = vmatpush2.bf16.msra.mxu0 0
    %1593 = vmatprep.subr.bf16.mxu0 0
    %1594 = vmatpush2.bf16.msra.mxu0 0
    %1595 = vmatprep.subr.bf16.mxu0 0
    %1596 = vmatpush2.bf16.msra.mxu0 0
    %1597 = vmatprep.subr.bf16.mxu0 0
    %1598 = vmatpush2.bf16.msra.mxu0 0
    %1599 = vmatprep.subr.bf16.mxu0 0
    %1600 = vmatpush2.bf16.msra.mxu0 0
    %1601 = vmatprep.subr.bf16.mxu0 0
    %1602 = vmatpush2.bf16.msra.mxu0 0
    %1603 = vmatprep.mubr.bf16.mxu0 0
    %1604 = vmatmul.mubr.bf16.gmra.mxu0 %v1569
    %v1605 = vpop.f32.mrf.mxu0
    %v1606 = vadd.f32 %v1554, %v1605
    %v1607 = vpop.f32.mrf.mxu0
    %v1608 = vpop.f32.mrf.mxu0
    %v1609 = vadd.f32 %v1554, %v1608
    %v1610 = vpop.f32.mrf.mxu0
    %1611 = vdwg.mxu0
    %v1612 = vld [vmem:[#allocation11] sm:$0x1]
    %v1613 = vld [vmem:[#allocation13] sm:$0x1]
    %v1614 = vadd.f32 %v244, %v1606
    %v1615 = vadd.f32 %v245, %v1609
    %v1616 = vsel %vm290, %v1614, 0.0
    %1617 = vadd.xlane.f32.xlu0 %v1616
    %v1618 = vpop.xlane.xlu0 %1617
    %v1619 = vsel %vm290, %v1615, 0.0
    %1620 = vadd.xlane.f32.xlu0 %v1619
    %v1621 = vpop.xlane.xlu0 %1620
    %v1622 = vrcp.pop 32.0
    %v1623 = vmul.f32 %v1618, %v1622
    %v1624 = vmul.f32 %v1621, %v1622
    %v1625 = vsub.f32 %v1614, %v1623
    %v1626 = vsub.f32 %v1615, %v1624
    %v1627 = vmul.f32 %v1625, %v1625
    %v1628 = vmul.f32 %v1626, %v1626
    %v1629 = vsel %vm290, %v1627, 0.0
    %1630 = vadd.xlane.f32.xlu0 %v1629
    %v1631 = vpop.xlane.xlu0 %1630
    %v1632 = vsel %vm290, %v1628, 0.0
    %1633 = vadd.xlane.f32.xlu0 %v1632
    %v1634 = vpop.xlane.xlu0 %1633
    %v1635 = vmul.f32 %v1631, %v1622
    %v1636 = vmul.f32 %v1634, %v1622
    %v1637 = vadd.f32 %v1635, 1e-05
    %v1638 = vadd.f32 %v1636, 1e-05
    %v1639 = vrsqrt.pop %v1637
    %v1640 = vrsqrt.pop %v1638
    %v1641 = vmul.f32 %v1625, %v1639
    %v1642 = vmul.f32 %v1626, %v1640
    %v1644 = vlaneseq
    %v1645 = vshrl.u32 %v1644, 7
    %v1646 = vsub.s32 0, %v1645
    %v1647 = vrot.slane %v1612, %v1646
    %v1649 = vmul.f32 %v1641, %v1647
    %v1650 = vmul.f32 %v1642, %v1647
    %v1652 = vlaneseq
    %v1653 = vshrl.u32 %v1652, 7
    %v1654 = vsub.s32 0, %v1653
    %v1655 = vrot.slane %v1613, %v1654
    %v1657 = vadd.f32 %v1649, %v1655
    %v1658 = vadd.f32 %v1650, %v1655
    %v1659 = vadd.f32 %v1657, %v246
    %v1660 = vadd.f32 %v1658, %v247
    %v1661 = vpack.c.bf16 %v1660, %v1659
    %v1662 = vld [vmem:[#allocation14] sm:$0xf]
    %v1663 = vld [vmem:[#allocation14 + $0x4] sm:$0xf]
    %v1664 = vld [vmem:[#allocation14 + $0x8] sm:$0xf]
    %v1665 = vld [vmem:[#allocation14 + $0xc] sm:$0xf]
    %v1666 = vld [vmem:[#allocation16] sm:$0x1]
    %v1668 = vlaneseq
    %v1669 = vshrl.u32 %v1668, 7
    %v1670 = vsub.s32 0, %v1669
    %v1671 = vrot.slane %v1666, %v1670
    %v1677 = vunpack.c.l.b16 %v1662
    %v1678 = vunpack.c.l.b16 %v1663
    %v1679 = vunpack.c.l.b16 %v1664
    %v1680 = vunpack.c.l.b16 %v1665
    %v1681 = vpack.c.b16 %v1678, %v1677
    %v1682 = vpack.c.b16 %v1680, %v1679
    %v1686 = vsel %vm290, %v1661, 0
    %1688 = vmatprep.subr.bf16.mxu0 0
    %1689 = vmatpush1.bf16.msra.mxu0 0
    %1690 = vmatprep.subr.bf16.mxu0 0
    %1691 = vmatpush1.bf16.msra.mxu0 0
    %1692 = vmatprep.subr.bf16.mxu0 0
    %1693 = vmatpush1.bf16.msra.mxu0 0
    %1694 = vmatprep.subr.bf16.mxu0 0
    %1695 = vmatpush1.bf16.msra.mxu0 0
    %1696 = vmatprep.subr.bf16.mxu0 0
    %1697 = vmatpush1.bf16.msra.mxu0 0
    %1698 = vmatprep.subr.bf16.mxu0 0
    %1699 = vmatpush1.bf16.msra.mxu0 0
    %1700 = vmatprep.subr.bf16.mxu0 0
    %1701 = vmatpush1.bf16.msra.mxu0 %v1682
    %1702 = vmatprep.subr.bf16.mxu0 0
    %1703 = vmatpush1.bf16.msra.mxu0 %v1681
    %1704 = vmatprep.subr.bf16.mxu0 0
    %1705 = vmatpush2.bf16.msra.mxu0 0
    %1706 = vmatprep.subr.bf16.mxu0 0
    %1707 = vmatpush2.bf16.msra.mxu0 0
    %1708 = vmatprep.subr.bf16.mxu0 0
    %1709 = vmatpush2.bf16.msra.mxu0 0
    %1710 = vmatprep.subr.bf16.mxu0 0
    %1711 = vmatpush2.bf16.msra.mxu0 0
    %1712 = vmatprep.subr.bf16.mxu0 0
    %1713 = vmatpush2.bf16.msra.mxu0 0
    %1714 = vmatprep.subr.bf16.mxu0 0
    %1715 = vmatpush2.bf16.msra.mxu0 0
    %1716 = vmatprep.subr.bf16.mxu0 0
    %1717 = vmatpush2.bf16.msra.mxu0 0
    %1718 = vmatprep.subr.bf16.mxu0 0
    %1719 = vmatpush2.bf16.msra.mxu0 0
    %1720 = vmatprep.mubr.bf16.mxu0 0
    %1721 = vmatmul.mubr.bf16.gmra.mxu0 %v1686
    %v1722 = vpop.f32.mrf.mxu0
    %v1723 = vadd.f32 %v1671, %v1722
    %v1724 = vpop.f32.mrf.mxu0
    %v1725 = vpop.f32.mrf.mxu0
    %v1726 = vadd.f32 %v1671, %v1725
    %v1727 = vpop.f32.mrf.mxu0
    %1728 = vdwg.mxu0
    %v1729 = vpack.c.bf16 %v1658, %v1657
    %v1730 = vld [vmem:[#allocation17] sm:$0xf]
    %v1731 = vld [vmem:[#allocation17 + $0x4] sm:$0xf]
    %v1732 = vld [vmem:[#allocation17 + $0x8] sm:$0xf]
    %v1733 = vld [vmem:[#allocation17 + $0xc] sm:$0xf]
    %v1734 = vld [vmem:[#allocation19] sm:$0x1]
    %v1736 = vlaneseq
    %v1737 = vshrl.u32 %v1736, 7
    %v1738 = vsub.s32 0, %v1737
    %v1739 = vrot.slane %v1734, %v1738
    %v1745 = vunpack.c.l.b16 %v1730
    %v1746 = vunpack.c.l.b16 %v1731
    %v1747 = vunpack.c.l.b16 %v1732
    %v1748 = vunpack.c.l.b16 %v1733
    %v1749 = vpack.c.b16 %v1746, %v1745
    %v1750 = vpack.c.b16 %v1748, %v1747
    %v1754 = vsel %vm290, %v1729, 0
    %1756 = vmatprep.subr.bf16.mxu0 0
    %1757 = vmatpush1.bf16.msra.mxu0 0
    %1758 = vmatprep.subr.bf16.mxu0 0
    %1759 = vmatpush1.bf16.msra.mxu0 0
    %1760 = vmatprep.subr.bf16.mxu0 0
    %1761 = vmatpush1.bf16.msra.mxu0 0
    %1762 = vmatprep.subr.bf16.mxu0 0
    %1763 = vmatpush1.bf16.msra.mxu0 0
    %1764 = vmatprep.subr.bf16.mxu0 0
    %1765 = vmatpush1.bf16.msra.mxu0 0
    %1766 = vmatprep.subr.bf16.mxu0 0
    %1767 = vmatpush1.bf16.msra.mxu0 0
    %1768 = vmatprep.subr.bf16.mxu0 0
    %1769 = vmatpush1.bf16.msra.mxu0 %v1750
    %1770 = vmatprep.subr.bf16.mxu0 0
    %1771 = vmatpush1.bf16.msra.mxu0 %v1749
    %1772 = vmatprep.subr.bf16.mxu0 0
    %1773 = vmatpush2.bf16.msra.mxu0 0
    %1774 = vmatprep.subr.bf16.mxu0 0
    %1775 = vmatpush2.bf16.msra.mxu0 0
    %1776 = vmatprep.subr.bf16.mxu0 0
    %1777 = vmatpush2.bf16.msra.mxu0 0
    %1778 = vmatprep.subr.bf16.mxu0 0
    %1779 = vmatpush2.bf16.msra.mxu0 0
    %1780 = vmatprep.subr.bf16.mxu0 0
    %1781 = vmatpush2.bf16.msra.mxu0 0
    %1782 = vmatprep.subr.bf16.mxu0 0
    %1783 = vmatpush2.bf16.msra.mxu0 0
    %1784 = vmatprep.subr.bf16.mxu0 0
    %1785 = vmatpush2.bf16.msra.mxu0 0
    %1786 = vmatprep.subr.bf16.mxu0 0
    %1787 = vmatpush2.bf16.msra.mxu0 0
    %1788 = vmatprep.mubr.bf16.mxu0 0
    %1789 = vmatmul.mubr.bf16.gmra.mxu0 %v1754
    %v1790 = vpop.f32.mrf.mxu0
    %v1791 = vadd.f32 %v1739, %v1790
    %v1792 = vpop.f32.mrf.mxu0
    %v1793 = vpop.f32.mrf.mxu0
    %v1794 = vadd.f32 %v1739, %v1793
    %v1795 = vpop.f32.mrf.mxu0
    %1796 = vdwg.mxu0
    %v1797 = vpack.c.bf16 %v1723, %v1723
    %v1798 = vpack.c.bf16 %v1791, %v1791
    %1800 = vrot.lane.b32.xlu0 %v1797, 96
    %v1801 = vpop.permute.xlu0 %1800
    %v1803 = vsel %vm526, %v1797, 0
    %v1806 = vsel %vm526, %v1801, 0
    %1808 = vmatprep.subr.bf16.mxu0 0
    %1809 = vmatpush1.bf16.xpose.msra.mxu0 0
    %1810 = vmatprep.subr.bf16.mxu0 0
    %1811 = vmatpush1.bf16.xpose.msra.mxu0 0
    %1812 = vmatprep.subr.bf16.mxu0 0
    %1813 = vmatpush1.bf16.xpose.msra.mxu0 0
    %1814 = vmatprep.subr.bf16.mxu0 0
    %1815 = vmatpush1.bf16.xpose.msra.mxu0 0
    %1816 = vmatprep.subr.bf16.mxu0 0
    %1817 = vmatpush1.bf16.xpose.msra.mxu0 0
    %1818 = vmatprep.subr.bf16.mxu0 0
    %1819 = vmatpush1.bf16.xpose.msra.mxu0 0
    %1820 = vmatprep.subr.bf16.mxu0 0
    %1821 = vmatpush1.bf16.xpose.msra.mxu0 0
    %1822 = vmatprep.subr.bf16.mxu0 0
    %1823 = vmatpush1.bf16.xpose.msra.mxu0 %v1806
    %1824 = vmatprep.subr.bf16.mxu0 0
    %1825 = vmatpush2.bf16.xpose.msra.mxu0 0
    %1826 = vmatprep.subr.bf16.mxu0 0
    %1827 = vmatpush2.bf16.xpose.msra.mxu0 0
    %1828 = vmatprep.subr.bf16.mxu0 0
    %1829 = vmatpush2.bf16.xpose.msra.mxu0 0
    %1830 = vmatprep.subr.bf16.mxu0 0
    %1831 = vmatpush2.bf16.xpose.msra.mxu0 0
    %1832 = vmatprep.subr.bf16.mxu0 0
    %1833 = vmatpush2.bf16.xpose.msra.mxu0 0
    %1834 = vmatprep.subr.bf16.mxu0 0
    %1835 = vmatpush2.bf16.xpose.msra.mxu0 0
    %1836 = vmatprep.subr.bf16.mxu0 0
    %1837 = vmatpush2.bf16.xpose.msra.mxu0 0
    %1838 = vmatprep.subr.bf16.mxu0 0
    %1839 = vmatpush2.bf16.xpose.msra.mxu0 0
    %1840 = vmatprep.mubr.bf16.mxu0 0
    %1841 = vmatmul.mubr.bf16.gmra.mxu0 %v1803
    %v1842 = vpop.f32.mrf.mxu0
    %v1843 = vadd.f32 0.0, %v1842
    %v1844 = vpop.f32.mrf.mxu0
    %v1845 = vpop.f32.mrf.mxu0
    %v1846 = vpop.f32.mrf.mxu0
    %1847 = vdwg.mxu0
    %v1848 = vsel %vm526, %v1843, -inf
    %1849 = vmax.xlane.f32.xlu0 %v1848
    %v1850 = vpop.xlane.xlu0 %1849
    %v1851 = vsub.f32 %v1843, %v1850
    %v1852 = vmul.f32 %v1851, 1.442695
    %v1853 = vpow.pop %v1852
    %v1854 = vsel %vm526, %v1853, 0.0
    %1855 = vadd.xlane.f32.xlu0 %v1854
    %v1856 = vpop.xlane.xlu0 %1855
    %v1857 = vrcp.pop %v1856
    %v1858 = vmul.f32 %v1853, %v1857
    %v1859 = vpack.c.bf16 %v1858, %v1858
    %v1861 = vsel %vm526, %v1859, 0
    %v1864 = vsel %vm530, %v1798, 0
    %1866 = vmatprep.subr.bf16.mxu0 0
    %1867 = vmatpush1.bf16.msra.mxu0 0
    %1868 = vmatprep.subr.bf16.mxu0 0
    %1869 = vmatpush1.bf16.msra.mxu0 0
    %1870 = vmatprep.subr.bf16.mxu0 0
    %1871 = vmatpush1.bf16.msra.mxu0 0
    %1872 = vmatprep.subr.bf16.mxu0 0
    %1873 = vmatpush1.bf16.msra.mxu0 0
    %1874 = vmatprep.subr.bf16.mxu0 0
    %1875 = vmatpush1.bf16.msra.mxu0 0
    %1876 = vmatprep.subr.bf16.mxu0 0
    %1877 = vmatpush1.bf16.msra.mxu0 0
    %1878 = vmatprep.subr.bf16.mxu0 0
    %1879 = vmatpush1.bf16.msra.mxu0 0
    %1880 = vmatprep.subr.bf16.mxu0 0
    %1881 = vmatpush1.bf16.msra.mxu0 %v1864
    %1882 = vmatprep.subr.bf16.mxu0 0
    %1883 = vmatpush2.bf16.msra.mxu0 0
    %1884 = vmatprep.subr.bf16.mxu0 0
    %1885 = vmatpush2.bf16.msra.mxu0 0
    %1886 = vmatprep.subr.bf16.mxu0 0
    %1887 = vmatpush2.bf16.msra.mxu0 0
    %1888 = vmatprep.subr.bf16.mxu0 0
    %1889 = vmatpush2.bf16.msra.mxu0 0
    %1890 = vmatprep.subr.bf16.mxu0 0
    %1891 = vmatpush2.bf16.msra.mxu0 0
    %1892 = vmatprep.subr.bf16.mxu0 0
    %1893 = vmatpush2.bf16.msra.mxu0 0
    %1894 = vmatprep.subr.bf16.mxu0 0
    %1895 = vmatpush2.bf16.msra.mxu0 0
    %1896 = vmatprep.subr.bf16.mxu0 0
    %1897 = vmatpush2.bf16.msra.mxu0 0
    %1898 = vmatprep.mubr.bf16.mxu0 0
    %1899 = vmatmul.mubr.bf16.gmra.mxu0 %v1861
    %v1900 = vpop.f32.mrf.mxu0
    %v1901 = vadd.f32 0.0, %v1900
    %v1902 = vpop.f32.mrf.mxu0
    %v1903 = vpop.f32.mrf.mxu0
    %v1904 = vpop.f32.mrf.mxu0
    %1905 = vdwg.mxu0
    %1906 = vrot.lane.b32.xlu0 %v1797, 120
    %v1907 = vpop.permute.xlu0 %1906
    %1908 = vrot.lane.b32.xlu0 %v1797, 88
    %v1909 = vpop.permute.xlu0 %1908
    %v1911 = vsel %vm526, %v1907, 0
    %v1914 = vsel %vm526, %v1909, 0
    %1916 = vmatprep.subr.bf16.mxu0 0
    %1917 = vmatpush1.bf16.xpose.msra.mxu0 0
    %1918 = vmatprep.subr.bf16.mxu0 0
    %1919 = vmatpush1.bf16.xpose.msra.mxu0 0
    %1920 = vmatprep.subr.bf16.mxu0 0
    %1921 = vmatpush1.bf16.xpose.msra.mxu0 0
    %1922 = vmatprep.subr.bf16.mxu0 0
    %1923 = vmatpush1.bf16.xpose.msra.mxu0 0
    %1924 = vmatprep.subr.bf16.mxu0 0
    %1925 = vmatpush1.bf16.xpose.msra.mxu0 0
    %1926 = vmatprep.subr.bf16.mxu0 0
    %1927 = vmatpush1.bf16.xpose.msra.mxu0 0
    %1928 = vmatprep.subr.bf16.mxu0 0
    %1929 = vmatpush1.bf16.xpose.msra.mxu0 0
    %1930 = vmatprep.subr.bf16.mxu0 0
    %1931 = vmatpush1.bf16.xpose.msra.mxu0 %v1914
    %1932 = vmatprep.subr.bf16.mxu0 0
    %1933 = vmatpush2.bf16.xpose.msra.mxu0 0
    %1934 = vmatprep.subr.bf16.mxu0 0
    %1935 = vmatpush2.bf16.xpose.msra.mxu0 0
    %1936 = vmatprep.subr.bf16.mxu0 0
    %1937 = vmatpush2.bf16.xpose.msra.mxu0 0
    %1938 = vmatprep.subr.bf16.mxu0 0
    %1939 = vmatpush2.bf16.xpose.msra.mxu0 0
    %1940 = vmatprep.subr.bf16.mxu0 0
    %1941 = vmatpush2.bf16.xpose.msra.mxu0 0
    %1942 = vmatprep.subr.bf16.mxu0 0
    %1943 = vmatpush2.bf16.xpose.msra.mxu0 0
    %1944 = vmatprep.subr.bf16.mxu0 0
    %1945 = vmatpush2.bf16.xpose.msra.mxu0 0
    %1946 = vmatprep.subr.bf16.mxu0 0
    %1947 = vmatpush2.bf16.xpose.msra.mxu0 0
    %1948 = vmatprep.mubr.bf16.mxu0 0
    %1949 = vmatmul.mubr.bf16.gmra.mxu0 %v1911
    %v1950 = vpop.f32.mrf.mxu0
    %v1951 = vadd.f32 0.0, %v1950
    %v1952 = vpop.f32.mrf.mxu0
    %v1953 = vpop.f32.mrf.mxu0
    %v1954 = vpop.f32.mrf.mxu0
    %1955 = vdwg.mxu0
    %v1956 = vsel %vm526, %v1951, -inf
    %1957 = vmax.xlane.f32.xlu0 %v1956
    %v1958 = vpop.xlane.xlu0 %1957
    %v1959 = vsub.f32 %v1951, %v1958
    %v1960 = vmul.f32 %v1959, 1.442695
    %v1961 = vpow.pop %v1960
    %v1962 = vsel %vm526, %v1961, 0.0
    %1963 = vadd.xlane.f32.xlu0 %v1962
    %v1964 = vpop.xlane.xlu0 %1963
    %v1965 = vrcp.pop %v1964
    %v1966 = vmul.f32 %v1961, %v1965
    %v1967 = vpack.c.bf16 %v1966, %v1966
    %1969 = vrot.lane.b32.xlu0 %v1798, 120
    %v1970 = vpop.permute.xlu0 %1969
    %v1972 = vsel %vm526, %v1967, 0
    %v1975 = vsel %vm530, %v1970, 0
    %1977 = vmatprep.subr.bf16.mxu0 0
    %1978 = vmatpush1.bf16.msra.mxu0 0
    %1979 = vmatprep.subr.bf16.mxu0 0
    %1980 = vmatpush1.bf16.msra.mxu0 0
    %1981 = vmatprep.subr.bf16.mxu0 0
    %1982 = vmatpush1.bf16.msra.mxu0 0
    %1983 = vmatprep.subr.bf16.mxu0 0
    %1984 = vmatpush1.bf16.msra.mxu0 0
    %1985 = vmatprep.subr.bf16.mxu0 0
    %1986 = vmatpush1.bf16.msra.mxu0 0
    %1987 = vmatprep.subr.bf16.mxu0 0
    %1988 = vmatpush1.bf16.msra.mxu0 0
    %1989 = vmatprep.subr.bf16.mxu0 0
    %1990 = vmatpush1.bf16.msra.mxu0 0
    %1991 = vmatprep.subr.bf16.mxu0 0
    %1992 = vmatpush1.bf16.msra.mxu0 %v1975
    %1993 = vmatprep.subr.bf16.mxu0 0
    %1994 = vmatpush2.bf16.msra.mxu0 0
    %1995 = vmatprep.subr.bf16.mxu0 0
    %1996 = vmatpush2.bf16.msra.mxu0 0
    %1997 = vmatprep.subr.bf16.mxu0 0
    %1998 = vmatpush2.bf16.msra.mxu0 0
    %1999 = vmatprep.subr.bf16.mxu0 0
    %2000 = vmatpush2.bf16.msra.mxu0 0
    %2001 = vmatprep.subr.bf16.mxu0 0
    %2002 = vmatpush2.bf16.msra.mxu0 0
    %2003 = vmatprep.subr.bf16.mxu0 0
    %2004 = vmatpush2.bf16.msra.mxu0 0
    %2005 = vmatprep.subr.bf16.mxu0 0
    %2006 = vmatpush2.bf16.msra.mxu0 0
    %2007 = vmatprep.subr.bf16.mxu0 0
    %2008 = vmatpush2.bf16.msra.mxu0 0
    %2009 = vmatprep.mubr.bf16.mxu0 0
    %2010 = vmatmul.mubr.bf16.gmra.mxu0 %v1972
    %v2011 = vpop.f32.mrf.mxu0
    %v2012 = vadd.f32 0.0, %v2011
    %v2013 = vpop.f32.mrf.mxu0
    %v2014 = vpop.f32.mrf.mxu0
    %v2015 = vpop.f32.mrf.mxu0
    %2016 = vdwg.mxu0
    %2017 = vrot.lane.b32.xlu0 %v1797, 112
    %v2018 = vpop.permute.xlu0 %2017
    %2019 = vrot.lane.b32.xlu0 %v1797, 80
    %v2020 = vpop.permute.xlu0 %2019
    %v2022 = vsel %vm526, %v2018, 0
    %v2025 = vsel %vm526, %v2020, 0
    %2027 = vmatprep.subr.bf16.mxu0 0
    %2028 = vmatpush1.bf16.xpose.msra.mxu0 0
    %2029 = vmatprep.subr.bf16.mxu0 0
    %2030 = vmatpush1.bf16.xpose.msra.mxu0 0
    %2031 = vmatprep.subr.bf16.mxu0 0
    %2032 = vmatpush1.bf16.xpose.msra.mxu0 0
    %2033 = vmatprep.subr.bf16.mxu0 0
    %2034 = vmatpush1.bf16.xpose.msra.mxu0 0
    %2035 = vmatprep.subr.bf16.mxu0 0
    %2036 = vmatpush1.bf16.xpose.msra.mxu0 0
    %2037 = vmatprep.subr.bf16.mxu0 0
    %2038 = vmatpush1.bf16.xpose.msra.mxu0 0
    %2039 = vmatprep.subr.bf16.mxu0 0
    %2040 = vmatpush1.bf16.xpose.msra.mxu0 0
    %2041 = vmatprep.subr.bf16.mxu0 0
    %2042 = vmatpush1.bf16.xpose.msra.mxu0 %v2025
    %2043 = vmatprep.subr.bf16.mxu0 0
    %2044 = vmatpush2.bf16.xpose.msra.mxu0 0
    %2045 = vmatprep.subr.bf16.mxu0 0
    %2046 = vmatpush2.bf16.xpose.msra.mxu0 0
    %2047 = vmatprep.subr.bf16.mxu0 0
    %2048 = vmatpush2.bf16.xpose.msra.mxu0 0
    %2049 = vmatprep.subr.bf16.mxu0 0
    %2050 = vmatpush2.bf16.xpose.msra.mxu0 0
    %2051 = vmatprep.subr.bf16.mxu0 0
    %2052 = vmatpush2.bf16.xpose.msra.mxu0 0
    %2053 = vmatprep.subr.bf16.mxu0 0
    %2054 = vmatpush2.bf16.xpose.msra.mxu0 0
    %2055 = vmatprep.subr.bf16.mxu0 0
    %2056 = vmatpush2.bf16.xpose.msra.mxu0 0
    %2057 = vmatprep.subr.bf16.mxu0 0
    %2058 = vmatpush2.bf16.xpose.msra.mxu0 0
    %2059 = vmatprep.mubr.bf16.mxu0 0
    %2060 = vmatmul.mubr.bf16.gmra.mxu0 %v2022
    %v2061 = vpop.f32.mrf.mxu0
    %v2062 = vadd.f32 0.0, %v2061
    %v2063 = vpop.f32.mrf.mxu0
    %v2064 = vpop.f32.mrf.mxu0
    %v2065 = vpop.f32.mrf.mxu0
    %2066 = vdwg.mxu0
    %v2067 = vsel %vm526, %v2062, -inf
    %2068 = vmax.xlane.f32.xlu0 %v2067
    %v2069 = vpop.xlane.xlu0 %2068
    %v2070 = vsub.f32 %v2062, %v2069
    %v2071 = vmul.f32 %v2070, 1.442695
    %v2072 = vpow.pop %v2071
    %v2073 = vsel %vm526, %v2072, 0.0
    %2074 = vadd.xlane.f32.xlu0 %v2073
    %v2075 = vpop.xlane.xlu0 %2074
    %v2076 = vrcp.pop %v2075
    %v2077 = vmul.f32 %v2072, %v2076
    %v2078 = vpack.c.bf16 %v2077, %v2077
    %2079 = vrot.lane.b32.xlu0 %v1798, 112
    %v2080 = vpop.permute.xlu0 %2079
    %v2082 = vsel %vm526, %v2078, 0
    %v2085 = vsel %vm530, %v2080, 0
    %2087 = vmatprep.subr.bf16.mxu0 0
    %2088 = vmatpush1.bf16.msra.mxu0 0
    %2089 = vmatprep.subr.bf16.mxu0 0
    %2090 = vmatpush1.bf16.msra.mxu0 0
    %2091 = vmatprep.subr.bf16.mxu0 0
    %2092 = vmatpush1.bf16.msra.mxu0 0
    %2093 = vmatprep.subr.bf16.mxu0 0
    %2094 = vmatpush1.bf16.msra.mxu0 0
    %2095 = vmatprep.subr.bf16.mxu0 0
    %2096 = vmatpush1.bf16.msra.mxu0 0
    %2097 = vmatprep.subr.bf16.mxu0 0
    %2098 = vmatpush1.bf16.msra.mxu0 0
    %2099 = vmatprep.subr.bf16.mxu0 0
    %2100 = vmatpush1.bf16.msra.mxu0 0
    %2101 = vmatprep.subr.bf16.mxu0 0
    %2102 = vmatpush1.bf16.msra.mxu0 %v2085
    %2103 = vmatprep.subr.bf16.mxu0 0
    %2104 = vmatpush2.bf16.msra.mxu0 0
    %2105 = vmatprep.subr.bf16.mxu0 0
    %2106 = vmatpush2.bf16.msra.mxu0 0
    %2107 = vmatprep.subr.bf16.mxu0 0
    %2108 = vmatpush2.bf16.msra.mxu0 0
    %2109 = vmatprep.subr.bf16.mxu0 0
    %2110 = vmatpush2.bf16.msra.mxu0 0
    %2111 = vmatprep.subr.bf16.mxu0 0
    %2112 = vmatpush2.bf16.msra.mxu0 0
    %2113 = vmatprep.subr.bf16.mxu0 0
    %2114 = vmatpush2.bf16.msra.mxu0 0
    %2115 = vmatprep.subr.bf16.mxu0 0
    %2116 = vmatpush2.bf16.msra.mxu0 0
    %2117 = vmatprep.subr.bf16.mxu0 0
    %2118 = vmatpush2.bf16.msra.mxu0 0
    %2119 = vmatprep.mubr.bf16.mxu0 0
    %2120 = vmatmul.mubr.bf16.gmra.mxu0 %v2082
    %v2121 = vpop.f32.mrf.mxu0
    %v2122 = vadd.f32 0.0, %v2121
    %v2123 = vpop.f32.mrf.mxu0
    %v2124 = vpop.f32.mrf.mxu0
    %v2125 = vpop.f32.mrf.mxu0
    %2126 = vdwg.mxu0
    %2127 = vrot.lane.b32.xlu0 %v1797, 104
    %v2128 = vpop.permute.xlu0 %2127
    %2129 = vrot.lane.b32.xlu0 %v1797, 72
    %v2130 = vpop.permute.xlu0 %2129
    %v2132 = vsel %vm526, %v2128, 0
    %v2135 = vsel %vm526, %v2130, 0
    %2137 = vmatprep.subr.bf16.mxu0 0
    %2138 = vmatpush1.bf16.xpose.msra.mxu0 0
    %2139 = vmatprep.subr.bf16.mxu0 0
    %2140 = vmatpush1.bf16.xpose.msra.mxu0 0
    %2141 = vmatprep.subr.bf16.mxu0 0
    %2142 = vmatpush1.bf16.xpose.msra.mxu0 0
    %2143 = vmatprep.subr.bf16.mxu0 0
    %2144 = vmatpush1.bf16.xpose.msra.mxu0 0
    %2145 = vmatprep.subr.bf16.mxu0 0
    %2146 = vmatpush1.bf16.xpose.msra.mxu0 0
    %2147 = vmatprep.subr.bf16.mxu0 0
    %2148 = vmatpush1.bf16.xpose.msra.mxu0 0
    %2149 = vmatprep.subr.bf16.mxu0 0
    %2150 = vmatpush1.bf16.xpose.msra.mxu0 0
    %2151 = vmatprep.subr.bf16.mxu0 0
    %2152 = vmatpush1.bf16.xpose.msra.mxu0 %v2135
    %2153 = vmatprep.subr.bf16.mxu0 0
    %2154 = vmatpush2.bf16.xpose.msra.mxu0 0
    %2155 = vmatprep.subr.bf16.mxu0 0
    %2156 = vmatpush2.bf16.xpose.msra.mxu0 0
    %2157 = vmatprep.subr.bf16.mxu0 0
    %2158 = vmatpush2.bf16.xpose.msra.mxu0 0
    %2159 = vmatprep.subr.bf16.mxu0 0
    %2160 = vmatpush2.bf16.xpose.msra.mxu0 0
    %2161 = vmatprep.subr.bf16.mxu0 0
    %2162 = vmatpush2.bf16.xpose.msra.mxu0 0
    %2163 = vmatprep.subr.bf16.mxu0 0
    %2164 = vmatpush2.bf16.xpose.msra.mxu0 0
    %2165 = vmatprep.subr.bf16.mxu0 0
    %2166 = vmatpush2.bf16.xpose.msra.mxu0 0
    %2167 = vmatprep.subr.bf16.mxu0 0
    %2168 = vmatpush2.bf16.xpose.msra.mxu0 0
    %2169 = vmatprep.mubr.bf16.mxu0 0
    %2170 = vmatmul.mubr.bf16.gmra.mxu0 %v2132
    %v2171 = vpop.f32.mrf.mxu0
    %v2172 = vadd.f32 0.0, %v2171
    %v2173 = vpop.f32.mrf.mxu0
    %v2174 = vpop.f32.mrf.mxu0
    %v2175 = vpop.f32.mrf.mxu0
    %2176 = vdwg.mxu0
    %v2177 = vsel %vm526, %v2172, -inf
    %2178 = vmax.xlane.f32.xlu0 %v2177
    %v2179 = vpop.xlane.xlu0 %2178
    %v2180 = vsub.f32 %v2172, %v2179
    %v2181 = vmul.f32 %v2180, 1.442695
    %v2182 = vpow.pop %v2181
    %v2183 = vsel %vm526, %v2182, 0.0
    %2184 = vadd.xlane.f32.xlu0 %v2183
    %v2185 = vpop.xlane.xlu0 %2184
    %v2186 = vrcp.pop %v2185
    %v2187 = vmul.f32 %v2182, %v2186
    %v2188 = vpack.c.bf16 %v2187, %v2187
    %2189 = vrot.lane.b32.xlu0 %v1798, 104
    %v2190 = vpop.permute.xlu0 %2189
    %v2192 = vsel %vm526, %v2188, 0
    %v2195 = vsel %vm530, %v2190, 0
    %2197 = vmatprep.subr.bf16.mxu0 0
    %2198 = vmatpush1.bf16.msra.mxu0 0
    %2199 = vmatprep.subr.bf16.mxu0 0
    %2200 = vmatpush1.bf16.msra.mxu0 0
    %2201 = vmatprep.subr.bf16.mxu0 0
    %2202 = vmatpush1.bf16.msra.mxu0 0
    %2203 = vmatprep.subr.bf16.mxu0 0
    %2204 = vmatpush1.bf16.msra.mxu0 0
    %2205 = vmatprep.subr.bf16.mxu0 0
    %2206 = vmatpush1.bf16.msra.mxu0 0
    %2207 = vmatprep.subr.bf16.mxu0 0
    %2208 = vmatpush1.bf16.msra.mxu0 0
    %2209 = vmatprep.subr.bf16.mxu0 0
    %2210 = vmatpush1.bf16.msra.mxu0 0
    %2211 = vmatprep.subr.bf16.mxu0 0
    %2212 = vmatpush1.bf16.msra.mxu0 %v2195
    %2213 = vmatprep.subr.bf16.mxu0 0
    %2214 = vmatpush2.bf16.msra.mxu0 0
    %2215 = vmatprep.subr.bf16.mxu0 0
    %2216 = vmatpush2.bf16.msra.mxu0 0
    %2217 = vmatprep.subr.bf16.mxu0 0
    %2218 = vmatpush2.bf16.msra.mxu0 0
    %2219 = vmatprep.subr.bf16.mxu0 0
    %2220 = vmatpush2.bf16.msra.mxu0 0
    %2221 = vmatprep.subr.bf16.mxu0 0
    %2222 = vmatpush2.bf16.msra.mxu0 0
    %2223 = vmatprep.subr.bf16.mxu0 0
    %2224 = vmatpush2.bf16.msra.mxu0 0
    %2225 = vmatprep.subr.bf16.mxu0 0
    %2226 = vmatpush2.bf16.msra.mxu0 0
    %2227 = vmatprep.subr.bf16.mxu0 0
    %2228 = vmatpush2.bf16.msra.mxu0 0
    %2229 = vmatprep.mubr.bf16.mxu0 0
    %2230 = vmatmul.mubr.bf16.gmra.mxu0 %v2192
    %v2231 = vpop.f32.mrf.mxu0
    %v2232 = vadd.f32 0.0, %v2231
    %v2233 = vpop.f32.mrf.mxu0
    %v2234 = vpop.f32.mrf.mxu0
    %v2235 = vpop.f32.mrf.mxu0
    %2236 = vdwg.mxu0
    %2238 = vrot.lane.b32.xlu0 %v2012, 8
    %v2239 = vpop.permute.xlu0 %2238
    %2242 = vrot.lane.b32.xlu0 %v2122, 16
    %v2243 = vpop.permute.xlu0 %2242
    %2246 = vrot.lane.b32.xlu0 %v2232, 24
    %v2247 = vpop.permute.xlu0 %2246
    %v2249 = vsel %vm526, %v1901, %v2239
    %v2250 = vsel %vm973, %v2249, %v2243
    %v2251 = vsel %vm975, %v2250, %v2247
    %v2252 = vpack.c.bf16 %v1726, %v1726
    %v2253 = vpack.c.bf16 %v1794, %v1794
    %2255 = vrot.lane.b32.xlu0 %v2252, 96
    %v2256 = vpop.permute.xlu0 %2255
    %v2258 = vsel %vm526, %v2252, 0
    %v2261 = vsel %vm526, %v2256, 0
    %2263 = vmatprep.subr.bf16.mxu0 0
    %2264 = vmatpush1.bf16.xpose.msra.mxu0 0
    %2265 = vmatprep.subr.bf16.mxu0 0
    %2266 = vmatpush1.bf16.xpose.msra.mxu0 0
    %2267 = vmatprep.subr.bf16.mxu0 0
    %2268 = vmatpush1.bf16.xpose.msra.mxu0 0
    %2269 = vmatprep.subr.bf16.mxu0 0
    %2270 = vmatpush1.bf16.xpose.msra.mxu0 0
    %2271 = vmatprep.subr.bf16.mxu0 0
    %2272 = vmatpush1.bf16.xpose.msra.mxu0 0
    %2273 = vmatprep.subr.bf16.mxu0 0
    %2274 = vmatpush1.bf16.xpose.msra.mxu0 0
    %2275 = vmatprep.subr.bf16.mxu0 0
    %2276 = vmatpush1.bf16.xpose.msra.mxu0 0
    %2277 = vmatprep.subr.bf16.mxu0 0
    %2278 = vmatpush1.bf16.xpose.msra.mxu0 %v2261
    %2279 = vmatprep.subr.bf16.mxu0 0
    %2280 = vmatpush2.bf16.xpose.msra.mxu0 0
    %2281 = vmatprep.subr.bf16.mxu0 0
    %2282 = vmatpush2.bf16.xpose.msra.mxu0 0
    %2283 = vmatprep.subr.bf16.mxu0 0
    %2284 = vmatpush2.bf16.xpose.msra.mxu0 0
    %2285 = vmatprep.subr.bf16.mxu0 0
    %2286 = vmatpush2.bf16.xpose.msra.mxu0 0
    %2287 = vmatprep.subr.bf16.mxu0 0
    %2288 = vmatpush2.bf16.xpose.msra.mxu0 0
    %2289 = vmatprep.subr.bf16.mxu0 0
    %2290 = vmatpush2.bf16.xpose.msra.mxu0 0
    %2291 = vmatprep.subr.bf16.mxu0 0
    %2292 = vmatpush2.bf16.xpose.msra.mxu0 0
    %2293 = vmatprep.subr.bf16.mxu0 0
    %2294 = vmatpush2.bf16.xpose.msra.mxu0 0
    %2295 = vmatprep.mubr.bf16.mxu0 0
    %2296 = vmatmul.mubr.bf16.gmra.mxu0 %v2258
    %v2297 = vpop.f32.mrf.mxu0
    %v2298 = vadd.f32 0.0, %v2297
    %v2299 = vpop.f32.mrf.mxu0
    %v2300 = vpop.f32.mrf.mxu0
    %v2301 = vpop.f32.mrf.mxu0
    %2302 = vdwg.mxu0
    %v2303 = vsel %vm526, %v2298, -inf
    %2304 = vmax.xlane.f32.xlu0 %v2303
    %v2305 = vpop.xlane.xlu0 %2304
    %v2306 = vsub.f32 %v2298, %v2305
    %v2307 = vmul.f32 %v2306, 1.442695
    %v2308 = vpow.pop %v2307
    %v2309 = vsel %vm526, %v2308, 0.0
    %2310 = vadd.xlane.f32.xlu0 %v2309
    %v2311 = vpop.xlane.xlu0 %2310
    %v2312 = vrcp.pop %v2311
    %v2313 = vmul.f32 %v2308, %v2312
    %v2314 = vpack.c.bf16 %v2313, %v2313
    %v2316 = vsel %vm526, %v2314, 0
    %v2319 = vsel %vm530, %v2253, 0
    %2321 = vmatprep.subr.bf16.mxu0 0
    %2322 = vmatpush1.bf16.msra.mxu0 0
    %2323 = vmatprep.subr.bf16.mxu0 0
    %2324 = vmatpush1.bf16.msra.mxu0 0
    %2325 = vmatprep.subr.bf16.mxu0 0
    %2326 = vmatpush1.bf16.msra.mxu0 0
    %2327 = vmatprep.subr.bf16.mxu0 0
    %2328 = vmatpush1.bf16.msra.mxu0 0
    %2329 = vmatprep.subr.bf16.mxu0 0
    %2330 = vmatpush1.bf16.msra.mxu0 0
    %2331 = vmatprep.subr.bf16.mxu0 0
    %2332 = vmatpush1.bf16.msra.mxu0 0
    %2333 = vmatprep.subr.bf16.mxu0 0
    %2334 = vmatpush1.bf16.msra.mxu0 0
    %2335 = vmatprep.subr.bf16.mxu0 0
    %2336 = vmatpush1.bf16.msra.mxu0 %v2319
    %2337 = vmatprep.subr.bf16.mxu0 0
    %2338 = vmatpush2.bf16.msra.mxu0 0
    %2339 = vmatprep.subr.bf16.mxu0 0
    %2340 = vmatpush2.bf16.msra.mxu0 0
    %2341 = vmatprep.subr.bf16.mxu0 0
    %2342 = vmatpush2.bf16.msra.mxu0 0
    %2343 = vmatprep.subr.bf16.mxu0 0
    %2344 = vmatpush2.bf16.msra.mxu0 0
    %2345 = vmatprep.subr.bf16.mxu0 0
    %2346 = vmatpush2.bf16.msra.mxu0 0
    %2347 = vmatprep.subr.bf16.mxu0 0
    %2348 = vmatpush2.bf16.msra.mxu0 0
    %2349 = vmatprep.subr.bf16.mxu0 0
    %2350 = vmatpush2.bf16.msra.mxu0 0
    %2351 = vmatprep.subr.bf16.mxu0 0
    %2352 = vmatpush2.bf16.msra.mxu0 0
    %2353 = vmatprep.mubr.bf16.mxu0 0
    %2354 = vmatmul.mubr.bf16.gmra.mxu0 %v2316
    %v2355 = vpop.f32.mrf.mxu0
    %v2356 = vadd.f32 0.0, %v2355
    %v2357 = vpop.f32.mrf.mxu0
    %v2358 = vpop.f32.mrf.mxu0
    %v2359 = vpop.f32.mrf.mxu0
    %2360 = vdwg.mxu0
    %2361 = vrot.lane.b32.xlu0 %v2252, 120
    %v2362 = vpop.permute.xlu0 %2361
    %2363 = vrot.lane.b32.xlu0 %v2252, 88
    %v2364 = vpop.permute.xlu0 %2363
    %v2366 = vsel %vm526, %v2362, 0
    %v2369 = vsel %vm526, %v2364, 0
    %2371 = vmatprep.subr.bf16.mxu0 0
    %2372 = vmatpush1.bf16.xpose.msra.mxu0 0
    %2373 = vmatprep.subr.bf16.mxu0 0
    %2374 = vmatpush1.bf16.xpose.msra.mxu0 0
    %2375 = vmatprep.subr.bf16.mxu0 0
    %2376 = vmatpush1.bf16.xpose.msra.mxu0 0
    %2377 = vmatprep.subr.bf16.mxu0 0
    %2378 = vmatpush1.bf16.xpose.msra.mxu0 0
    %2379 = vmatprep.subr.bf16.mxu0 0
    %2380 = vmatpush1.bf16.xpose.msra.mxu0 0
    %2381 = vmatprep.subr.bf16.mxu0 0
    %2382 = vmatpush1.bf16.xpose.msra.mxu0 0
    %2383 = vmatprep.subr.bf16.mxu0 0
    %2384 = vmatpush1.bf16.xpose.msra.mxu0 0
    %2385 = vmatprep.subr.bf16.mxu0 0
    %2386 = vmatpush1.bf16.xpose.msra.mxu0 %v2369
    %2387 = vmatprep.subr.bf16.mxu0 0
    %2388 = vmatpush2.bf16.xpose.msra.mxu0 0
    %2389 = vmatprep.subr.bf16.mxu0 0
    %2390 = vmatpush2.bf16.xpose.msra.mxu0 0
    %2391 = vmatprep.subr.bf16.mxu0 0
    %2392 = vmatpush2.bf16.xpose.msra.mxu0 0
    %2393 = vmatprep.subr.bf16.mxu0 0
    %2394 = vmatpush2.bf16.xpose.msra.mxu0 0
    %2395 = vmatprep.subr.bf16.mxu0 0
    %2396 = vmatpush2.bf16.xpose.msra.mxu0 0
    %2397 = vmatprep.subr.bf16.mxu0 0
    %2398 = vmatpush2.bf16.xpose.msra.mxu0 0
    %2399 = vmatprep.subr.bf16.mxu0 0
    %2400 = vmatpush2.bf16.xpose.msra.mxu0 0
    %2401 = vmatprep.subr.bf16.mxu0 0
    %2402 = vmatpush2.bf16.xpose.msra.mxu0 0
    %2403 = vmatprep.mubr.bf16.mxu0 0
    %2404 = vmatmul.mubr.bf16.gmra.mxu0 %v2366
    %v2405 = vpop.f32.mrf.mxu0
    %v2406 = vadd.f32 0.0, %v2405
    %v2407 = vpop.f32.mrf.mxu0
    %v2408 = vpop.f32.mrf.mxu0
    %v2409 = vpop.f32.mrf.mxu0
    %2410 = vdwg.mxu0
    %v2411 = vsel %vm526, %v2406, -inf
    %2412 = vmax.xlane.f32.xlu0 %v2411
    %v2413 = vpop.xlane.xlu0 %2412
    %v2414 = vsub.f32 %v2406, %v2413
    %v2415 = vmul.f32 %v2414, 1.442695
    %v2416 = vpow.pop %v2415
    %v2417 = vsel %vm526, %v2416, 0.0
    %2418 = vadd.xlane.f32.xlu0 %v2417
    %v2419 = vpop.xlane.xlu0 %2418
    %v2420 = vrcp.pop %v2419
    %v2421 = vmul.f32 %v2416, %v2420
    %v2422 = vpack.c.bf16 %v2421, %v2421
    %2424 = vrot.lane.b32.xlu0 %v2253, 120
    %v2425 = vpop.permute.xlu0 %2424
    %v2427 = vsel %vm526, %v2422, 0
    %v2430 = vsel %vm530, %v2425, 0
    %2432 = vmatprep.subr.bf16.mxu0 0
    %2433 = vmatpush1.bf16.msra.mxu0 0
    %2434 = vmatprep.subr.bf16.mxu0 0
    %2435 = vmatpush1.bf16.msra.mxu0 0
    %2436 = vmatprep.subr.bf16.mxu0 0
    %2437 = vmatpush1.bf16.msra.mxu0 0
    %2438 = vmatprep.subr.bf16.mxu0 0
    %2439 = vmatpush1.bf16.msra.mxu0 0
    %2440 = vmatprep.subr.bf16.mxu0 0
    %2441 = vmatpush1.bf16.msra.mxu0 0
    %2442 = vmatprep.subr.bf16.mxu0 0
    %2443 = vmatpush1.bf16.msra.mxu0 0
    %2444 = vmatprep.subr.bf16.mxu0 0
    %2445 = vmatpush1.bf16.msra.mxu0 0
    %2446 = vmatprep.subr.bf16.mxu0 0
    %2447 = vmatpush1.bf16.msra.mxu0 %v2430
    %2448 = vmatprep.subr.bf16.mxu0 0
    %2449 = vmatpush2.bf16.msra.mxu0 0
    %2450 = vmatprep.subr.bf16.mxu0 0
    %2451 = vmatpush2.bf16.msra.mxu0 0
    %2452 = vmatprep.subr.bf16.mxu0 0
    %2453 = vmatpush2.bf16.msra.mxu0 0
    %2454 = vmatprep.subr.bf16.mxu0 0
    %2455 = vmatpush2.bf16.msra.mxu0 0
    %2456 = vmatprep.subr.bf16.mxu0 0
    %2457 = vmatpush2.bf16.msra.mxu0 0
    %2458 = vmatprep.subr.bf16.mxu0 0
    %2459 = vmatpush2.bf16.msra.mxu0 0
    %2460 = vmatprep.subr.bf16.mxu0 0
    %2461 = vmatpush2.bf16.msra.mxu0 0
    %2462 = vmatprep.subr.bf16.mxu0 0
    %2463 = vmatpush2.bf16.msra.mxu0 0
    %2464 = vmatprep.mubr.bf16.mxu0 0
    %2465 = vmatmul.mubr.bf16.gmra.mxu0 %v2427
    %v2466 = vpop.f32.mrf.mxu0
    %v2467 = vadd.f32 0.0, %v2466
    %v2468 = vpop.f32.mrf.mxu0
    %v2469 = vpop.f32.mrf.mxu0
    %v2470 = vpop.f32.mrf.mxu0
    %2471 = vdwg.mxu0
    %2472 = vrot.lane.b32.xlu0 %v2252, 112
    %v2473 = vpop.permute.xlu0 %2472
    %2474 = vrot.lane.b32.xlu0 %v2252, 80
    %v2475 = vpop.permute.xlu0 %2474
    %v2477 = vsel %vm526, %v2473, 0
    %v2480 = vsel %vm526, %v2475, 0
    %2482 = vmatprep.subr.bf16.mxu0 0
    %2483 = vmatpush1.bf16.xpose.msra.mxu0 0
    %2484 = vmatprep.subr.bf16.mxu0 0
    %2485 = vmatpush1.bf16.xpose.msra.mxu0 0
    %2486 = vmatprep.subr.bf16.mxu0 0
    %2487 = vmatpush1.bf16.xpose.msra.mxu0 0
    %2488 = vmatprep.subr.bf16.mxu0 0
    %2489 = vmatpush1.bf16.xpose.msra.mxu0 0
    %2490 = vmatprep.subr.bf16.mxu0 0
    %2491 = vmatpush1.bf16.xpose.msra.mxu0 0
    %2492 = vmatprep.subr.bf16.mxu0 0
    %2493 = vmatpush1.bf16.xpose.msra.mxu0 0
    %2494 = vmatprep.subr.bf16.mxu0 0
    %2495 = vmatpush1.bf16.xpose.msra.mxu0 0
    %2496 = vmatprep.subr.bf16.mxu0 0
    %2497 = vmatpush1.bf16.xpose.msra.mxu0 %v2480
    %2498 = vmatprep.subr.bf16.mxu0 0
    %2499 = vmatpush2.bf16.xpose.msra.mxu0 0
    %2500 = vmatprep.subr.bf16.mxu0 0
    %2501 = vmatpush2.bf16.xpose.msra.mxu0 0
    %2502 = vmatprep.subr.bf16.mxu0 0
    %2503 = vmatpush2.bf16.xpose.msra.mxu0 0
    %2504 = vmatprep.subr.bf16.mxu0 0
    %2505 = vmatpush2.bf16.xpose.msra.mxu0 0
    %2506 = vmatprep.subr.bf16.mxu0 0
    %2507 = vmatpush2.bf16.xpose.msra.mxu0 0
    %2508 = vmatprep.subr.bf16.mxu0 0
    %2509 = vmatpush2.bf16.xpose.msra.mxu0 0
    %2510 = vmatprep.subr.bf16.mxu0 0
    %2511 = vmatpush2.bf16.xpose.msra.mxu0 0
    %2512 = vmatprep.subr.bf16.mxu0 0
    %2513 = vmatpush2.bf16.xpose.msra.mxu0 0
    %2514 = vmatprep.mubr.bf16.mxu0 0
    %2515 = vmatmul.mubr.bf16.gmra.mxu0 %v2477
    %v2516 = vpop.f32.mrf.mxu0
    %v2517 = vadd.f32 0.0, %v2516
    %v2518 = vpop.f32.mrf.mxu0
    %v2519 = vpop.f32.mrf.mxu0
    %v2520 = vpop.f32.mrf.mxu0
    %2521 = vdwg.mxu0
    %v2522 = vsel %vm526, %v2517, -inf
    %2523 = vmax.xlane.f32.xlu0 %v2522
    %v2524 = vpop.xlane.xlu0 %2523
    %v2525 = vsub.f32 %v2517, %v2524
    %v2526 = vmul.f32 %v2525, 1.442695
    %v2527 = vpow.pop %v2526
    %v2528 = vsel %vm526, %v2527, 0.0
    %2529 = vadd.xlane.f32.xlu0 %v2528
    %v2530 = vpop.xlane.xlu0 %2529
    %v2531 = vrcp.pop %v2530
    %v2532 = vmul.f32 %v2527, %v2531
    %v2533 = vpack.c.bf16 %v2532, %v2532
    %2534 = vrot.lane.b32.xlu0 %v2253, 112
    %v2535 = vpop.permute.xlu0 %2534
    %v2537 = vsel %vm526, %v2533, 0
    %v2540 = vsel %vm530, %v2535, 0
    %2542 = vmatprep.subr.bf16.mxu0 0
    %2543 = vmatpush1.bf16.msra.mxu0 0
    %2544 = vmatprep.subr.bf16.mxu0 0
    %2545 = vmatpush1.bf16.msra.mxu0 0
    %2546 = vmatprep.subr.bf16.mxu0 0
    %2547 = vmatpush1.bf16.msra.mxu0 0
    %2548 = vmatprep.subr.bf16.mxu0 0
    %2549 = vmatpush1.bf16.msra.mxu0 0
    %2550 = vmatprep.subr.bf16.mxu0 0
    %2551 = vmatpush1.bf16.msra.mxu0 0
    %2552 = vmatprep.subr.bf16.mxu0 0
    %2553 = vmatpush1.bf16.msra.mxu0 0
    %2554 = vmatprep.subr.bf16.mxu0 0
    %2555 = vmatpush1.bf16.msra.mxu0 0
    %2556 = vmatprep.subr.bf16.mxu0 0
    %2557 = vmatpush1.bf16.msra.mxu0 %v2540
    %2558 = vmatprep.subr.bf16.mxu0 0
    %2559 = vmatpush2.bf16.msra.mxu0 0
    %2560 = vmatprep.subr.bf16.mxu0 0
    %2561 = vmatpush2.bf16.msra.mxu0 0
    %2562 = vmatprep.subr.bf16.mxu0 0
    %2563 = vmatpush2.bf16.msra.mxu0 0
    %2564 = vmatprep.subr.bf16.mxu0 0
    %2565 = vmatpush2.bf16.msra.mxu0 0
    %2566 = vmatprep.subr.bf16.mxu0 0
    %2567 = vmatpush2.bf16.msra.mxu0 0
    %2568 = vmatprep.subr.bf16.mxu0 0
    %2569 = vmatpush2.bf16.msra.mxu0 0
    %2570 = vmatprep.subr.bf16.mxu0 0
    %2571 = vmatpush2.bf16.msra.mxu0 0
    %2572 = vmatprep.subr.bf16.mxu0 0
    %2573 = vmatpush2.bf16.msra.mxu0 0
    %2574 = vmatprep.mubr.bf16.mxu0 0
    %2575 = vmatmul.mubr.bf16.gmra.mxu0 %v2537
    %v2576 = vpop.f32.mrf.mxu0
    %v2577 = vadd.f32 0.0, %v2576
    %v2578 = vpop.f32.mrf.mxu0
    %v2579 = vpop.f32.mrf.mxu0
    %v2580 = vpop.f32.mrf.mxu0
    %2581 = vdwg.mxu0
    %2582 = vrot.lane.b32.xlu0 %v2252, 104
    %v2583 = vpop.permute.xlu0 %2582
    %2584 = vrot.lane.b32.xlu0 %v2252, 72
    %v2585 = vpop.permute.xlu0 %2584
    %v2587 = vsel %vm526, %v2583, 0
    %v2590 = vsel %vm526, %v2585, 0
    %2592 = vmatprep.subr.bf16.mxu0 0
    %2593 = vmatpush1.bf16.xpose.msra.mxu0 0
    %2594 = vmatprep.subr.bf16.mxu0 0
    %2595 = vmatpush1.bf16.xpose.msra.mxu0 0
    %2596 = vmatprep.subr.bf16.mxu0 0
    %2597 = vmatpush1.bf16.xpose.msra.mxu0 0
    %2598 = vmatprep.subr.bf16.mxu0 0
    %2599 = vmatpush1.bf16.xpose.msra.mxu0 0
    %2600 = vmatprep.subr.bf16.mxu0 0
    %2601 = vmatpush1.bf16.xpose.msra.mxu0 0
    %2602 = vmatprep.subr.bf16.mxu0 0
    %2603 = vmatpush1.bf16.xpose.msra.mxu0 0
    %2604 = vmatprep.subr.bf16.mxu0 0
    %2605 = vmatpush1.bf16.xpose.msra.mxu0 0
    %2606 = vmatprep.subr.bf16.mxu0 0
    %2607 = vmatpush1.bf16.xpose.msra.mxu0 %v2590
    %2608 = vmatprep.subr.bf16.mxu0 0
    %2609 = vmatpush2.bf16.xpose.msra.mxu0 0
    %2610 = vmatprep.subr.bf16.mxu0 0
    %2611 = vmatpush2.bf16.xpose.msra.mxu0 0
    %2612 = vmatprep.subr.bf16.mxu0 0
    %2613 = vmatpush2.bf16.xpose.msra.mxu0 0
    %2614 = vmatprep.subr.bf16.mxu0 0
    %2615 = vmatpush2.bf16.xpose.msra.mxu0 0
    %2616 = vmatprep.subr.bf16.mxu0 0
    %2617 = vmatpush2.bf16.xpose.msra.mxu0 0
    %2618 = vmatprep.subr.bf16.mxu0 0
    %2619 = vmatpush2.bf16.xpose.msra.mxu0 0
    %2620 = vmatprep.subr.bf16.mxu0 0
    %2621 = vmatpush2.bf16.xpose.msra.mxu0 0
    %2622 = vmatprep.subr.bf16.mxu0 0
    %2623 = vmatpush2.bf16.xpose.msra.mxu0 0
    %2624 = vmatprep.mubr.bf16.mxu0 0
    %2625 = vmatmul.mubr.bf16.gmra.mxu0 %v2587
    %v2626 = vpop.f32.mrf.mxu0
    %v2627 = vadd.f32 0.0, %v2626
    %v2628 = vpop.f32.mrf.mxu0
    %v2629 = vpop.f32.mrf.mxu0
    %v2630 = vpop.f32.mrf.mxu0
    %2631 = vdwg.mxu0
    %v2632 = vsel %vm526, %v2627, -inf
    %2633 = vmax.xlane.f32.xlu0 %v2632
    %v2634 = vpop.xlane.xlu0 %2633
    %v2635 = vsub.f32 %v2627, %v2634
    %v2636 = vmul.f32 %v2635, 1.442695
    %v2637 = vpow.pop %v2636
    %v2638 = vsel %vm526, %v2637, 0.0
    %2639 = vadd.xlane.f32.xlu0 %v2638
    %v2640 = vpop.xlane.xlu0 %2639
    %v2641 = vrcp.pop %v2640
    %v2642 = vmul.f32 %v2637, %v2641
    %v2643 = vpack.c.bf16 %v2642, %v2642
    %2644 = vrot.lane.b32.xlu0 %v2253, 104
    %v2645 = vpop.permute.xlu0 %2644
    %v2647 = vsel %vm526, %v2643, 0
    %v2650 = vsel %vm530, %v2645, 0
    %2652 = vmatprep.subr.bf16.mxu0 0
    %2653 = vmatpush1.bf16.msra.mxu0 0
    %2654 = vmatprep.subr.bf16.mxu0 0
    %2655 = vmatpush1.bf16.msra.mxu0 0
    %2656 = vmatprep.subr.bf16.mxu0 0
    %2657 = vmatpush1.bf16.msra.mxu0 0
    %2658 = vmatprep.subr.bf16.mxu0 0
    %2659 = vmatpush1.bf16.msra.mxu0 0
    %2660 = vmatprep.subr.bf16.mxu0 0
    %2661 = vmatpush1.bf16.msra.mxu0 0
    %2662 = vmatprep.subr.bf16.mxu0 0
    %2663 = vmatpush1.bf16.msra.mxu0 0
    %2664 = vmatprep.subr.bf16.mxu0 0
    %2665 = vmatpush1.bf16.msra.mxu0 0
    %2666 = vmatprep.subr.bf16.mxu0 0
    %2667 = vmatpush1.bf16.msra.mxu0 %v2650
    %2668 = vmatprep.subr.bf16.mxu0 0
    %2669 = vmatpush2.bf16.msra.mxu0 0
    %2670 = vmatprep.subr.bf16.mxu0 0
    %2671 = vmatpush2.bf16.msra.mxu0 0
    %2672 = vmatprep.subr.bf16.mxu0 0
    %2673 = vmatpush2.bf16.msra.mxu0 0
    %2674 = vmatprep.subr.bf16.mxu0 0
    %2675 = vmatpush2.bf16.msra.mxu0 0
    %2676 = vmatprep.subr.bf16.mxu0 0
    %2677 = vmatpush2.bf16.msra.mxu0 0
    %2678 = vmatprep.subr.bf16.mxu0 0
    %2679 = vmatpush2.bf16.msra.mxu0 0
    %2680 = vmatprep.subr.bf16.mxu0 0
    %2681 = vmatpush2.bf16.msra.mxu0 0
    %2682 = vmatprep.subr.bf16.mxu0 0
    %2683 = vmatpush2.bf16.msra.mxu0 0
    %2684 = vmatprep.mubr.bf16.mxu0 0
    %2685 = vmatmul.mubr.bf16.gmra.mxu0 %v2647
    %v2686 = vpop.f32.mrf.mxu0
    %v2687 = vadd.f32 0.0, %v2686
    %v2688 = vpop.f32.mrf.mxu0
    %v2689 = vpop.f32.mrf.mxu0
    %v2690 = vpop.f32.mrf.mxu0
    %2691 = vdwg.mxu0
    %2693 = vrot.lane.b32.xlu0 %v2467, 8
    %v2694 = vpop.permute.xlu0 %2693
    %2697 = vrot.lane.b32.xlu0 %v2577, 16
    %v2698 = vpop.permute.xlu0 %2697
    %2701 = vrot.lane.b32.xlu0 %v2687, 24
    %v2702 = vpop.permute.xlu0 %2701
    %v2704 = vsel %vm526, %v2356, %v2694
    %v2705 = vsel %vm973, %v2704, %v2698
    %v2706 = vsel %vm975, %v2705, %v2702
    %v2707 = vpack.c.bf16 %v2706, %v2251
    %v2708 = vld [vmem:[%s18] sm:$0xf]
    %v2709 = vld [vmem:[%s18 + $0x4] sm:$0xf]
    %v2710 = vld [vmem:[%s18 + $0x8] sm:$0xf]
    %v2711 = vld [vmem:[%s18 + $0xc] sm:$0xf]
    %v2712 = vld [vmem:[%s19] sm:$0x1]
    %v2714 = vlaneseq
    %v2715 = vshrl.u32 %v2714, 7
    %v2716 = vsub.s32 0, %v2715
    %v2717 = vrot.slane %v2712, %v2716
    %v2723 = vunpack.c.l.b16 %v2708
    %v2724 = vunpack.c.l.b16 %v2709
    %v2725 = vunpack.c.l.b16 %v2710
    %v2726 = vunpack.c.l.b16 %v2711
    %v2727 = vpack.c.b16 %v2724, %v2723
    %v2728 = vpack.c.b16 %v2726, %v2725
    %v2732 = vsel %vm290, %v2707, 0
    %2734 = vmatprep.subr.bf16.mxu0 0
    %2735 = vmatpush1.bf16.msra.mxu0 0
    %2736 = vmatprep.subr.bf16.mxu0 0
    %2737 = vmatpush1.bf16.msra.mxu0 0
    %2738 = vmatprep.subr.bf16.mxu0 0
    %2739 = vmatpush1.bf16.msra.mxu0 0
    %2740 = vmatprep.subr.bf16.mxu0 0
    %2741 = vmatpush1.bf16.msra.mxu0 0
    %2742 = vmatprep.subr.bf16.mxu0 0
    %2743 = vmatpush1.bf16.msra.mxu0 0
    %2744 = vmatprep.subr.bf16.mxu0 0
    %2745 = vmatpush1.bf16.msra.mxu0 0
    %2746 = vmatprep.subr.bf16.mxu0 0
    %2747 = vmatpush1.bf16.msra.mxu0 %v2728
    %2748 = vmatprep.subr.bf16.mxu0 0
    %2749 = vmatpush1.bf16.msra.mxu0 %v2727
    %2750 = vmatprep.subr.bf16.mxu0 0
    %2751 = vmatpush2.bf16.msra.mxu0 0
    %2752 = vmatprep.subr.bf16.mxu0 0
    %2753 = vmatpush2.bf16.msra.mxu0 0
    %2754 = vmatprep.subr.bf16.mxu0 0
    %2755 = vmatpush2.bf16.msra.mxu0 0
    %2756 = vmatprep.subr.bf16.mxu0 0
    %2757 = vmatpush2.bf16.msra.mxu0 0
    %2758 = vmatprep.subr.bf16.mxu0 0
    %2759 = vmatpush2.bf16.msra.mxu0 0
    %2760 = vmatprep.subr.bf16.mxu0 0
    %2761 = vmatpush2.bf16.msra.mxu0 0
    %2762 = vmatprep.subr.bf16.mxu0 0
    %2763 = vmatpush2.bf16.msra.mxu0 0
    %2764 = vmatprep.subr.bf16.mxu0 0
    %2765 = vmatpush2.bf16.msra.mxu0 0
    %2766 = vmatprep.mubr.bf16.mxu0 0
    %2767 = vmatmul.mubr.bf16.gmra.mxu0 %v2732
    %v2768 = vpop.f32.mrf.mxu0
    %v2769 = vadd.f32 %v2717, %v2768
    %v2770 = vpop.f32.mrf.mxu0
    %v2771 = vpop.f32.mrf.mxu0
    %v2772 = vadd.f32 %v2717, %v2771
    %v2773 = vpop.f32.mrf.mxu0
    %2774 = vdwg.mxu0
    %v2775 = vld [vmem:[%s20] sm:$0x1]
    %v2776 = vld [vmem:[%s21] sm:$0x1]
    %v2777 = vadd.f32 %v1657, %v2769
    %v2778 = vadd.f32 %v1658, %v2772
    %v2779 = vsel %vm290, %v2777, 0.0
    %2780 = vadd.xlane.f32.xlu0 %v2779
    %v2781 = vpop.xlane.xlu0 %2780
    %v2782 = vsel %vm290, %v2778, 0.0
    %2783 = vadd.xlane.f32.xlu0 %v2782
    %v2784 = vpop.xlane.xlu0 %2783
    %v2785 = vmul.f32 %v2781, %v1622
    %v2786 = vmul.f32 %v2784, %v1622
    %v2787 = vsub.f32 %v2777, %v2785
    %v2788 = vsub.f32 %v2778, %v2786
    %v2789 = vmul.f32 %v2787, %v2787
    %v2790 = vmul.f32 %v2788, %v2788
    %v2791 = vsel %vm290, %v2789, 0.0
    %2792 = vadd.xlane.f32.xlu0 %v2791
    %v2793 = vpop.xlane.xlu0 %2792
    %v2794 = vsel %vm290, %v2790, 0.0
    %2795 = vadd.xlane.f32.xlu0 %v2794
    %v2796 = vpop.xlane.xlu0 %2795
    %v2797 = vmul.f32 %v2793, %v1622
    %v2798 = vmul.f32 %v2796, %v1622
    %v2799 = vadd.f32 %v2797, 1e-05
    %v2800 = vadd.f32 %v2798, 1e-05
    %v2801 = vrsqrt.pop %v2799
    %v2802 = vrsqrt.pop %v2800
    %v2803 = vmul.f32 %v2787, %v2801
    %v2804 = vmul.f32 %v2788, %v2802
    %v2806 = vlaneseq
    %v2807 = vshrl.u32 %v2806, 7
    %v2808 = vsub.s32 0, %v2807
    %v2809 = vrot.slane %v2775, %v2808
    %v2811 = vmul.f32 %v2803, %v2809
    %v2812 = vmul.f32 %v2804, %v2809
    %v2814 = vlaneseq
    %v2815 = vshrl.u32 %v2814, 7
    %v2816 = vsub.s32 0, %v2815
    %v2817 = vrot.slane %v2776, %v2816
    %v2819 = vadd.f32 %v2811, %v2817
    %v2820 = vadd.f32 %v2812, %v2817
    %v2821 = vpack.c.bf16 %v2820, %v2819
    %v2822 = vld [vmem:[#allocation20] sm:$0xf]
    %v2823 = vld [vmem:[#allocation20 + $0x4] sm:$0xf]
    %v2824 = vld [vmem:[#allocation20 + $0x8] sm:$0xf]
    %v2825 = vld [vmem:[#allocation20 + $0xc] sm:$0xf]
    %v2826 = vld [vmem:[%s23] sm:$0x1]
    %v2828 = vlaneseq
    %v2829 = vshrl.u32 %v2828, 7
    %v2830 = vsub.s32 0, %v2829
    %v2831 = vrot.slane %v2826, %v2830
    %v2837 = vunpack.c.l.b16 %v2822
    %v2838 = vunpack.c.l.b16 %v2823
    %v2839 = vunpack.c.l.b16 %v2824
    %v2840 = vunpack.c.l.b16 %v2825
    %v2841 = vpack.c.b16 %v2838, %v2837
    %v2842 = vpack.c.b16 %v2840, %v2839
    %v2846 = vsel %vm290, %v2821, 0
    %2848 = vmatprep.subr.bf16.mxu0 0
    %2849 = vmatpush1.bf16.msra.mxu0 0
    %2850 = vmatprep.subr.bf16.mxu0 0
    %2851 = vmatpush1.bf16.msra.mxu0 0
    %2852 = vmatprep.subr.bf16.mxu0 0
    %2853 = vmatpush1.bf16.msra.mxu0 0
    %2854 = vmatprep.subr.bf16.mxu0 0
    %2855 = vmatpush1.bf16.msra.mxu0 0
    %2856 = vmatprep.subr.bf16.mxu0 0
    %2857 = vmatpush1.bf16.msra.mxu0 0
    %2858 = vmatprep.subr.bf16.mxu0 0
    %2859 = vmatpush1.bf16.msra.mxu0 0
    %2860 = vmatprep.subr.bf16.mxu0 0
    %2861 = vmatpush1.bf16.msra.mxu0 %v2842
    %2862 = vmatprep.subr.bf16.mxu0 0
    %2863 = vmatpush1.bf16.msra.mxu0 %v2841
    %2864 = vmatprep.subr.bf16.mxu0 0
    %2865 = vmatpush2.bf16.msra.mxu0 0
    %2866 = vmatprep.subr.bf16.mxu0 0
    %2867 = vmatpush2.bf16.msra.mxu0 0
    %2868 = vmatprep.subr.bf16.mxu0 0
    %2869 = vmatpush2.bf16.msra.mxu0 0
    %2870 = vmatprep.subr.bf16.mxu0 0
    %2871 = vmatpush2.bf16.msra.mxu0 0
    %2872 = vmatprep.subr.bf16.mxu0 0
    %2873 = vmatpush2.bf16.msra.mxu0 0
    %2874 = vmatprep.subr.bf16.mxu0 0
    %2875 = vmatpush2.bf16.msra.mxu0 0
    %2876 = vmatprep.subr.bf16.mxu0 0
    %2877 = vmatpush2.bf16.msra.mxu0 0
    %2878 = vmatprep.subr.bf16.mxu0 0
    %2879 = vmatpush2.bf16.msra.mxu0 0
    %2880 = vmatprep.mubr.bf16.mxu0 0
    %2881 = vmatmul.mubr.bf16.gmra.mxu0 %v2846
    %v2882 = vpop.f32.mrf.mxu0
    %v2883 = vadd.f32 %v2831, %v2882
    %v2884 = vpop.f32.mrf.mxu0
    %v2885 = vpop.f32.mrf.mxu0
    %v2886 = vadd.f32 %v2831, %v2885
    %v2887 = vpop.f32.mrf.mxu0
    %2888 = vdwg.mxu0
    %v2889 = vmul.f32 %v2883, 0.5
    %v2890 = vmul.f32 %v2886, 0.5
    %v2891 = vmul.f32 %v2883, 0.70710677
    %v2892 = vmul.f32 %v2886, 0.70710677
    %v2893 = vand.u32 2147483647, %v2891
    %v2894 = vand.u32 2147483647, %v2892
    %v2895 = vmul.f32 %v2893, 0.3275911
    %v2896 = vmul.f32 %v2894, 0.3275911
    %v2897 = vadd.f32 %v2895, 1.0
    %v2898 = vadd.f32 %v2896, 1.0
    %v2899 = vrcp.pop %v2897
    %v2900 = vmul.f32 1.0, %v2899
    %v2901 = vrcp.pop %v2898
    %v2902 = vmul.f32 1.0, %v2901
    %v2903 = vmul.f32 %v2900, 1.0614054
    %v2904 = vmul.f32 %v2902, 1.0614054
    %v2905 = vadd.f32 %v2903, -1.4531521
    %v2906 = vadd.f32 %v2904, -1.4531521
    %v2907 = vmul.f32 %v2900, %v2905
    %v2908 = vmul.f32 %v2902, %v2906
    %v2909 = vadd.f32 %v2907, 1.4214138
    %v2910 = vadd.f32 %v2908, 1.4214138
    %v2911 = vmul.f32 %v2900, %v2909
    %v2912 = vmul.f32 %v2902, %v2910
    %v2913 = vadd.f32 %v2911, -0.28449672
    %v2914 = vadd.f32 %v2912, -0.28449672
    %v2915 = vmul.f32 %v2900, %v2913
    %v2916 = vmul.f32 %v2902, %v2914
    %v2917 = vadd.f32 %v2915, 0.2548296
    %v2918 = vadd.f32 %v2916, 0.2548296
    %v2919 = vmul.f32 %v2900, %v2917
    %v2920 = vmul.f32 %v2902, %v2918
    %v2921 = vsub.f32 0.0, %v2891
    %v2922 = vsub.f32 0.0, %v2892
    %v2923 = vmul.f32 %v2921, %v2891
    %v2924 = vmul.f32 %v2922, %v2892
    %v2925 = vmul.f32 %v2923, 1.442695
    %v2926 = vpow.pop %v2925
    %v2927 = vmul.f32 %v2924, 1.442695
    %v2928 = vpow.pop %v2927
    %v2929 = vmul.f32 %v2919, %v2926
    %v2930 = vmul.f32 %v2920, %v2928
    %v2931 = vsub.f32 1.0, %v2929
    %v2932 = vsub.f32 1.0, %v2930
    %vm2933 = vcmp.ge.f32.partialorder %v2891, 0.0
    %vm2934 = vcmp.ge.f32.partialorder %v2892, 0.0
    %v2935 = vsub.f32 0.0, %v2931
    %v2936 = vsub.f32 0.0, %v2932
    %v2937 = vsel %vm2933, %v2931, %v2935
    %v2938 = vsel %vm2934, %v2932, %v2936
    %v2939 = vadd.f32 %v2937, 1.0
    %v2940 = vadd.f32 %v2938, 1.0
    %v2941 = vmul.f32 %v2889, %v2939
    %v2942 = vmul.f32 %v2890, %v2940
    %v2943 = vpack.c.bf16 %v2942, %v2941
    %v2944 = vld [vmem:[%s24] sm:$0xf]
    %v2945 = vld [vmem:[%s24 + $0x4] sm:$0xf]
    %v2946 = vld [vmem:[%s24 + $0x8] sm:$0xf]
    %v2947 = vld [vmem:[%s24 + $0xc] sm:$0xf]
    %v2948 = vld [vmem:[%s24 + $0x10] sm:$0xf]
    %v2949 = vld [vmem:[%s24 + $0x14] sm:$0xf]
    %v2950 = vld [vmem:[%s24 + $0x18] sm:$0xf]
    %v2951 = vld [vmem:[%s24 + $0x1c] sm:$0xf]
    %v2952 = vld [vmem:[%s25] sm:$0x1]
    %v2954 = vlaneseq
    %v2955 = vshrl.u32 %v2954, 7
    %v2956 = vsub.s32 0, %v2955
    %v2957 = vrot.slane %v2952, %v2956
    %v2967 = vunpack.c.l.b16 %v2944
    %v2968 = vunpack.c.l.b16 %v2945
    %v2969 = vunpack.c.l.b16 %v2946
    %v2970 = vunpack.c.l.b16 %v2947
    %v2971 = vunpack.c.l.b16 %v2948
    %v2972 = vunpack.c.l.b16 %v2949
    %v2973 = vunpack.c.l.b16 %v2950
    %v2974 = vunpack.c.l.b16 %v2951
    %v2975 = vpack.c.b16 %v2968, %v2967
    %v2976 = vpack.c.b16 %v2970, %v2969
    %v2977 = vpack.c.b16 %v2972, %v2971
    %v2978 = vpack.c.b16 %v2974, %v2973
    %v2984 = vsel %vm574, %v2943, 0
    %2986 = vmatprep.subr.bf16.mxu0 0
    %2987 = vmatpush1.bf16.msra.mxu0 0
    %2988 = vmatprep.subr.bf16.mxu0 0
    %2989 = vmatpush1.bf16.msra.mxu0 0
    %2990 = vmatprep.subr.bf16.mxu0 0
    %2991 = vmatpush1.bf16.msra.mxu0 0
    %2992 = vmatprep.subr.bf16.mxu0 0
    %2993 = vmatpush1.bf16.msra.mxu0 0
    %2994 = vmatprep.subr.bf16.mxu0 0
    %2995 = vmatpush1.bf16.msra.mxu0 %v2978
    %2996 = vmatprep.subr.bf16.mxu0 0
    %2997 = vmatpush1.bf16.msra.mxu0 %v2977
    %2998 = vmatprep.subr.bf16.mxu0 0
    %2999 = vmatpush1.bf16.msra.mxu0 %v2976
    %3000 = vmatprep.subr.bf16.mxu0 0
    %3001 = vmatpush1.bf16.msra.mxu0 %v2975
    %3002 = vmatprep.subr.bf16.mxu0 0
    %3003 = vmatpush2.bf16.msra.mxu0 0
    %3004 = vmatprep.subr.bf16.mxu0 0
    %3005 = vmatpush2.bf16.msra.mxu0 0
    %3006 = vmatprep.subr.bf16.mxu0 0
    %3007 = vmatpush2.bf16.msra.mxu0 0
    %3008 = vmatprep.subr.bf16.mxu0 0
    %3009 = vmatpush2.bf16.msra.mxu0 0
    %3010 = vmatprep.subr.bf16.mxu0 0
    %3011 = vmatpush2.bf16.msra.mxu0 0
    %3012 = vmatprep.subr.bf16.mxu0 0
    %3013 = vmatpush2.bf16.msra.mxu0 0
    %3014 = vmatprep.subr.bf16.mxu0 0
    %3015 = vmatpush2.bf16.msra.mxu0 0
    %3016 = vmatprep.subr.bf16.mxu0 0
    %3017 = vmatpush2.bf16.msra.mxu0 0
    %3018 = vmatprep.mubr.bf16.mxu0 0
    %3019 = vmatmul.mubr.bf16.gmra.mxu0 %v2984
    %v3020 = vpop.f32.mrf.mxu0
    %v3021 = vadd.f32 %v2957, %v3020
    %v3022 = vpop.f32.mrf.mxu0
    %v3023 = vpop.f32.mrf.mxu0
    %v3024 = vadd.f32 %v2957, %v3023
    %v3025 = vpop.f32.mrf.mxu0
    %3026 = vdwg.mxu0
    %v3027 = vld [vmem:[%s26] sm:$0x1]
    %v3028 = vld [vmem:[%s27] sm:$0x1]
    %v3029 = vadd.f32 %v2819, %v3021
    %v3030 = vadd.f32 %v2820, %v3024
    %v3031 = vsel %vm290, %v3029, 0.0
    %3032 = vadd.xlane.f32.xlu0 %v3031
    %v3033 = vpop.xlane.xlu0 %3032
    %v3034 = vsel %vm290, %v3030, 0.0
    %3035 = vadd.xlane.f32.xlu0 %v3034
    %v3036 = vpop.xlane.xlu0 %3035
    %v3037 = vmul.f32 %v3033, %v1622
    %v3038 = vmul.f32 %v3036, %v1622
    %v3039 = vsub.f32 %v3029, %v3037
    %v3040 = vsub.f32 %v3030, %v3038
    %v3041 = vmul.f32 %v3039, %v3039
    %v3042 = vmul.f32 %v3040, %v3040
    %v3043 = vsel %vm290, %v3041, 0.0
    %3044 = vadd.xlane.f32.xlu0 %v3043
    %v3045 = vpop.xlane.xlu0 %3044
    %v3046 = vsel %vm290, %v3042, 0.0
    %3047 = vadd.xlane.f32.xlu0 %v3046
    %v3048 = vpop.xlane.xlu0 %3047
    %v3049 = vmul.f32 %v3045, %v1622
    %v3050 = vmul.f32 %v3048, %v1622
    %v3051 = vadd.f32 %v3049, 1e-05
    %v3052 = vadd.f32 %v3050, 1e-05
    %v3053 = vrsqrt.pop %v3051
    %v3054 = vrsqrt.pop %v3052
    %v3055 = vmul.f32 %v3039, %v3053
    %v3056 = vmul.f32 %v3040, %v3054
    %v3058 = vlaneseq
    %v3059 = vshrl.u32 %v3058, 7
    %v3060 = vsub.s32 0, %v3059
    %v3061 = vrot.slane %v3027, %v3060
    %v3063 = vmul.f32 %v3055, %v3061
    %v3064 = vmul.f32 %v3056, %v3061
    %v3066 = vlaneseq
    %v3067 = vshrl.u32 %v3066, 7
    %v3068 = vsub.s32 0, %v3067
    %v3069 = vrot.slane %v3028, %v3068
    %v3071 = vadd.f32 %v3063, %v3069
    %v3072 = vadd.f32 %v3064, %v3069
    %3073 = vst.msk [vmem:[#allocation22] sm:$0xff] %vm290, %v3071
    %3074 = vst.msk [vmem:[#allocation22 + $0x8] sm:$0xff] %vm290, %v3072
    // Predicated region
    $region162: #{tpu_custom_call.1} parent=1 // pred_check
      _
    $region163: #{tpu_custom_call.1} parent=1 // pred_check_branch
      %3076 = sbr.rel (0) target = $region165
    $region164: #{tpu_custom_call.1} parent=1 // pred_region
      %s3078 = ssub.s32 256, 256
      %3079 = vsyncadd [#allocation4], %s3078
      %s3080 = sshll.u32 [#allocation22], 4
      %s3081 = int_to_ptr.vmem [resolvable:$true] %s3080
      %3086 = dma.vmem_to_hbm [thread:$0]  %s3081, 256, %s28, [#allocation4], 128, 128, 8
    $region165: #{tpu_custom_call.1} parent=1 // pred_fallthru
      _
    // Predicated region
    $region166: #{tpu_custom_call.1} parent=1 // pred_check
      _
    $region167: #{tpu_custom_call.1} parent=1 // pred_check_branch
      %3088 = sbr.rel (0) target = $region169
    $region168: #{tpu_custom_call.1} parent=1 // pred_region
      %3089 = dma.done [#allocation4], 256
    $region169: #{tpu_custom_call.1} parent=1 // pred_fallthru
      _
    %3090 = vsyncpa [#allocation3], 1
    %3091 = vsyncpa [#allocation6], 1
    %3092 = vsyncpa [#allocation9], 1
    %3093 = vsyncpa [#allocation12], 1
    %3094 = vsyncpa [#allocation15], 1
    %3095 = vsyncpa [#allocation18], 1
    %3096 = vsyncpa [#allocation21], 1
    %3097 = vsyncpa [#allocation4], 1

</llo_original>
